<compile_context>
chip_gen: v7x
topology: tpu7x:2x2x1
jax: 0.10.0
libtpu: 0.0.40
codegen_flags: <defaults>
</compile_context>

<pallas_src>
import jax
import jax.numpy as jnp
from jax.experimental import pallas as pl
from jax.experimental.pallas import tpu as pltpu

BN_EPS = 1e-5        # nn.BatchNorm1d default eps
NORM_EPS = 1e-12     # F.normalize default eps


def linear1_stats_kernel(x_ref, w1_ref, sum_ref, sq_ref):
    """Pass 1: Linear1 (bf16 MXU, f32 acc) -> per-tile sum / sum-of-squares."""
    x_bf = x_ref[...].astype(jnp.bfloat16)                 # in-kernel cast (VPU, hidden)
    h = jnp.dot(x_bf, w1_ref[...],
                preferred_element_type=jnp.float32)        # (tb, Dh) f32
    sum_ref[...] = jnp.sum(h, axis=0, keepdims=True)[None]      # (1, 1, Dh)
    sq_ref[...] = jnp.sum(h * h, axis=0, keepdims=True)[None]   # (1, 1, Dh)


def project_kernel(x_ref, w1_ref, scale_ref, shift_ref, w2_ref, o_ref):
    """Pass 2: recompute Linear1, BN affine + ReLU, Linear2, row-wise L2 normalize."""
    x_bf = x_ref[...].astype(jnp.bfloat16)
    h = jnp.dot(x_bf, w1_ref[...],
                preferred_element_type=jnp.float32)        # (tb, Dh) f32
    # BN affine + ReLU; build the bf16 MXU operand once so hn/relu die here.
    r_bf = jnp.maximum(h * scale_ref[...] + shift_ref[...], 0.0).astype(jnp.bfloat16)
    y = jnp.dot(r_bf, w2_ref[...],
                preferred_element_type=jnp.float32)        # (tb, Dout) f32
    # F.normalize(dim=1): y / max(||y||, eps) == y * rsqrt(max(||y||^2, eps^2))
    sq = jnp.sum(y * y, axis=1, keepdims=True)
    o_ref[...] = y * jax.lax.rsqrt(jnp.maximum(sq, NORM_EPS * NORM_EPS))  # EUP


def projection_forward(x, w1_t, b1, gamma, beta, w2_t, *, tb=512):
    """x: (B, Din) f32; w1_t: (Din, Dh); w2_t: (Dh, Dout); returns (B, Dout) f32.

    b1 is accepted for parameter parity with nn.Linear but is not used: a bias
    immediately before training-mode BatchNorm1d cancels exactly.
    """
    del b1  # TODO(synk): fold b1 back in if inference-mode (running-stat) BN is ever needed.
    B, Din = x.shape
    Dh = w1_t.shape[1]
    Dout = w2_t.shape[1]

    # Batch tiling: tb rows per grid step; zero-pad the batch if B % tb != 0.
    # Zero rows contribute zero to the BN sums (no pre-BN bias), and padded
    # output rows are sliced off at the end.
    tb = min(tb, B)
    n_tiles = pl.cdiv(B, tb)
    Bp = n_tiles * tb
    xp = x if Bp == B else jnp.pad(x, ((0, Bp - B), (0, 0)))

    # One-time, small weight casts (fine in the wrapper).
    w1_bf = w1_t.astype(jnp.bfloat16)
    w2_bf = w2_t.astype(jnp.bfloat16)

    # ---- Pass 1: Linear1 + per-tile BN partial sums (batch axis "parallel") ----
    psum, psq = pl.pallas_call(
        linear1_stats_kernel,
        out_shape=(
            jax.ShapeDtypeStruct((n_tiles, 1, Dh), jnp.float32),
            jax.ShapeDtypeStruct((n_tiles, 1, Dh), jnp.float32),
        ),
        grid=(n_tiles,),
        in_specs=[
            pl.BlockSpec((tb, Din), lambda i: (i, 0)),      # x   (streamed, f32)
            pl.BlockSpec((Din, Dh), lambda i: (0, 0)),      # w1  (resident, bf16)
        ],
        out_specs=(
            pl.BlockSpec((1, 1, Dh), lambda i: (i, 0, 0)),  # per-tile sum
            pl.BlockSpec((1, 1, Dh), lambda i: (i, 0, 0)),  # per-tile sum of squares
        ),
        compiler_params=pltpu.CompilerParams(
            dimension_semantics=("parallel",)),             # shards across TCs on v7x
    )(xp, w1_bf)

    # ---- Tiny JAX epilogue: fold partials into the BN affine (scale, shift) ----
    inv_n = jnp.float32(1.0 / B)                            # real batch size (pad rows are zero)
    mean = psum.sum(axis=(0, 1)) * inv_n                    # (Dh,)
    var = jnp.maximum(psq.sum(axis=(0, 1)) * inv_n - mean * mean, 0.0)
    scale = gamma.astype(jnp.float32) * jax.lax.rsqrt(var + BN_EPS)
    shift = beta.astype(jnp.float32) - mean * scale
    scale2d = scale.reshape(1, Dh)
    shift2d = shift.reshape(1, Dh)

    # ---- Pass 2: recompute Linear1, BN affine + ReLU + Linear2 + L2 norm ----
    out = pl.pallas_call(
        project_kernel,
        out_shape=jax.ShapeDtypeStruct((Bp, Dout), jnp.float32),
        grid=(n_tiles,),
        in_specs=[
            pl.BlockSpec((tb, Din), lambda i: (i, 0)),      # x   (streamed, f32)
            pl.BlockSpec((Din, Dh), lambda i: (0, 0)),      # w1  (resident)
            pl.BlockSpec((1, Dh), lambda i: (0, 0)),        # BN scale (resident)
            pl.BlockSpec((1, Dh), lambda i: (0, 0)),        # BN shift (resident)
            pl.BlockSpec((Dh, Dout), lambda i: (0, 0)),     # w2  (resident)
        ],
        out_specs=pl.BlockSpec((tb, Dout), lambda i: (i, 0)),
        compiler_params=pltpu.CompilerParams(
            dimension_semantics=("parallel",)),             # shards across TCs on v7x
    )(xp, w1_bf, scale2d, shift2d, w2_bf)

    return out[:B] if Bp != B else out


if __name__ == "__main__":
    # Module defaults (512/512/128), 128-aligned; keeps MXU K/N dims full on v6e/v7x.
    batch, input_dim, hidden_dim, output_dim = 256, 512, 512, 128

    key = jax.random.PRNGKey(0)
    k_x, k_w1, k_b1, k_w2 = jax.random.split(key, 4)

    x = jax.random.normal(k_x, (batch, input_dim), dtype=jnp.float32)

    # PyTorch-style Linear init (weights stored (out, in), transposed for the kernel).
    bound1 = float(input_dim) ** -0.5
    w1 = jax.random.uniform(k_w1, (hidden_dim, input_dim), jnp.float32, -bound1, bound1)
    b1 = jax.random.uniform(k_b1, (hidden_dim,), jnp.float32, -bound1, bound1)
    bound2 = float(hidden_dim) ** -0.5
    w2 = jax.random.uniform(k_w2, (output_dim, hidden_dim), jnp.float32, -bound2, bound2)
    gamma = jnp.ones((hidden_dim,), jnp.float32)   # BatchNorm1d weight init
    beta = jnp.zeros((hidden_dim,), jnp.float32)   # BatchNorm1d bias init

    fwd = jax.jit(projection_forward)
    out = fwd(x, w1.T, b1, gamma, beta, w2.T)
    jax.block_until_ready(out)

    # --- matched-precision reference (bf16 matmul operands, f32 elsewhere, no b1): tight ---
    w1b = w1.T.astype(jnp.bfloat16)
    w2b = w2.T.astype(jnp.bfloat16)
    h_ref = jnp.dot(x.astype(jnp.bfloat16), w1b, preferred_element_type=jnp.float32)
    m = h_ref.mean(0)
    v = (h_ref * h_ref).mean(0) - m * m
    scale_ref = gamma * jax.lax.rsqrt(v + BN_EPS)
    shift_ref = beta - m * scale_ref
    r = jnp.maximum(h_ref * scale_ref + shift_ref, 0.0)
    y_ref = jnp.dot(r.astype(jnp.bfloat16), w2b, preferred_element_type=jnp.float32)
    y_ref = y_ref * jax.lax.rsqrt(
        jnp.maximum(jnp.sum(y_ref * y_ref, axis=1, keepdims=True), NORM_EPS * NORM_EPS))
    assert jnp.allclose(out, y_ref, atol=5e-3, rtol=5e-3), \
        float(jnp.max(jnp.abs(out - y_ref)))

    # --- full-f32 PyTorch-semantics reference (with b1, two-pass variance): looser ---
    h32 = x @ w1.T + b1
    m32 = h32.mean(0)
    v32 = ((h32 - m32) ** 2).mean(0)
    hn32 = (h32 - m32) / jnp.sqrt(v32 + BN_EPS) * gamma + beta
    y32 = jnp.maximum(hn32, 0.0) @ w2.T
    y32 = y32 / jnp.maximum(jnp.linalg.norm(y32, axis=1, keepdims=True), NORM_EPS)
    assert jnp.allclose(out, y32, atol=3e-2, rtol=3e-2), \
        float(jnp.max(jnp.abs(out - y32)))

    print("KERNEL_OK")
</pallas_src>

<mosaic_0001>
module attributes {stable_mosaic.version = 11 : i64} {
  func.func @linear1_stats_kernel(%arg0: i32, %arg1: memref<256x512xf32, #tpu.memory_space<vmem>>, %arg2: memref<512x512xbf16, #tpu.memory_space<vmem>>, %arg3: memref<1x1x512xf32, #tpu.memory_space<vmem>>, %arg4: memref<1x1x512xf32, #tpu.memory_space<vmem>>) attributes {dimension_semantics = [#tpu.dimension_semantics<parallel>], iteration_bounds = array<i64: 1>, scalar_prefetch = 0 : i64, scratch_operands = 0 : i64, tpu.core_type = #tpu.core_type<tc>, window_params = [{transform_indices = @transform_0, window_bounds = array<i64: 256, 512>}, {pipeline_mode = #tpu.pipeline_mode<synchronous>, transform_indices = @transform_1, window_bounds = array<i64: 512, 512>}, {transform_indices = @transform_2, window_bounds = array<i64: 1, 1, 512>}, {transform_indices = @transform_3, window_bounds = array<i64: 1, 1, 512>}]} {
    %c0 = arith.constant 0 : index
    %c0_0 = arith.constant 0 : index
    %0 = vector.load %arg1[%c0, %c0_0] : memref<256x512xf32, #tpu.memory_space<vmem>>, vector<256x512xf32>
    %1 = arith.truncf %0 : vector<256x512xf32> to vector<256x512xbf16>
    %c0_1 = arith.constant 0 : index
    %c0_2 = arith.constant 0 : index
    %2 = vector.load %arg2[%c0_1, %c0_2] : memref<512x512xbf16, #tpu.memory_space<vmem>>, vector<512x512xbf16>
    %cst = arith.constant dense<0.000000e+00> : vector<256x512xf32>
    %3 = tpu.matmul %1, %2, %cst {dimension_numbers = #tpu.dot_dimension_numbers<[1], [0], [0], [1], [0, 0, 1, 1], [], []>} : vector<256x512xbf16>, vector<512x512xbf16>, vector<256x512xf32> -> vector<256x512xf32>
    %cst_3 = arith.constant dense<0.000000e+00> : vector<512xf32>
    %4 = vector.multi_reduction <add>, %3, %cst_3 [0] : vector<256x512xf32> to vector<512xf32>
    %5 = vector.shape_cast %4 : vector<512xf32> to vector<1x512xf32>
    %6 = vector.shape_cast %5 : vector<1x512xf32> to vector<1x1x512xf32>
    %c0_4 = arith.constant 0 : index
    %c0_5 = arith.constant 0 : index
    %c0_6 = arith.constant 0 : index
    %7 = vector.load %arg3[%c0_4, %c0_5, %c0_6] : memref<1x1x512xf32, #tpu.memory_space<vmem>>, vector<1x1x512xf32>
    tpu.vector_store %arg3[%c0_4, %c0_5, %c0_6], %6 {strides = array<i32>} : memref<1x1x512xf32, #tpu.memory_space<vmem>>, vector<1x1x512xf32>,
    %8 = arith.mulf %3, %3 : vector<256x512xf32>
    %cst_7 = arith.constant dense<0.000000e+00> : vector<512xf32>
    %9 = vector.multi_reduction <add>, %8, %cst_7 [0] : vector<256x512xf32> to vector<512xf32>
    %10 = vector.shape_cast %9 : vector<512xf32> to vector<1x512xf32>
    %11 = vector.shape_cast %10 : vector<1x512xf32> to vector<1x1x512xf32>
    %c0_8 = arith.constant 0 : index
    %c0_9 = arith.constant 0 : index
    %c0_10 = arith.constant 0 : index
    %12 = vector.load %arg4[%c0_8, %c0_9, %c0_10] : memref<1x1x512xf32, #tpu.memory_space<vmem>>, vector<1x1x512xf32>
    tpu.vector_store %arg4[%c0_8, %c0_9, %c0_10], %11 {strides = array<i32>} : memref<1x1x512xf32, #tpu.memory_space<vmem>>, vector<1x1x512xf32>,
    return
  }
  func.func @transform_0(%arg0: i32) -> (i32, i32) {
    %c0_i32 = arith.constant 0 : i32
    %c0_i32_0 = arith.constant 0 : i32
    return %arg0, %c0_i32 : i32, i32
  }
  func.func @transform_1(%arg0: i32) -> (i32, i32) {
    %c0_i32 = arith.constant 0 : i32
    %c0_i32_0 = arith.constant 0 : i32
    %c0_i32_1 = arith.constant 0 : i32
    return %c0_i32, %c0_i32_0 : i32, i32
  }
  func.func @transform_2(%arg0: i32) -> (i32, i32, i32) {
    %c0_i32 = arith.constant 0 : i32
    %c0_i32_0 = arith.constant 0 : i32
    %c0_i32_1 = arith.constant 0 : i32
    return %arg0, %c0_i32, %c0_i32_0 : i32, i32, i32
  }
  func.func @transform_3(%arg0: i32) -> (i32, i32, i32) {
    %c0_i32 = arith.constant 0 : i32
    %c0_i32_0 = arith.constant 0 : i32
    %c0_i32_1 = arith.constant 0 : i32
    return %arg0, %c0_i32, %c0_i32_0 : i32, i32, i32
  }
}

module attributes {stable_mosaic.version = 11 : i64} {
  func.func @project_kernel(%arg0: i32, %arg1: memref<256x512xf32, #tpu.memory_space<vmem>>, %arg2: memref<512x512xbf16, #tpu.memory_space<vmem>>, %arg3: memref<1x512xf32, #tpu.memory_space<vmem>>, %arg4: memref<1x512xf32, #tpu.memory_space<vmem>>, %arg5: memref<512x128xbf16, #tpu.memory_space<vmem>>, %arg6: memref<256x128xf32, #tpu.memory_space<vmem>>) attributes {dimension_semantics = [#tpu.dimension_semantics<parallel>], iteration_bounds = array<i64: 1>, scalar_prefetch = 0 : i64, scratch_operands = 0 : i64, tpu.core_type = #tpu.core_type<tc>, window_params = [{transform_indices = @transform_0, window_bounds = array<i64: 256, 512>}, {pipeline_mode = #tpu.pipeline_mode<synchronous>, transform_indices = @transform_1, window_bounds = array<i64: 512, 512>}, {pipeline_mode = #tpu.pipeline_mode<synchronous>, transform_indices = @transform_2, window_bounds = array<i64: 1, 512>}, {pipeline_mode = #tpu.pipeline_mode<synchronous>, transform_indices = @transform_3, window_bounds = array<i64: 1, 512>}, {pipeline_mode = #tpu.pipeline_mode<synchronous>, transform_indices = @transform_4, window_bounds = array<i64: 512, 128>}, {transform_indices = @transform_5, window_bounds = array<i64: 256, 128>}]} {
    %c0 = arith.constant 0 : index
    %c0_0 = arith.constant 0 : index
    %0 = vector.load %arg1[%c0, %c0_0] : memref<256x512xf32, #tpu.memory_space<vmem>>, vector<256x512xf32>
    %1 = arith.truncf %0 : vector<256x512xf32> to vector<256x512xbf16>
    %c0_1 = arith.constant 0 : index
    %c0_2 = arith.constant 0 : index
    %2 = vector.load %arg2[%c0_1, %c0_2] : memref<512x512xbf16, #tpu.memory_space<vmem>>, vector<512x512xbf16>
    %cst = arith.constant dense<0.000000e+00> : vector<256x512xf32>
    %3 = tpu.matmul %1, %2, %cst {dimension_numbers = #tpu.dot_dimension_numbers<[1], [0], [0], [1], [0, 0, 1, 1], [], []>} : vector<256x512xbf16>, vector<512x512xbf16>, vector<256x512xf32> -> vector<256x512xf32>
    %c0_3 = arith.constant 0 : index
    %c0_4 = arith.constant 0 : index
    %4 = vector.load %arg3[%c0_3, %c0_4] : memref<1x512xf32, #tpu.memory_space<vmem>>, vector<1x512xf32>
    %5 = vector.broadcast %4 : vector<1x512xf32> to vector<256x512xf32>
    %6 = arith.mulf %3, %5 : vector<256x512xf32>
    %c0_5 = arith.constant 0 : index
    %c0_6 = arith.constant 0 : index
    %7 = vector.load %arg4[%c0_5, %c0_6] : memref<1x512xf32, #tpu.memory_space<vmem>>, vector<1x512xf32>
    %8 = vector.broadcast %7 : vector<1x512xf32> to vector<256x512xf32>
    %9 = arith.addf %6, %8 : vector<256x512xf32>
    %cst_7 = arith.constant 0.000000e+00 : f32
    %10 = vector.broadcast %cst_7 : f32 to vector<256x512xf32>
    %11 = arith.maximumf %9, %10 : vector<256x512xf32>
    %12 = arith.truncf %11 : vector<256x512xf32> to vector<256x512xbf16>
    %c0_8 = arith.constant 0 : index
    %c0_9 = arith.constant 0 : index
    %13 = vector.load %arg5[%c0_8, %c0_9] : memref<512x128xbf16, #tpu.memory_space<vmem>>, vector<512x128xbf16>
    %cst_10 = arith.constant dense<0.000000e+00> : vector<256x128xf32>
    %14 = tpu.matmul %12, %13, %cst_10 {dimension_numbers = #tpu.dot_dimension_numbers<[1], [0], [0], [1], [0, 0, 1, 1], [], []>} : vector<256x512xbf16>, vector<512x128xbf16>, vector<256x128xf32> -> vector<256x128xf32>
    %15 = arith.mulf %14, %14 : vector<256x128xf32>
    %cst_11 = arith.constant dense<0.000000e+00> : vector<256xf32>
    %16 = vector.multi_reduction <add>, %15, %cst_11 [1] : vector<256x128xf32> to vector<256xf32>
    %17 = vector.shape_cast %16 : vector<256xf32> to vector<256x1xf32>
    %cst_12 = arith.constant 1.000000e-24 : f32
    %18 = vector.broadcast %cst_12 : f32 to vector<256x1xf32>
    %19 = arith.maximumf %17, %18 : vector<256x1xf32>
    %20 = math.rsqrt %19 : vector<256x1xf32>
    %21 = vector.broadcast %20 : vector<256x1xf32> to vector<256x128xf32>
    %22 = arith.mulf %14, %21 : vector<256x128xf32>
    %c0_13 = arith.constant 0 : index
    %c0_14 = arith.constant 0 : index
    %23 = vector.load %arg6[%c0_13, %c0_14] : memref<256x128xf32, #tpu.memory_space<vmem>>, vector<256x128xf32>
    tpu.vector_store %arg6[%c0_13, %c0_14], %22 {strides = array<i32>} : memref<256x128xf32, #tpu.memory_space<vmem>>, vector<256x128xf32>,
    return
  }
  func.func @transform_0(%arg0: i32) -> (i32, i32) {
    %c0_i32 = arith.constant 0 : i32
    %c0_i32_0 = arith.constant 0 : i32
    return %arg0, %c0_i32 : i32, i32
  }
  func.func @transform_1(%arg0: i32) -> (i32, i32) {
    %c0_i32 = arith.constant 0 : i32
    %c0_i32_0 = arith.constant 0 : i32
    %c0_i32_1 = arith.constant 0 : i32
    return %c0_i32, %c0_i32_0 : i32, i32
  }
  func.func @transform_2(%arg0: i32) -> (i32, i32) {
    %c0_i32 = arith.constant 0 : i32
    %c0_i32_0 = arith.constant 0 : i32
    %c0_i32_1 = arith.constant 0 : i32
    return %c0_i32, %c0_i32_0 : i32, i32
  }
  func.func @transform_3(%arg0: i32) -> (i32, i32) {
    %c0_i32 = arith.constant 0 : i32
    %c0_i32_0 = arith.constant 0 : i32
    %c0_i32_1 = arith.constant 0 : i32
    return %c0_i32, %c0_i32_0 : i32, i32
  }
  func.func @transform_4(%arg0: i32) -> (i32, i32) {
    %c0_i32 = arith.constant 0 : i32
    %c0_i32_0 = arith.constant 0 : i32
    %c0_i32_1 = arith.constant 0 : i32
    return %c0_i32, %c0_i32_0 : i32, i32
  }
  func.func @transform_5(%arg0: i32) -> (i32, i32) {
    %c0_i32 = arith.constant 0 : i32
    %c0_i32_0 = arith.constant 0 : i32
    return %arg0, %c0_i32 : i32, i32
  }
}

</mosaic_0001>

<llo_original>
// kernel: projection_forward.2
$region0: #{projection_forward.2}
  #allocation0 [shape = 'u32[]', space=smem, size = 0x4, offset = 0x4, fixed_abs, tag = 'smem constant byte address 0x4 - core index']
  #allocation1 [shape = 'u32[144,128]{1,0:T(1,128)}', space=vmem, size = 0x12000, scoped, tag = 'internal scratch']
  %s0 = inlined_call_operand.vmem [shape: f32[256,512], index: 0, kind: input, shape index: {}]
  %s1 = inlined_call_operand.vmem [shape: bf16[512,512], index: 1, kind: input, shape index: {}]
  %s2 = inlined_call_operand.vmem [shape: f32[1,1,512], index: 2, kind: output, shape index: {0}]
  %s3 = inlined_call_operand.vmem [shape: f32[1,1,512], index: 3, kind: output, shape index: {1}]
  %4 = xla_tuple %s2, %s3
  %s5 = sld [smem:[#allocation0]]
  $region26: #{projection_forward.2} parent=0
    _
  %s7 = ssub.s32 1, %s5
  %s8 = scalar_select 0, %s7, %s5
  // Predicated region
  $region2: #{projection_forward.2} parent=0 // pred_check
    _
  $region3: #{projection_forward.2} parent=0 // pred_check_branch
    %10 = sbr.rel (0) target = $region5
  $region4: #{projection_forward.2} parent=0 // pred_region
    _
  $region5: #{projection_forward.2} parent=0 // pred_fallthru
    _
  // Predicated region
  $region6: #{projection_forward.2} parent=0 // pred_check
    _
  $region7: #{projection_forward.2} parent=0 // pred_check_branch
    %12 = sbr.rel (0) target = $region9
  $region8: #{projection_forward.2} parent=0 // pred_region
    _
  $region9: #{projection_forward.2} parent=0 // pred_fallthru
    _
  %v13 = vld [vmem:[%s0] sm:$0xff]
  %v14 = vld [vmem:[%s0 + $0x8] sm:$0xff]
  %v15 = vld [vmem:[%s0 + $0x10] sm:$0xff]
  %v16 = vld [vmem:[%s0 + $0x18] sm:$0xff]
  %v17 = vld [vmem:[%s0 + $0x20] sm:$0xff]
  %v18 = vld [vmem:[%s0 + $0x28] sm:$0xff]
  %v19 = vld [vmem:[%s0 + $0x30] sm:$0xff]
  %v20 = vld [vmem:[%s0 + $0x38] sm:$0xff]
  %v21 = vld [vmem:[%s0 + $0x40] sm:$0xff]
  %v22 = vld [vmem:[%s0 + $0x48] sm:$0xff]
  %v23 = vld [vmem:[%s0 + $0x50] sm:$0xff]
  %v24 = vld [vmem:[%s0 + $0x58] sm:$0xff]
  %v25 = vld [vmem:[%s0 + $0x60] sm:$0xff]
  %v26 = vld [vmem:[%s0 + $0x68] sm:$0xff]
  %v27 = vld [vmem:[%s0 + $0x70] sm:$0xff]
  %v28 = vld [vmem:[%s0 + $0x78] sm:$0xff]
  %v29 = vld [vmem:[%s0 + $0x80] sm:$0xff]
  %v30 = vld [vmem:[%s0 + $0x88] sm:$0xff]
  %v31 = vld [vmem:[%s0 + $0x90] sm:$0xff]
  %v32 = vld [vmem:[%s0 + $0x98] sm:$0xff]
  %v33 = vld [vmem:[%s0 + $0xa0] sm:$0xff]
  %v34 = vld [vmem:[%s0 + $0xa8] sm:$0xff]
  %v35 = vld [vmem:[%s0 + $0xb0] sm:$0xff]
  %v36 = vld [vmem:[%s0 + $0xb8] sm:$0xff]
  %v37 = vld [vmem:[%s0 + $0xc0] sm:$0xff]
  %v38 = vld [vmem:[%s0 + $0xc8] sm:$0xff]
  %v39 = vld [vmem:[%s0 + $0xd0] sm:$0xff]
  %v40 = vld [vmem:[%s0 + $0xd8] sm:$0xff]
  %v41 = vld [vmem:[%s0 + $0xe0] sm:$0xff]
  %v42 = vld [vmem:[%s0 + $0xe8] sm:$0xff]
  %v43 = vld [vmem:[%s0 + $0xf0] sm:$0xff]
  %v44 = vld [vmem:[%s0 + $0xf8] sm:$0xff]
  %v45 = vld [vmem:[%s0 + $0x100] sm:$0xff]
  %v46 = vld [vmem:[%s0 + $0x108] sm:$0xff]
  %v47 = vld [vmem:[%s0 + $0x110] sm:$0xff]
  %v48 = vld [vmem:[%s0 + $0x118] sm:$0xff]
  %v49 = vld [vmem:[%s0 + $0x120] sm:$0xff]
  %v50 = vld [vmem:[%s0 + $0x128] sm:$0xff]
  %v51 = vld [vmem:[%s0 + $0x130] sm:$0xff]
  %v52 = vld [vmem:[%s0 + $0x138] sm:$0xff]
  %v53 = vld [vmem:[%s0 + $0x140] sm:$0xff]
  %v54 = vld [vmem:[%s0 + $0x148] sm:$0xff]
  %v55 = vld [vmem:[%s0 + $0x150] sm:$0xff]
  %v56 = vld [vmem:[%s0 + $0x158] sm:$0xff]
  %v57 = vld [vmem:[%s0 + $0x160] sm:$0xff]
  %v58 = vld [vmem:[%s0 + $0x168] sm:$0xff]
  %v59 = vld [vmem:[%s0 + $0x170] sm:$0xff]
  %v60 = vld [vmem:[%s0 + $0x178] sm:$0xff]
  %v61 = vld [vmem:[%s0 + $0x180] sm:$0xff]
  %v62 = vld [vmem:[%s0 + $0x188] sm:$0xff]
  %v63 = vld [vmem:[%s0 + $0x190] sm:$0xff]
  %v64 = vld [vmem:[%s0 + $0x198] sm:$0xff]
  %v65 = vld [vmem:[%s0 + $0x1a0] sm:$0xff]
  %v66 = vld [vmem:[%s0 + $0x1a8] sm:$0xff]
  %v67 = vld [vmem:[%s0 + $0x1b0] sm:$0xff]
  %v68 = vld [vmem:[%s0 + $0x1b8] sm:$0xff]
  %v69 = vld [vmem:[%s0 + $0x1c0] sm:$0xff]
  %v70 = vld [vmem:[%s0 + $0x1c8] sm:$0xff]
  %v71 = vld [vmem:[%s0 + $0x1d0] sm:$0xff]
  %v72 = vld [vmem:[%s0 + $0x1d8] sm:$0xff]
  %v73 = vld [vmem:[%s0 + $0x1e0] sm:$0xff]
  %v74 = vld [vmem:[%s0 + $0x1e8] sm:$0xff]
  %v75 = vld [vmem:[%s0 + $0x1f0] sm:$0xff]
  %v76 = vld [vmem:[%s0 + $0x1f8] sm:$0xff]
  %v77 = vld [vmem:[%s0 + $0x200] sm:$0xff]
  %v78 = vld [vmem:[%s0 + $0x208] sm:$0xff]
  %v79 = vld [vmem:[%s0 + $0x210] sm:$0xff]
  %v80 = vld [vmem:[%s0 + $0x218] sm:$0xff]
  %v81 = vld [vmem:[%s0 + $0x220] sm:$0xff]
  %v82 = vld [vmem:[%s0 + $0x228] sm:$0xff]
  %v83 = vld [vmem:[%s0 + $0x230] sm:$0xff]
  %v84 = vld [vmem:[%s0 + $0x238] sm:$0xff]
  %v85 = vld [vmem:[%s0 + $0x240] sm:$0xff]
  %v86 = vld [vmem:[%s0 + $0x248] sm:$0xff]
  %v87 = vld [vmem:[%s0 + $0x250] sm:$0xff]
  %v88 = vld [vmem:[%s0 + $0x258] sm:$0xff]
  %v89 = vld [vmem:[%s0 + $0x260] sm:$0xff]
  %v90 = vld [vmem:[%s0 + $0x268] sm:$0xff]
  %v91 = vld [vmem:[%s0 + $0x270] sm:$0xff]
  %v92 = vld [vmem:[%s0 + $0x278] sm:$0xff]
  %v93 = vld [vmem:[%s0 + $0x280] sm:$0xff]
  %v94 = vld [vmem:[%s0 + $0x288] sm:$0xff]
  %v95 = vld [vmem:[%s0 + $0x290] sm:$0xff]
  %v96 = vld [vmem:[%s0 + $0x298] sm:$0xff]
  %v97 = vld [vmem:[%s0 + $0x2a0] sm:$0xff]
  %v98 = vld [vmem:[%s0 + $0x2a8] sm:$0xff]
  %v99 = vld [vmem:[%s0 + $0x2b0] sm:$0xff]
  %v100 = vld [vmem:[%s0 + $0x2b8] sm:$0xff]
  %v101 = vld [vmem:[%s0 + $0x2c0] sm:$0xff]
  %v102 = vld [vmem:[%s0 + $0x2c8] sm:$0xff]
  %v103 = vld [vmem:[%s0 + $0x2d0] sm:$0xff]
  %v104 = vld [vmem:[%s0 + $0x2d8] sm:$0xff]
  %v105 = vld [vmem:[%s0 + $0x2e0] sm:$0xff]
  %v106 = vld [vmem:[%s0 + $0x2e8] sm:$0xff]
  %v107 = vld [vmem:[%s0 + $0x2f0] sm:$0xff]
  %v108 = vld [vmem:[%s0 + $0x2f8] sm:$0xff]
  %v109 = vld [vmem:[%s0 + $0x300] sm:$0xff]
  %v110 = vld [vmem:[%s0 + $0x308] sm:$0xff]
  %v111 = vld [vmem:[%s0 + $0x310] sm:$0xff]
  %v112 = vld [vmem:[%s0 + $0x318] sm:$0xff]
  %v113 = vld [vmem:[%s0 + $0x320] sm:$0xff]
  %v114 = vld [vmem:[%s0 + $0x328] sm:$0xff]
  %v115 = vld [vmem:[%s0 + $0x330] sm:$0xff]
  %v116 = vld [vmem:[%s0 + $0x338] sm:$0xff]
  %v117 = vld [vmem:[%s0 + $0x340] sm:$0xff]
  %v118 = vld [vmem:[%s0 + $0x348] sm:$0xff]
  %v119 = vld [vmem:[%s0 + $0x350] sm:$0xff]
  %v120 = vld [vmem:[%s0 + $0x358] sm:$0xff]
  %v121 = vld [vmem:[%s0 + $0x360] sm:$0xff]
  %v122 = vld [vmem:[%s0 + $0x368] sm:$0xff]
  %v123 = vld [vmem:[%s0 + $0x370] sm:$0xff]
  %v124 = vld [vmem:[%s0 + $0x378] sm:$0xff]
  %v125 = vld [vmem:[%s0 + $0x380] sm:$0xff]
  %v126 = vld [vmem:[%s0 + $0x388] sm:$0xff]
  %v127 = vld [vmem:[%s0 + $0x390] sm:$0xff]
  %v128 = vld [vmem:[%s0 + $0x398] sm:$0xff]
  %v129 = vld [vmem:[%s0 + $0x3a0] sm:$0xff]
  %v130 = vld [vmem:[%s0 + $0x3a8] sm:$0xff]
  %v131 = vld [vmem:[%s0 + $0x3b0] sm:$0xff]
  %v132 = vld [vmem:[%s0 + $0x3b8] sm:$0xff]
  %v133 = vld [vmem:[%s0 + $0x3c0] sm:$0xff]
  %v134 = vld [vmem:[%s0 + $0x3c8] sm:$0xff]
  %v135 = vld [vmem:[%s0 + $0x3d0] sm:$0xff]
  %v136 = vld [vmem:[%s0 + $0x3d8] sm:$0xff]
  %v137 = vld [vmem:[%s0 + $0x3e0] sm:$0xff]
  %v138 = vld [vmem:[%s0 + $0x3e8] sm:$0xff]
  %v139 = vld [vmem:[%s0 + $0x3f0] sm:$0xff]
  %v140 = vld [vmem:[%s0 + $0x3f8] sm:$0xff]
  %v141 = vpack.c.bf16 %v17, %v13
  %v142 = vpack.c.bf16 %v18, %v14
  %v143 = vpack.c.bf16 %v19, %v15
  %v144 = vpack.c.bf16 %v20, %v16
  %v145 = vpack.c.bf16 %v25, %v21
  %v146 = vpack.c.bf16 %v26, %v22
  %v147 = vpack.c.bf16 %v27, %v23
  %v148 = vpack.c.bf16 %v28, %v24
  %v149 = vpack.c.bf16 %v33, %v29
  %v150 = vpack.c.bf16 %v34, %v30
  %v151 = vpack.c.bf16 %v35, %v31
  %v152 = vpack.c.bf16 %v36, %v32
  %v153 = vpack.c.bf16 %v41, %v37
  %v154 = vpack.c.bf16 %v42, %v38
  %v155 = vpack.c.bf16 %v43, %v39
  %v156 = vpack.c.bf16 %v44, %v40
  %v157 = vpack.c.bf16 %v49, %v45
  %v158 = vpack.c.bf16 %v50, %v46
  %v159 = vpack.c.bf16 %v51, %v47
  %v160 = vpack.c.bf16 %v52, %v48
  %v161 = vpack.c.bf16 %v57, %v53
  %v162 = vpack.c.bf16 %v58, %v54
  %v163 = vpack.c.bf16 %v59, %v55
  %v164 = vpack.c.bf16 %v60, %v56
  %v165 = vpack.c.bf16 %v65, %v61
  %v166 = vpack.c.bf16 %v66, %v62
  %v167 = vpack.c.bf16 %v67, %v63
  %v168 = vpack.c.bf16 %v68, %v64
  %v169 = vpack.c.bf16 %v73, %v69
  %v170 = vpack.c.bf16 %v74, %v70
  %v171 = vpack.c.bf16 %v75, %v71
  %v172 = vpack.c.bf16 %v76, %v72
  %v173 = vpack.c.bf16 %v81, %v77
  %v174 = vpack.c.bf16 %v82, %v78
  %v175 = vpack.c.bf16 %v83, %v79
  %v176 = vpack.c.bf16 %v84, %v80
  %v177 = vpack.c.bf16 %v89, %v85
  %v178 = vpack.c.bf16 %v90, %v86
  %v179 = vpack.c.bf16 %v91, %v87
  %v180 = vpack.c.bf16 %v92, %v88
  %v181 = vpack.c.bf16 %v97, %v93
  %v182 = vpack.c.bf16 %v98, %v94
  %v183 = vpack.c.bf16 %v99, %v95
  %v184 = vpack.c.bf16 %v100, %v96
  %v185 = vpack.c.bf16 %v105, %v101
  %v186 = vpack.c.bf16 %v106, %v102
  %v187 = vpack.c.bf16 %v107, %v103
  %v188 = vpack.c.bf16 %v108, %v104
  %v189 = vpack.c.bf16 %v113, %v109
  %v190 = vpack.c.bf16 %v114, %v110
  %v191 = vpack.c.bf16 %v115, %v111
  %v192 = vpack.c.bf16 %v116, %v112
  %v193 = vpack.c.bf16 %v121, %v117
  %v194 = vpack.c.bf16 %v122, %v118
  %v195 = vpack.c.bf16 %v123, %v119
  %v196 = vpack.c.bf16 %v124, %v120
  %v197 = vpack.c.bf16 %v129, %v125
  %v198 = vpack.c.bf16 %v130, %v126
  %v199 = vpack.c.bf16 %v131, %v127
  %v200 = vpack.c.bf16 %v132, %v128
  %v201 = vpack.c.bf16 %v137, %v133
  %v202 = vpack.c.bf16 %v138, %v134
  %v203 = vpack.c.bf16 %v139, %v135
  %v204 = vpack.c.bf16 %v140, %v136
  %v205 = vld [vmem:[%s1] sm:$0xff]
  %v206 = vld [vmem:[%s1 + $0x8] sm:$0xff]
  %v207 = vld [vmem:[%s1 + $0x10] sm:$0xff]
  %v208 = vld [vmem:[%s1 + $0x18] sm:$0xff]
  %v209 = vld [vmem:[%s1 + $0x20] sm:$0xff]
  %v210 = vld [vmem:[%s1 + $0x28] sm:$0xff]
  %v211 = vld [vmem:[%s1 + $0x30] sm:$0xff]
  %v212 = vld [vmem:[%s1 + $0x38] sm:$0xff]
  %v213 = vld [vmem:[%s1 + $0x40] sm:$0xff]
  %v214 = vld [vmem:[%s1 + $0x48] sm:$0xff]
  %v215 = vld [vmem:[%s1 + $0x50] sm:$0xff]
  %v216 = vld [vmem:[%s1 + $0x58] sm:$0xff]
  %v217 = vld [vmem:[%s1 + $0x60] sm:$0xff]
  %v218 = vld [vmem:[%s1 + $0x68] sm:$0xff]
  %v219 = vld [vmem:[%s1 + $0x70] sm:$0xff]
  %v220 = vld [vmem:[%s1 + $0x78] sm:$0xff]
  %v221 = vld [vmem:[%s1 + $0x80] sm:$0xff]
  %v222 = vld [vmem:[%s1 + $0x88] sm:$0xff]
  %v223 = vld [vmem:[%s1 + $0x90] sm:$0xff]
  %v224 = vld [vmem:[%s1 + $0x98] sm:$0xff]
  %v225 = vld [vmem:[%s1 + $0xa0] sm:$0xff]
  %v226 = vld [vmem:[%s1 + $0xa8] sm:$0xff]
  %v227 = vld [vmem:[%s1 + $0xb0] sm:$0xff]
  %v228 = vld [vmem:[%s1 + $0xb8] sm:$0xff]
  %v229 = vld [vmem:[%s1 + $0xc0] sm:$0xff]
  %v230 = vld [vmem:[%s1 + $0xc8] sm:$0xff]
  %v231 = vld [vmem:[%s1 + $0xd0] sm:$0xff]
  %v232 = vld [vmem:[%s1 + $0xd8] sm:$0xff]
  %v233 = vld [vmem:[%s1 + $0xe0] sm:$0xff]
  %v234 = vld [vmem:[%s1 + $0xe8] sm:$0xff]
  %v235 = vld [vmem:[%s1 + $0xf0] sm:$0xff]
  %v236 = vld [vmem:[%s1 + $0xf8] sm:$0xff]
  %v237 = vld [vmem:[%s1 + $0x100] sm:$0xff]
  %v238 = vld [vmem:[%s1 + $0x108] sm:$0xff]
  %v239 = vld [vmem:[%s1 + $0x110] sm:$0xff]
  %v240 = vld [vmem:[%s1 + $0x118] sm:$0xff]
  %v241 = vld [vmem:[%s1 + $0x120] sm:$0xff]
  %v242 = vld [vmem:[%s1 + $0x128] sm:$0xff]
  %v243 = vld [vmem:[%s1 + $0x130] sm:$0xff]
  %v244 = vld [vmem:[%s1 + $0x138] sm:$0xff]
  %v245 = vld [vmem:[%s1 + $0x140] sm:$0xff]
  %v246 = vld [vmem:[%s1 + $0x148] sm:$0xff]
  %v247 = vld [vmem:[%s1 + $0x150] sm:$0xff]
  %v248 = vld [vmem:[%s1 + $0x158] sm:$0xff]
  %v249 = vld [vmem:[%s1 + $0x160] sm:$0xff]
  %v250 = vld [vmem:[%s1 + $0x168] sm:$0xff]
  %v251 = vld [vmem:[%s1 + $0x170] sm:$0xff]
  %v252 = vld [vmem:[%s1 + $0x178] sm:$0xff]
  %v253 = vld [vmem:[%s1 + $0x180] sm:$0xff]
  %v254 = vld [vmem:[%s1 + $0x188] sm:$0xff]
  %v255 = vld [vmem:[%s1 + $0x190] sm:$0xff]
  %v256 = vld [vmem:[%s1 + $0x198] sm:$0xff]
  %v257 = vld [vmem:[%s1 + $0x1a0] sm:$0xff]
  %v258 = vld [vmem:[%s1 + $0x1a8] sm:$0xff]
  %v259 = vld [vmem:[%s1 + $0x1b0] sm:$0xff]
  %v260 = vld [vmem:[%s1 + $0x1b8] sm:$0xff]
  %v261 = vld [vmem:[%s1 + $0x1c0] sm:$0xff]
  %v262 = vld [vmem:[%s1 + $0x1c8] sm:$0xff]
  %v263 = vld [vmem:[%s1 + $0x1d0] sm:$0xff]
  %v264 = vld [vmem:[%s1 + $0x1d8] sm:$0xff]
  %v265 = vld [vmem:[%s1 + $0x1e0] sm:$0xff]
  %v266 = vld [vmem:[%s1 + $0x1e8] sm:$0xff]
  %v267 = vld [vmem:[%s1 + $0x1f0] sm:$0xff]
  %v268 = vld [vmem:[%s1 + $0x1f8] sm:$0xff]
  %v269 = vld [vmem:[%s1 + $0x200] sm:$0xff]
  %v270 = vld [vmem:[%s1 + $0x208] sm:$0xff]
  %v271 = vld [vmem:[%s1 + $0x210] sm:$0xff]
  %v272 = vld [vmem:[%s1 + $0x218] sm:$0xff]
  %v273 = vld [vmem:[%s1 + $0x220] sm:$0xff]
  %v274 = vld [vmem:[%s1 + $0x228] sm:$0xff]
  %v275 = vld [vmem:[%s1 + $0x230] sm:$0xff]
  %v276 = vld [vmem:[%s1 + $0x238] sm:$0xff]
  %v277 = vld [vmem:[%s1 + $0x240] sm:$0xff]
  %v278 = vld [vmem:[%s1 + $0x248] sm:$0xff]
  %v279 = vld [vmem:[%s1 + $0x250] sm:$0xff]
  %v280 = vld [vmem:[%s1 + $0x258] sm:$0xff]
  %v281 = vld [vmem:[%s1 + $0x260] sm:$0xff]
  %v282 = vld [vmem:[%s1 + $0x268] sm:$0xff]
  %v283 = vld [vmem:[%s1 + $0x270] sm:$0xff]
  %v284 = vld [vmem:[%s1 + $0x278] sm:$0xff]
  %v285 = vld [vmem:[%s1 + $0x280] sm:$0xff]
  %v286 = vld [vmem:[%s1 + $0x288] sm:$0xff]
  %v287 = vld [vmem:[%s1 + $0x290] sm:$0xff]
  %v288 = vld [vmem:[%s1 + $0x298] sm:$0xff]
  %v289 = vld [vmem:[%s1 + $0x2a0] sm:$0xff]
  %v290 = vld [vmem:[%s1 + $0x2a8] sm:$0xff]
  %v291 = vld [vmem:[%s1 + $0x2b0] sm:$0xff]
  %v292 = vld [vmem:[%s1 + $0x2b8] sm:$0xff]
  %v293 = vld [vmem:[%s1 + $0x2c0] sm:$0xff]
  %v294 = vld [vmem:[%s1 + $0x2c8] sm:$0xff]
  %v295 = vld [vmem:[%s1 + $0x2d0] sm:$0xff]
  %v296 = vld [vmem:[%s1 + $0x2d8] sm:$0xff]
  %v297 = vld [vmem:[%s1 + $0x2e0] sm:$0xff]
  %v298 = vld [vmem:[%s1 + $0x2e8] sm:$0xff]
  %v299 = vld [vmem:[%s1 + $0x2f0] sm:$0xff]
  %v300 = vld [vmem:[%s1 + $0x2f8] sm:$0xff]
  %v301 = vld [vmem:[%s1 + $0x300] sm:$0xff]
  %v302 = vld [vmem:[%s1 + $0x308] sm:$0xff]
  %v303 = vld [vmem:[%s1 + $0x310] sm:$0xff]
  %v304 = vld [vmem:[%s1 + $0x318] sm:$0xff]
  %v305 = vld [vmem:[%s1 + $0x320] sm:$0xff]
  %v306 = vld [vmem:[%s1 + $0x328] sm:$0xff]
  %v307 = vld [vmem:[%s1 + $0x330] sm:$0xff]
  %v308 = vld [vmem:[%s1 + $0x338] sm:$0xff]
  %v309 = vld [vmem:[%s1 + $0x340] sm:$0xff]
  %v310 = vld [vmem:[%s1 + $0x348] sm:$0xff]
  %v311 = vld [vmem:[%s1 + $0x350] sm:$0xff]
  %v312 = vld [vmem:[%s1 + $0x358] sm:$0xff]
  %v313 = vld [vmem:[%s1 + $0x360] sm:$0xff]
  %v314 = vld [vmem:[%s1 + $0x368] sm:$0xff]
  %v315 = vld [vmem:[%s1 + $0x370] sm:$0xff]
  %v316 = vld [vmem:[%s1 + $0x378] sm:$0xff]
  %v317 = vld [vmem:[%s1 + $0x380] sm:$0xff]
  %v318 = vld [vmem:[%s1 + $0x388] sm:$0xff]
  %v319 = vld [vmem:[%s1 + $0x390] sm:$0xff]
  %v320 = vld [vmem:[%s1 + $0x398] sm:$0xff]
  %v321 = vld [vmem:[%s1 + $0x3a0] sm:$0xff]
  %v322 = vld [vmem:[%s1 + $0x3a8] sm:$0xff]
  %v323 = vld [vmem:[%s1 + $0x3b0] sm:$0xff]
  %v324 = vld [vmem:[%s1 + $0x3b8] sm:$0xff]
  %v325 = vld [vmem:[%s1 + $0x3c0] sm:$0xff]
  %v326 = vld [vmem:[%s1 + $0x3c8] sm:$0xff]
  %v327 = vld [vmem:[%s1 + $0x3d0] sm:$0xff]
  %v328 = vld [vmem:[%s1 + $0x3d8] sm:$0xff]
  %v329 = vld [vmem:[%s1 + $0x3e0] sm:$0xff]
  %v330 = vld [vmem:[%s1 + $0x3e8] sm:$0xff]
  %v331 = vld [vmem:[%s1 + $0x3f0] sm:$0xff]
  %v332 = vld [vmem:[%s1 + $0x3f8] sm:$0xff]
  %v461 = vunpack.c.l.b16 %v205
  %v462 = vunpack.c.h.b16 %v205
  %v463 = vunpack.c.l.b16 %v206
  %v464 = vunpack.c.h.b16 %v206
  %v465 = vunpack.c.l.b16 %v207
  %v466 = vunpack.c.h.b16 %v207
  %v467 = vunpack.c.l.b16 %v208
  %v468 = vunpack.c.h.b16 %v208
  %v469 = vunpack.c.l.b16 %v209
  %v470 = vunpack.c.h.b16 %v209
  %v471 = vunpack.c.l.b16 %v210
  %v472 = vunpack.c.h.b16 %v210
  %v473 = vunpack.c.l.b16 %v211
  %v474 = vunpack.c.h.b16 %v211
  %v475 = vunpack.c.l.b16 %v212
  %v476 = vunpack.c.h.b16 %v212
  %v477 = vunpack.c.l.b16 %v213
  %v478 = vunpack.c.h.b16 %v213
  %v479 = vunpack.c.l.b16 %v214
  %v480 = vunpack.c.h.b16 %v214
  %v481 = vunpack.c.l.b16 %v215
  %v482 = vunpack.c.h.b16 %v215
  %v483 = vunpack.c.l.b16 %v216
  %v484 = vunpack.c.h.b16 %v216
  %v485 = vunpack.c.l.b16 %v217
  %v486 = vunpack.c.h.b16 %v217
  %v487 = vunpack.c.l.b16 %v218
  %v488 = vunpack.c.h.b16 %v218
  %v489 = vunpack.c.l.b16 %v219
  %v490 = vunpack.c.h.b16 %v219
  %v491 = vunpack.c.l.b16 %v220
  %v492 = vunpack.c.h.b16 %v220
  %v493 = vunpack.c.l.b16 %v221
  %v494 = vunpack.c.h.b16 %v221
  %v495 = vunpack.c.l.b16 %v222
  %v496 = vunpack.c.h.b16 %v222
  %v497 = vunpack.c.l.b16 %v223
  %v498 = vunpack.c.h.b16 %v223
  %v499 = vunpack.c.l.b16 %v224
  %v500 = vunpack.c.h.b16 %v224
  %v501 = vunpack.c.l.b16 %v225
  %v502 = vunpack.c.h.b16 %v225
  %v503 = vunpack.c.l.b16 %v226
  %v504 = vunpack.c.h.b16 %v226
  %v505 = vunpack.c.l.b16 %v227
  %v506 = vunpack.c.h.b16 %v227
  %v507 = vunpack.c.l.b16 %v228
  %v508 = vunpack.c.h.b16 %v228
  %v509 = vunpack.c.l.b16 %v229
  %v510 = vunpack.c.h.b16 %v229
  %v511 = vunpack.c.l.b16 %v230
  %v512 = vunpack.c.h.b16 %v230
  %v513 = vunpack.c.l.b16 %v231
  %v514 = vunpack.c.h.b16 %v231
  %v515 = vunpack.c.l.b16 %v232
  %v516 = vunpack.c.h.b16 %v232
  %v517 = vunpack.c.l.b16 %v233
  %v518 = vunpack.c.h.b16 %v233
  %v519 = vunpack.c.l.b16 %v234
  %v520 = vunpack.c.h.b16 %v234
  %v521 = vunpack.c.l.b16 %v235
  %v522 = vunpack.c.h.b16 %v235
  %v523 = vunpack.c.l.b16 %v236
  %v524 = vunpack.c.h.b16 %v236
  %v525 = vunpack.c.l.b16 %v237
  %v526 = vunpack.c.h.b16 %v237
  %v527 = vunpack.c.l.b16 %v238
  %v528 = vunpack.c.h.b16 %v238
  %v529 = vunpack.c.l.b16 %v239
  %v530 = vunpack.c.h.b16 %v239
  %v531 = vunpack.c.l.b16 %v240
  %v532 = vunpack.c.h.b16 %v240
  %v533 = vunpack.c.l.b16 %v241
  %v534 = vunpack.c.h.b16 %v241
  %v535 = vunpack.c.l.b16 %v242
  %v536 = vunpack.c.h.b16 %v242
  %v537 = vunpack.c.l.b16 %v243
  %v538 = vunpack.c.h.b16 %v243
  %v539 = vunpack.c.l.b16 %v244
  %v540 = vunpack.c.h.b16 %v244
  %v541 = vunpack.c.l.b16 %v245
  %v542 = vunpack.c.h.b16 %v245
  %v543 = vunpack.c.l.b16 %v246
  %v544 = vunpack.c.h.b16 %v246
  %v545 = vunpack.c.l.b16 %v247
  %v546 = vunpack.c.h.b16 %v247
  %v547 = vunpack.c.l.b16 %v248
  %v548 = vunpack.c.h.b16 %v248
  %v549 = vunpack.c.l.b16 %v249
  %v550 = vunpack.c.h.b16 %v249
  %v551 = vunpack.c.l.b16 %v250
  %v552 = vunpack.c.h.b16 %v250
  %v553 = vunpack.c.l.b16 %v251
  %v554 = vunpack.c.h.b16 %v251
  %v555 = vunpack.c.l.b16 %v252
  %v556 = vunpack.c.h.b16 %v252
  %v557 = vunpack.c.l.b16 %v253
  %v558 = vunpack.c.h.b16 %v253
  %v559 = vunpack.c.l.b16 %v254
  %v560 = vunpack.c.h.b16 %v254
  %v561 = vunpack.c.l.b16 %v255
  %v562 = vunpack.c.h.b16 %v255
  %v563 = vunpack.c.l.b16 %v256
  %v564 = vunpack.c.h.b16 %v256
  %v565 = vunpack.c.l.b16 %v257
  %v566 = vunpack.c.h.b16 %v257
  %v567 = vunpack.c.l.b16 %v258
  %v568 = vunpack.c.h.b16 %v258
  %v569 = vunpack.c.l.b16 %v259
  %v570 = vunpack.c.h.b16 %v259
  %v571 = vunpack.c.l.b16 %v260
  %v572 = vunpack.c.h.b16 %v260
  %v573 = vunpack.c.l.b16 %v261
  %v574 = vunpack.c.h.b16 %v261
  %v575 = vunpack.c.l.b16 %v262
  %v576 = vunpack.c.h.b16 %v262
  %v577 = vunpack.c.l.b16 %v263
  %v578 = vunpack.c.h.b16 %v263
  %v579 = vunpack.c.l.b16 %v264
  %v580 = vunpack.c.h.b16 %v264
  %v581 = vunpack.c.l.b16 %v265
  %v582 = vunpack.c.h.b16 %v265
  %v583 = vunpack.c.l.b16 %v266
  %v584 = vunpack.c.h.b16 %v266
  %v585 = vunpack.c.l.b16 %v267
  %v586 = vunpack.c.h.b16 %v267
  %v587 = vunpack.c.l.b16 %v268
  %v588 = vunpack.c.h.b16 %v268
  %v589 = vunpack.c.l.b16 %v269
  %v590 = vunpack.c.h.b16 %v269
  %v591 = vunpack.c.l.b16 %v270
  %v592 = vunpack.c.h.b16 %v270
  %v593 = vunpack.c.l.b16 %v271
  %v594 = vunpack.c.h.b16 %v271
  %v595 = vunpack.c.l.b16 %v272
  %v596 = vunpack.c.h.b16 %v272
  %v597 = vunpack.c.l.b16 %v273
  %v598 = vunpack.c.h.b16 %v273
  %v599 = vunpack.c.l.b16 %v274
  %v600 = vunpack.c.h.b16 %v274
  %v601 = vunpack.c.l.b16 %v275
  %v602 = vunpack.c.h.b16 %v275
  %v603 = vunpack.c.l.b16 %v276
  %v604 = vunpack.c.h.b16 %v276
  %v605 = vunpack.c.l.b16 %v277
  %v606 = vunpack.c.h.b16 %v277
  %v607 = vunpack.c.l.b16 %v278
  %v608 = vunpack.c.h.b16 %v278
  %v609 = vunpack.c.l.b16 %v279
  %v610 = vunpack.c.h.b16 %v279
  %v611 = vunpack.c.l.b16 %v280
  %v612 = vunpack.c.h.b16 %v280
  %v613 = vunpack.c.l.b16 %v281
  %v614 = vunpack.c.h.b16 %v281
  %v615 = vunpack.c.l.b16 %v282
  %v616 = vunpack.c.h.b16 %v282
  %v617 = vunpack.c.l.b16 %v283
  %v618 = vunpack.c.h.b16 %v283
  %v619 = vunpack.c.l.b16 %v284
  %v620 = vunpack.c.h.b16 %v284
  %v621 = vunpack.c.l.b16 %v285
  %v622 = vunpack.c.h.b16 %v285
  %v623 = vunpack.c.l.b16 %v286
  %v624 = vunpack.c.h.b16 %v286
  %v625 = vunpack.c.l.b16 %v287
  %v626 = vunpack.c.h.b16 %v287
  %v627 = vunpack.c.l.b16 %v288
  %v628 = vunpack.c.h.b16 %v288
  %v629 = vunpack.c.l.b16 %v289
  %v630 = vunpack.c.h.b16 %v289
  %v631 = vunpack.c.l.b16 %v290
  %v632 = vunpack.c.h.b16 %v290
  %v633 = vunpack.c.l.b16 %v291
  %v634 = vunpack.c.h.b16 %v291
  %v635 = vunpack.c.l.b16 %v292
  %v636 = vunpack.c.h.b16 %v292
  %v637 = vunpack.c.l.b16 %v293
  %v638 = vunpack.c.h.b16 %v293
  %v639 = vunpack.c.l.b16 %v294
  %v640 = vunpack.c.h.b16 %v294
  %v641 = vunpack.c.l.b16 %v295
  %v642 = vunpack.c.h.b16 %v295
  %v643 = vunpack.c.l.b16 %v296
  %v644 = vunpack.c.h.b16 %v296
  %v645 = vunpack.c.l.b16 %v297
  %v646 = vunpack.c.h.b16 %v297
  %v647 = vunpack.c.l.b16 %v298
  %v648 = vunpack.c.h.b16 %v298
  %v649 = vunpack.c.l.b16 %v299
  %v650 = vunpack.c.h.b16 %v299
  %v651 = vunpack.c.l.b16 %v300
  %v652 = vunpack.c.h.b16 %v300
  %v653 = vunpack.c.l.b16 %v301
  %v654 = vunpack.c.h.b16 %v301
  %v655 = vunpack.c.l.b16 %v302
  %v656 = vunpack.c.h.b16 %v302
  %v657 = vunpack.c.l.b16 %v303
  %v658 = vunpack.c.h.b16 %v303
  %v659 = vunpack.c.l.b16 %v304
  %v660 = vunpack.c.h.b16 %v304
  %v661 = vunpack.c.l.b16 %v305
  %v662 = vunpack.c.h.b16 %v305
  %v663 = vunpack.c.l.b16 %v306
  %v664 = vunpack.c.h.b16 %v306
  %v665 = vunpack.c.l.b16 %v307
  %v666 = vunpack.c.h.b16 %v307
  %v667 = vunpack.c.l.b16 %v308
  %v668 = vunpack.c.h.b16 %v308
  %v669 = vunpack.c.l.b16 %v309
  %v670 = vunpack.c.h.b16 %v309
  %v671 = vunpack.c.l.b16 %v310
  %v672 = vunpack.c.h.b16 %v310
  %v673 = vunpack.c.l.b16 %v311
  %v674 = vunpack.c.h.b16 %v311
  %v675 = vunpack.c.l.b16 %v312
  %v676 = vunpack.c.h.b16 %v312
  %v677 = vunpack.c.l.b16 %v313
  %v678 = vunpack.c.h.b16 %v313
  %v679 = vunpack.c.l.b16 %v314
  %v680 = vunpack.c.h.b16 %v314
  %v681 = vunpack.c.l.b16 %v315
  %v682 = vunpack.c.h.b16 %v315
  %v683 = vunpack.c.l.b16 %v316
  %v684 = vunpack.c.h.b16 %v316
  %v685 = vunpack.c.l.b16 %v317
  %v686 = vunpack.c.h.b16 %v317
  %v687 = vunpack.c.l.b16 %v318
  %v688 = vunpack.c.h.b16 %v318
  %v689 = vunpack.c.l.b16 %v319
  %v690 = vunpack.c.h.b16 %v319
  %v691 = vunpack.c.l.b16 %v320
  %v692 = vunpack.c.h.b16 %v320
  %v693 = vunpack.c.l.b16 %v321
  %v694 = vunpack.c.h.b16 %v321
  %v695 = vunpack.c.l.b16 %v322
  %v696 = vunpack.c.h.b16 %v322
  %v697 = vunpack.c.l.b16 %v323
  %v698 = vunpack.c.h.b16 %v323
  %v699 = vunpack.c.l.b16 %v324
  %v700 = vunpack.c.h.b16 %v324
  %v701 = vunpack.c.l.b16 %v325
  %v702 = vunpack.c.h.b16 %v325
  %v703 = vunpack.c.l.b16 %v326
  %v704 = vunpack.c.h.b16 %v326
  %v705 = vunpack.c.l.b16 %v327
  %v706 = vunpack.c.h.b16 %v327
  %v707 = vunpack.c.l.b16 %v328
  %v708 = vunpack.c.h.b16 %v328
  %v709 = vunpack.c.l.b16 %v329
  %v710 = vunpack.c.h.b16 %v329
  %v711 = vunpack.c.l.b16 %v330
  %v712 = vunpack.c.h.b16 %v330
  %v713 = vunpack.c.l.b16 %v331
  %v714 = vunpack.c.h.b16 %v331
  %v715 = vunpack.c.l.b16 %v332
  %v716 = vunpack.c.h.b16 %v332
  %v717 = vpack.c.b16 %v465, %v461
  %v718 = vpack.c.b16 %v466, %v462
  %v719 = vpack.c.b16 %v467, %v463
  %v720 = vpack.c.b16 %v468, %v464
  %v721 = vpack.c.b16 %v473, %v469
  %v722 = vpack.c.b16 %v474, %v470
  %v723 = vpack.c.b16 %v475, %v471
  %v724 = vpack.c.b16 %v476, %v472
  %v725 = vpack.c.b16 %v481, %v477
  %v726 = vpack.c.b16 %v482, %v478
  %v727 = vpack.c.b16 %v483, %v479
  %v728 = vpack.c.b16 %v484, %v480
  %v729 = vpack.c.b16 %v489, %v485
  %v730 = vpack.c.b16 %v490, %v486
  %v731 = vpack.c.b16 %v491, %v487
  %v732 = vpack.c.b16 %v492, %v488
  %v733 = vpack.c.b16 %v497, %v493
  %v734 = vpack.c.b16 %v498, %v494
  %v735 = vpack.c.b16 %v499, %v495
  %v736 = vpack.c.b16 %v500, %v496
  %v737 = vpack.c.b16 %v505, %v501
  %v738 = vpack.c.b16 %v506, %v502
  %v739 = vpack.c.b16 %v507, %v503
  %v740 = vpack.c.b16 %v508, %v504
  %v741 = vpack.c.b16 %v513, %v509
  %v742 = vpack.c.b16 %v514, %v510
  %v743 = vpack.c.b16 %v515, %v511
  %v744 = vpack.c.b16 %v516, %v512
  %v745 = vpack.c.b16 %v521, %v517
  %v746 = vpack.c.b16 %v522, %v518
  %v747 = vpack.c.b16 %v523, %v519
  %v748 = vpack.c.b16 %v524, %v520
  %v749 = vpack.c.b16 %v529, %v525
  %v750 = vpack.c.b16 %v530, %v526
  %v751 = vpack.c.b16 %v531, %v527
  %v752 = vpack.c.b16 %v532, %v528
  %v753 = vpack.c.b16 %v537, %v533
  %v754 = vpack.c.b16 %v538, %v534
  %v755 = vpack.c.b16 %v539, %v535
  %v756 = vpack.c.b16 %v540, %v536
  %v757 = vpack.c.b16 %v545, %v541
  %v758 = vpack.c.b16 %v546, %v542
  %v759 = vpack.c.b16 %v547, %v543
  %v760 = vpack.c.b16 %v548, %v544
  %v761 = vpack.c.b16 %v553, %v549
  %v762 = vpack.c.b16 %v554, %v550
  %v763 = vpack.c.b16 %v555, %v551
  %v764 = vpack.c.b16 %v556, %v552
  %v765 = vpack.c.b16 %v561, %v557
  %v766 = vpack.c.b16 %v562, %v558
  %v767 = vpack.c.b16 %v563, %v559
  %v768 = vpack.c.b16 %v564, %v560
  %v769 = vpack.c.b16 %v569, %v565
  %v770 = vpack.c.b16 %v570, %v566
  %v771 = vpack.c.b16 %v571, %v567
  %v772 = vpack.c.b16 %v572, %v568
  %v773 = vpack.c.b16 %v577, %v573
  %v774 = vpack.c.b16 %v578, %v574
  %v775 = vpack.c.b16 %v579, %v575
  %v776 = vpack.c.b16 %v580, %v576
  %v777 = vpack.c.b16 %v585, %v581
  %v778 = vpack.c.b16 %v586, %v582
  %v779 = vpack.c.b16 %v587, %v583
  %v780 = vpack.c.b16 %v588, %v584
  %v781 = vpack.c.b16 %v593, %v589
  %v782 = vpack.c.b16 %v594, %v590
  %v783 = vpack.c.b16 %v595, %v591
  %v784 = vpack.c.b16 %v596, %v592
  %v785 = vpack.c.b16 %v601, %v597
  %v786 = vpack.c.b16 %v602, %v598
  %v787 = vpack.c.b16 %v603, %v599
  %v788 = vpack.c.b16 %v604, %v600
  %v789 = vpack.c.b16 %v609, %v605
  %v790 = vpack.c.b16 %v610, %v606
  %v791 = vpack.c.b16 %v611, %v607
  %v792 = vpack.c.b16 %v612, %v608
  %v793 = vpack.c.b16 %v617, %v613
  %v794 = vpack.c.b16 %v618, %v614
  %v795 = vpack.c.b16 %v619, %v615
  %v796 = vpack.c.b16 %v620, %v616
  %v797 = vpack.c.b16 %v625, %v621
  %v798 = vpack.c.b16 %v626, %v622
  %v799 = vpack.c.b16 %v627, %v623
  %v800 = vpack.c.b16 %v628, %v624
  %v801 = vpack.c.b16 %v633, %v629
  %v802 = vpack.c.b16 %v634, %v630
  %v803 = vpack.c.b16 %v635, %v631
  %v804 = vpack.c.b16 %v636, %v632
  %v805 = vpack.c.b16 %v641, %v637
  %v806 = vpack.c.b16 %v642, %v638
  %v807 = vpack.c.b16 %v643, %v639
  %v808 = vpack.c.b16 %v644, %v640
  %v809 = vpack.c.b16 %v649, %v645
  %v810 = vpack.c.b16 %v650, %v646
  %v811 = vpack.c.b16 %v651, %v647
  %v812 = vpack.c.b16 %v652, %v648
  %v813 = vpack.c.b16 %v657, %v653
  %v814 = vpack.c.b16 %v658, %v654
  %v815 = vpack.c.b16 %v659, %v655
  %v816 = vpack.c.b16 %v660, %v656
  %v817 = vpack.c.b16 %v665, %v661
  %v818 = vpack.c.b16 %v666, %v662
  %v819 = vpack.c.b16 %v667, %v663
  %v820 = vpack.c.b16 %v668, %v664
  %v821 = vpack.c.b16 %v673, %v669
  %v822 = vpack.c.b16 %v674, %v670
  %v823 = vpack.c.b16 %v675, %v671
  %v824 = vpack.c.b16 %v676, %v672
  %v825 = vpack.c.b16 %v681, %v677
  %v826 = vpack.c.b16 %v682, %v678
  %v827 = vpack.c.b16 %v683, %v679
  %v828 = vpack.c.b16 %v684, %v680
  %v829 = vpack.c.b16 %v689, %v685
  %v830 = vpack.c.b16 %v690, %v686
  %v831 = vpack.c.b16 %v691, %v687
  %v832 = vpack.c.b16 %v692, %v688
  %v833 = vpack.c.b16 %v697, %v693
  %v834 = vpack.c.b16 %v698, %v694
  %v835 = vpack.c.b16 %v699, %v695
  %v836 = vpack.c.b16 %v700, %v696
  %v837 = vpack.c.b16 %v705, %v701
  %v838 = vpack.c.b16 %v706, %v702
  %v839 = vpack.c.b16 %v707, %v703
  %v840 = vpack.c.b16 %v708, %v704
  %v841 = vpack.c.b16 %v713, %v709
  %v842 = vpack.c.b16 %v714, %v710
  %v843 = vpack.c.b16 %v715, %v711
  %v844 = vpack.c.b16 %v716, %v712
  %973 = vmatprep.subr.bf16.mxu0 %v718
  %974 = vmatpush1.bf16.msra.mxu0 %v717
  %975 = vmatprep.subr.bf16.mxu0 %v722
  %976 = vmatpush1.bf16.msra.mxu0 %v721
  %977 = vmatprep.subr.bf16.mxu0 %v726
  %978 = vmatpush1.bf16.msra.mxu0 %v725
  %979 = vmatprep.subr.bf16.mxu0 %v730
  %980 = vmatpush1.bf16.msra.mxu0 %v729
  %981 = vmatprep.subr.bf16.mxu0 %v734
  %982 = vmatpush1.bf16.msra.mxu0 %v733
  %983 = vmatprep.subr.bf16.mxu0 %v738
  %984 = vmatpush1.bf16.msra.mxu0 %v737
  %985 = vmatprep.subr.bf16.mxu0 %v742
  %986 = vmatpush1.bf16.msra.mxu0 %v741
  %987 = vmatprep.subr.bf16.mxu0 %v746
  %988 = vmatpush1.bf16.msra.mxu0 %v745
  %989 = vmatprep.subr.bf16.mxu0 %v750
  %990 = vmatpush1.bf16.msra.mxu0 %v749
  %991 = vmatprep.subr.bf16.mxu0 %v754
  %992 = vmatpush1.bf16.msra.mxu0 %v753
  %993 = vmatprep.subr.bf16.mxu0 %v758
  %994 = vmatpush1.bf16.msra.mxu0 %v757
  %995 = vmatprep.subr.bf16.mxu0 %v762
  %996 = vmatpush1.bf16.msra.mxu0 %v761
  %997 = vmatprep.subr.bf16.mxu0 %v766
  %998 = vmatpush1.bf16.msra.mxu0 %v765
  %999 = vmatprep.subr.bf16.mxu0 %v770
  %1000 = vmatpush1.bf16.msra.mxu0 %v769
  %1001 = vmatprep.subr.bf16.mxu0 %v774
  %1002 = vmatpush1.bf16.msra.mxu0 %v773
  %1003 = vmatprep.subr.bf16.mxu0 %v778
  %1004 = vmatpush1.bf16.msra.mxu0 %v777
  %1005 = vmatprep.mubr.bf16.mxu0 %v142
  %1006 = vmatmul.mubr.bf16.gmra.mrb[0].mxu0 %v141
  %v1007 = vpop.f32.mrb[0].mxu0
  %v1008 = vadd.f32 0.0, %v1007
  %v1009 = vpop.f32.mrb[0].mxu0
  %v1010 = vadd.f32 0.0, %v1009
  %v1011 = vpop.f32.mrb[0].mxu0
  %v1012 = vadd.f32 0.0, %v1011
  %v1013 = vpop.f32.mrb[0].mxu0
  %v1014 = vadd.f32 0.0, %v1013
  %1015 = vmatprep.mubr.bf16.mxu0 %v146
  %1016 = vmatmul.mubr.bf16.gmra.mrb[0].mxu0 %v145
  %v1017 = vpop.f32.mrb[0].mxu0
  %v1018 = vadd.f32 0.0, %v1017
  %v1019 = vpop.f32.mrb[0].mxu0
  %v1020 = vadd.f32 0.0, %v1019
  %v1021 = vpop.f32.mrb[0].mxu0
  %v1022 = vadd.f32 0.0, %v1021
  %v1023 = vpop.f32.mrb[0].mxu0
  %v1024 = vadd.f32 0.0, %v1023
  %1025 = vmatprep.mubr.bf16.mxu0 %v150
  %1026 = vmatmul.mubr.bf16.gmra.mrb[0].mxu0 %v149
  %v1027 = vpop.f32.mrb[0].mxu0
  %v1028 = vadd.f32 0.0, %v1027
  %v1029 = vpop.f32.mrb[0].mxu0
  %v1030 = vadd.f32 0.0, %v1029
  %v1031 = vpop.f32.mrb[0].mxu0
  %v1032 = vadd.f32 0.0, %v1031
  %v1033 = vpop.f32.mrb[0].mxu0
  %v1034 = vadd.f32 0.0, %v1033
  %1035 = vmatprep.mubr.bf16.mxu0 %v154
  %1036 = vmatmul.mubr.bf16.gmra.mrb[0].mxu0 %v153
  %v1037 = vpop.f32.mrb[0].mxu0
  %v1038 = vadd.f32 0.0, %v1037
  %v1039 = vpop.f32.mrb[0].mxu0
  %v1040 = vadd.f32 0.0, %v1039
  %v1041 = vpop.f32.mrb[0].mxu0
  %v1042 = vadd.f32 0.0, %v1041
  %v1043 = vpop.f32.mrb[0].mxu0
  %v1044 = vadd.f32 0.0, %v1043
  %1045 = vmatprep.mubr.bf16.mxu0 %v158
  %1046 = vmatmul.mubr.bf16.gmra.mrb[0].mxu0 %v157
  %v1047 = vpop.f32.mrb[0].mxu0
  %v1048 = vadd.f32 0.0, %v1047
  %v1049 = vpop.f32.mrb[0].mxu0
  %v1050 = vadd.f32 0.0, %v1049
  %v1051 = vpop.f32.mrb[0].mxu0
  %v1052 = vadd.f32 0.0, %v1051
  %v1053 = vpop.f32.mrb[0].mxu0
  %v1054 = vadd.f32 0.0, %v1053
  %1055 = vmatprep.mubr.bf16.mxu0 %v162
  %1056 = vmatmul.mubr.bf16.gmra.mrb[0].mxu0 %v161
  %v1057 = vpop.f32.mrb[0].mxu0
  %v1058 = vadd.f32 0.0, %v1057
  %v1059 = vpop.f32.mrb[0].mxu0
  %v1060 = vadd.f32 0.0, %v1059
  %v1061 = vpop.f32.mrb[0].mxu0
  %v1062 = vadd.f32 0.0, %v1061
  %v1063 = vpop.f32.mrb[0].mxu0
  %v1064 = vadd.f32 0.0, %v1063
  %1065 = vmatprep.mubr.bf16.mxu0 %v166
  %1066 = vmatmul.mubr.bf16.gmra.mrb[0].mxu0 %v165
  %v1067 = vpop.f32.mrb[0].mxu0
  %v1068 = vadd.f32 0.0, %v1067
  %v1069 = vpop.f32.mrb[0].mxu0
  %v1070 = vadd.f32 0.0, %v1069
  %v1071 = vpop.f32.mrb[0].mxu0
  %v1072 = vadd.f32 0.0, %v1071
  %v1073 = vpop.f32.mrb[0].mxu0
  %v1074 = vadd.f32 0.0, %v1073
  %1075 = vmatprep.mubr.bf16.mxu0 %v170
  %1076 = vmatmul.mubr.bf16.gmra.mrb[0].mxu0 %v169
  %v1077 = vpop.f32.mrb[0].mxu0
  %v1078 = vadd.f32 0.0, %v1077
  %v1079 = vpop.f32.mrb[0].mxu0
  %v1080 = vadd.f32 0.0, %v1079
  %v1081 = vpop.f32.mrb[0].mxu0
  %v1082 = vadd.f32 0.0, %v1081
  %v1083 = vpop.f32.mrb[0].mxu0
  %v1084 = vadd.f32 0.0, %v1083
  %1085 = vmatprep.mubr.bf16.mxu0 %v174
  %1086 = vmatmul.mubr.bf16.gmra.mrb[0].mxu0 %v173
  %v1087 = vpop.f32.mrb[0].mxu0
  %v1088 = vadd.f32 0.0, %v1087
  %v1089 = vpop.f32.mrb[0].mxu0
  %v1090 = vadd.f32 0.0, %v1089
  %v1091 = vpop.f32.mrb[0].mxu0
  %v1092 = vadd.f32 0.0, %v1091
  %v1093 = vpop.f32.mrb[0].mxu0
  %v1094 = vadd.f32 0.0, %v1093
  %1095 = vmatprep.mubr.bf16.mxu0 %v178
  %1096 = vmatmul.mubr.bf16.gmra.mrb[0].mxu0 %v177
  %v1097 = vpop.f32.mrb[0].mxu0
  %v1098 = vadd.f32 0.0, %v1097
  %v1099 = vpop.f32.mrb[0].mxu0
  %v1100 = vadd.f32 0.0, %v1099
  %v1101 = vpop.f32.mrb[0].mxu0
  %v1102 = vadd.f32 0.0, %v1101
  %v1103 = vpop.f32.mrb[0].mxu0
  %v1104 = vadd.f32 0.0, %v1103
  %1105 = vmatprep.mubr.bf16.mxu0 %v182
  %1106 = vmatmul.mubr.bf16.gmra.mrb[0].mxu0 %v181
  %v1107 = vpop.f32.mrb[0].mxu0
  %v1108 = vadd.f32 0.0, %v1107
  %v1109 = vpop.f32.mrb[0].mxu0
  %v1110 = vadd.f32 0.0, %v1109
  %v1111 = vpop.f32.mrb[0].mxu0
  %v1112 = vadd.f32 0.0, %v1111
  %v1113 = vpop.f32.mrb[0].mxu0
  %v1114 = vadd.f32 0.0, %v1113
  %1115 = vmatprep.mubr.bf16.mxu0 %v186
  %1116 = vmatmul.mubr.bf16.gmra.mrb[0].mxu0 %v185
  %v1117 = vpop.f32.mrb[0].mxu0
  %v1118 = vadd.f32 0.0, %v1117
  %v1119 = vpop.f32.mrb[0].mxu0
  %v1120 = vadd.f32 0.0, %v1119
  %v1121 = vpop.f32.mrb[0].mxu0
  %v1122 = vadd.f32 0.0, %v1121
  %v1123 = vpop.f32.mrb[0].mxu0
  %v1124 = vadd.f32 0.0, %v1123
  %1125 = vmatprep.mubr.bf16.mxu0 %v190
  %1126 = vmatmul.mubr.bf16.gmra.mrb[0].mxu0 %v189
  %v1127 = vpop.f32.mrb[0].mxu0
  %v1128 = vadd.f32 0.0, %v1127
  %v1129 = vpop.f32.mrb[0].mxu0
  %v1130 = vadd.f32 0.0, %v1129
  %v1131 = vpop.f32.mrb[0].mxu0
  %v1132 = vadd.f32 0.0, %v1131
  %v1133 = vpop.f32.mrb[0].mxu0
  %v1134 = vadd.f32 0.0, %v1133
  %1135 = vmatprep.mubr.bf16.mxu0 %v194
  %1136 = vmatmul.mubr.bf16.gmra.mrb[0].mxu0 %v193
  %v1137 = vpop.f32.mrb[0].mxu0
  %v1138 = vadd.f32 0.0, %v1137
  %v1139 = vpop.f32.mrb[0].mxu0
  %v1140 = vadd.f32 0.0, %v1139
  %v1141 = vpop.f32.mrb[0].mxu0
  %v1142 = vadd.f32 0.0, %v1141
  %v1143 = vpop.f32.mrb[0].mxu0
  %v1144 = vadd.f32 0.0, %v1143
  %1145 = vmatprep.mubr.bf16.mxu0 %v198
  %1146 = vmatmul.mubr.bf16.gmra.mrb[0].mxu0 %v197
  %v1147 = vpop.f32.mrb[0].mxu0
  %v1148 = vadd.f32 0.0, %v1147
  %v1149 = vpop.f32.mrb[0].mxu0
  %v1150 = vadd.f32 0.0, %v1149
  %v1151 = vpop.f32.mrb[0].mxu0
  %v1152 = vadd.f32 0.0, %v1151
  %v1153 = vpop.f32.mrb[0].mxu0
  %v1154 = vadd.f32 0.0, %v1153
  %1155 = vmatprep.mubr.bf16.mxu0 %v202
  %1156 = vmatmul.mubr.bf16.gmra.mrb[0].mxu0 %v201
  %v1157 = vpop.f32.mrb[0].mxu0
  %v1158 = vadd.f32 0.0, %v1157
  %v1159 = vpop.f32.mrb[0].mxu0
  %v1160 = vadd.f32 0.0, %v1159
  %v1161 = vpop.f32.mrb[0].mxu0
  %v1162 = vadd.f32 0.0, %v1161
  %v1163 = vpop.f32.mrb[0].mxu0
  %v1164 = vadd.f32 0.0, %v1163
  %1165 = vdwg.mxu0
  %1166 = vmatprep.subr.bf16.mxu0 %v782
  %1167 = vmatpush1.bf16.msra.mxu0 %v781
  %1168 = vmatprep.subr.bf16.mxu0 %v786
  %1169 = vmatpush1.bf16.msra.mxu0 %v785
  %1170 = vmatprep.subr.bf16.mxu0 %v790
  %1171 = vmatpush1.bf16.msra.mxu0 %v789
  %1172 = vmatprep.subr.bf16.mxu0 %v794
  %1173 = vmatpush1.bf16.msra.mxu0 %v793
  %1174 = vmatprep.subr.bf16.mxu0 %v798
  %1175 = vmatpush1.bf16.msra.mxu0 %v797
  %1176 = vmatprep.subr.bf16.mxu0 %v802
  %1177 = vmatpush1.bf16.msra.mxu0 %v801
  %1178 = vmatprep.subr.bf16.mxu0 %v806
  %1179 = vmatpush1.bf16.msra.mxu0 %v805
  %1180 = vmatprep.subr.bf16.mxu0 %v810
  %1181 = vmatpush1.bf16.msra.mxu0 %v809
  %1182 = vmatprep.subr.bf16.mxu0 %v814
  %1183 = vmatpush1.bf16.msra.mxu0 %v813
  %1184 = vmatprep.subr.bf16.mxu0 %v818
  %1185 = vmatpush1.bf16.msra.mxu0 %v817
  %1186 = vmatprep.subr.bf16.mxu0 %v822
  %1187 = vmatpush1.bf16.msra.mxu0 %v821
  %1188 = vmatprep.subr.bf16.mxu0 %v826
  %1189 = vmatpush1.bf16.msra.mxu0 %v825
  %1190 = vmatprep.subr.bf16.mxu0 %v830
  %1191 = vmatpush1.bf16.msra.mxu0 %v829
  %1192 = vmatprep.subr.bf16.mxu0 %v834
  %1193 = vmatpush1.bf16.msra.mxu0 %v833
  %1194 = vmatprep.subr.bf16.mxu0 %v838
  %1195 = vmatpush1.bf16.msra.mxu0 %v837
  %1196 = vmatprep.subr.bf16.mxu0 %v842
  %1197 = vmatpush1.bf16.msra.mxu0 %v841
  %1198 = vmatprep.mubr.bf16.mxu0 %v144
  %1199 = vmatmul.mubr.bf16.gmra.mrb[0].mxu0 %v143
  %v1200 = vpop.f32.mrb[0].mxu0
  %v1201 = vadd.f32 %v1008, %v1200
  %v1202 = vpop.f32.mrb[0].mxu0
  %v1203 = vadd.f32 %v1010, %v1202
  %v1204 = vpop.f32.mrb[0].mxu0
  %v1205 = vadd.f32 %v1012, %v1204
  %v1206 = vpop.f32.mrb[0].mxu0
  %v1207 = vadd.f32 %v1014, %v1206
  %1208 = vmatprep.mubr.bf16.mxu0 %v148
  %1209 = vmatmul.mubr.bf16.gmra.mrb[0].mxu0 %v147
  %v1210 = vpop.f32.mrb[0].mxu0
  %v1211 = vadd.f32 %v1018, %v1210
  %v1212 = vpop.f32.mrb[0].mxu0
  %v1213 = vadd.f32 %v1020, %v1212
  %v1214 = vpop.f32.mrb[0].mxu0
  %v1215 = vadd.f32 %v1022, %v1214
  %v1216 = vpop.f32.mrb[0].mxu0
  %v1217 = vadd.f32 %v1024, %v1216
  %1218 = vmatprep.mubr.bf16.mxu0 %v152
  %1219 = vmatmul.mubr.bf16.gmra.mrb[0].mxu0 %v151
  %v1220 = vpop.f32.mrb[0].mxu0
  %v1221 = vadd.f32 %v1028, %v1220
  %v1222 = vpop.f32.mrb[0].mxu0
  %v1223 = vadd.f32 %v1030, %v1222
  %v1224 = vpop.f32.mrb[0].mxu0
  %v1225 = vadd.f32 %v1032, %v1224
  %v1226 = vpop.f32.mrb[0].mxu0
  %v1227 = vadd.f32 %v1034, %v1226
  %1228 = vmatprep.mubr.bf16.mxu0 %v156
  %1229 = vmatmul.mubr.bf16.gmra.mrb[0].mxu0 %v155
  %v1230 = vpop.f32.mrb[0].mxu0
  %v1231 = vadd.f32 %v1038, %v1230
  %v1232 = vpop.f32.mrb[0].mxu0
  %v1233 = vadd.f32 %v1040, %v1232
  %v1234 = vpop.f32.mrb[0].mxu0
  %v1235 = vadd.f32 %v1042, %v1234
  %v1236 = vpop.f32.mrb[0].mxu0
  %v1237 = vadd.f32 %v1044, %v1236
  %1238 = vmatprep.mubr.bf16.mxu0 %v160
  %1239 = vmatmul.mubr.bf16.gmra.mrb[0].mxu0 %v159
  %v1240 = vpop.f32.mrb[0].mxu0
  %v1241 = vadd.f32 %v1048, %v1240
  %v1242 = vpop.f32.mrb[0].mxu0
  %v1243 = vadd.f32 %v1050, %v1242
  %v1244 = vpop.f32.mrb[0].mxu0
  %v1245 = vadd.f32 %v1052, %v1244
  %v1246 = vpop.f32.mrb[0].mxu0
  %v1247 = vadd.f32 %v1054, %v1246
  %1248 = vmatprep.mubr.bf16.mxu0 %v164
  %1249 = vmatmul.mubr.bf16.gmra.mrb[0].mxu0 %v163
  %v1250 = vpop.f32.mrb[0].mxu0
  %v1251 = vadd.f32 %v1058, %v1250
  %v1252 = vpop.f32.mrb[0].mxu0
  %v1253 = vadd.f32 %v1060, %v1252
  %v1254 = vpop.f32.mrb[0].mxu0
  %v1255 = vadd.f32 %v1062, %v1254
  %v1256 = vpop.f32.mrb[0].mxu0
  %v1257 = vadd.f32 %v1064, %v1256
  %1258 = vmatprep.mubr.bf16.mxu0 %v168
  %1259 = vmatmul.mubr.bf16.gmra.mrb[0].mxu0 %v167
  %v1260 = vpop.f32.mrb[0].mxu0
  %v1261 = vadd.f32 %v1068, %v1260
  %v1262 = vpop.f32.mrb[0].mxu0
  %v1263 = vadd.f32 %v1070, %v1262
  %v1264 = vpop.f32.mrb[0].mxu0
  %v1265 = vadd.f32 %v1072, %v1264
  %v1266 = vpop.f32.mrb[0].mxu0
  %v1267 = vadd.f32 %v1074, %v1266
  %1268 = vmatprep.mubr.bf16.mxu0 %v172
  %1269 = vmatmul.mubr.bf16.gmra.mrb[0].mxu0 %v171
  %v1270 = vpop.f32.mrb[0].mxu0
  %v1271 = vadd.f32 %v1078, %v1270
  %v1272 = vpop.f32.mrb[0].mxu0
  %v1273 = vadd.f32 %v1080, %v1272
  %v1274 = vpop.f32.mrb[0].mxu0
  %v1275 = vadd.f32 %v1082, %v1274
  %v1276 = vpop.f32.mrb[0].mxu0
  %v1277 = vadd.f32 %v1084, %v1276
  %1278 = vmatprep.mubr.bf16.mxu0 %v176
  %1279 = vmatmul.mubr.bf16.gmra.mrb[0].mxu0 %v175
  %v1280 = vpop.f32.mrb[0].mxu0
  %v1281 = vadd.f32 %v1088, %v1280
  %v1282 = vpop.f32.mrb[0].mxu0
  %v1283 = vadd.f32 %v1090, %v1282
  %v1284 = vpop.f32.mrb[0].mxu0
  %v1285 = vadd.f32 %v1092, %v1284
  %v1286 = vpop.f32.mrb[0].mxu0
  %v1287 = vadd.f32 %v1094, %v1286
  %1288 = vmatprep.mubr.bf16.mxu0 %v180
  %1289 = vmatmul.mubr.bf16.gmra.mrb[0].mxu0 %v179
  %v1290 = vpop.f32.mrb[0].mxu0
  %v1291 = vadd.f32 %v1098, %v1290
  %v1292 = vpop.f32.mrb[0].mxu0
  %v1293 = vadd.f32 %v1100, %v1292
  %v1294 = vpop.f32.mrb[0].mxu0
  %v1295 = vadd.f32 %v1102, %v1294
  %v1296 = vpop.f32.mrb[0].mxu0
  %v1297 = vadd.f32 %v1104, %v1296
  %1298 = vmatprep.mubr.bf16.mxu0 %v184
  %1299 = vmatmul.mubr.bf16.gmra.mrb[0].mxu0 %v183
  %v1300 = vpop.f32.mrb[0].mxu0
  %v1301 = vadd.f32 %v1108, %v1300
  %v1302 = vpop.f32.mrb[0].mxu0
  %v1303 = vadd.f32 %v1110, %v1302
  %v1304 = vpop.f32.mrb[0].mxu0
  %v1305 = vadd.f32 %v1112, %v1304
  %v1306 = vpop.f32.mrb[0].mxu0
  %v1307 = vadd.f32 %v1114, %v1306
  %1308 = vmatprep.mubr.bf16.mxu0 %v188
  %1309 = vmatmul.mubr.bf16.gmra.mrb[0].mxu0 %v187
  %v1310 = vpop.f32.mrb[0].mxu0
  %v1311 = vadd.f32 %v1118, %v1310
  %v1312 = vpop.f32.mrb[0].mxu0
  %v1313 = vadd.f32 %v1120, %v1312
  %v1314 = vpop.f32.mrb[0].mxu0
  %v1315 = vadd.f32 %v1122, %v1314
  %v1316 = vpop.f32.mrb[0].mxu0
  %v1317 = vadd.f32 %v1124, %v1316
  %1318 = vmatprep.mubr.bf16.mxu0 %v192
  %1319 = vmatmul.mubr.bf16.gmra.mrb[0].mxu0 %v191
  %v1320 = vpop.f32.mrb[0].mxu0
  %v1321 = vadd.f32 %v1128, %v1320
  %v1322 = vpop.f32.mrb[0].mxu0
  %v1323 = vadd.f32 %v1130, %v1322
  %v1324 = vpop.f32.mrb[0].mxu0
  %v1325 = vadd.f32 %v1132, %v1324
  %v1326 = vpop.f32.mrb[0].mxu0
  %v1327 = vadd.f32 %v1134, %v1326
  %1328 = vmatprep.mubr.bf16.mxu0 %v196
  %1329 = vmatmul.mubr.bf16.gmra.mrb[0].mxu0 %v195
  %v1330 = vpop.f32.mrb[0].mxu0
  %v1331 = vadd.f32 %v1138, %v1330
  %v1332 = vpop.f32.mrb[0].mxu0
  %v1333 = vadd.f32 %v1140, %v1332
  %v1334 = vpop.f32.mrb[0].mxu0
  %v1335 = vadd.f32 %v1142, %v1334
  %v1336 = vpop.f32.mrb[0].mxu0
  %v1337 = vadd.f32 %v1144, %v1336
  %1338 = vmatprep.mubr.bf16.mxu0 %v200
  %1339 = vmatmul.mubr.bf16.gmra.mrb[0].mxu0 %v199
  %v1340 = vpop.f32.mrb[0].mxu0
  %v1341 = vadd.f32 %v1148, %v1340
  %v1342 = vpop.f32.mrb[0].mxu0
  %v1343 = vadd.f32 %v1150, %v1342
  %v1344 = vpop.f32.mrb[0].mxu0
  %v1345 = vadd.f32 %v1152, %v1344
  %v1346 = vpop.f32.mrb[0].mxu0
  %v1347 = vadd.f32 %v1154, %v1346
  %1348 = vmatprep.mubr.bf16.mxu0 %v204
  %1349 = vmatmul.mubr.bf16.gmra.mrb[0].mxu0 %v203
  %v1350 = vpop.f32.mrb[0].mxu0
  %v1351 = vadd.f32 %v1158, %v1350
  %v1352 = vpop.f32.mrb[0].mxu0
  %v1353 = vadd.f32 %v1160, %v1352
  %v1354 = vpop.f32.mrb[0].mxu0
  %v1355 = vadd.f32 %v1162, %v1354
  %v1356 = vpop.f32.mrb[0].mxu0
  %v1357 = vadd.f32 %v1164, %v1356
  %1358 = vdwg.mxu0
  %1359 = vmatprep.subr.bf16.mxu0 %v720
  %1360 = vmatpush1.bf16.msra.mxu0 %v719
  %1361 = vmatprep.subr.bf16.mxu0 %v724
  %1362 = vmatpush1.bf16.msra.mxu0 %v723
  %1363 = vmatprep.subr.bf16.mxu0 %v728
  %1364 = vmatpush1.bf16.msra.mxu0 %v727
  %1365 = vmatprep.subr.bf16.mxu0 %v732
  %1366 = vmatpush1.bf16.msra.mxu0 %v731
  %1367 = vmatprep.subr.bf16.mxu0 %v736
  %1368 = vmatpush1.bf16.msra.mxu0 %v735
  %1369 = vmatprep.subr.bf16.mxu0 %v740
  %1370 = vmatpush1.bf16.msra.mxu0 %v739
  %1371 = vmatprep.subr.bf16.mxu0 %v744
  %1372 = vmatpush1.bf16.msra.mxu0 %v743
  %1373 = vmatprep.subr.bf16.mxu0 %v748
  %1374 = vmatpush1.bf16.msra.mxu0 %v747
  %1375 = vmatprep.subr.bf16.mxu0 %v752
  %1376 = vmatpush1.bf16.msra.mxu0 %v751
  %1377 = vmatprep.subr.bf16.mxu0 %v756
  %1378 = vmatpush1.bf16.msra.mxu0 %v755
  %1379 = vmatprep.subr.bf16.mxu0 %v760
  %1380 = vmatpush1.bf16.msra.mxu0 %v759
  %1381 = vmatprep.subr.bf16.mxu0 %v764
  %1382 = vmatpush1.bf16.msra.mxu0 %v763
  %1383 = vmatprep.subr.bf16.mxu0 %v768
  %1384 = vmatpush1.bf16.msra.mxu0 %v767
  %1385 = vmatprep.subr.bf16.mxu0 %v772
  %1386 = vmatpush1.bf16.msra.mxu0 %v771
  %1387 = vmatprep.subr.bf16.mxu0 %v776
  %1388 = vmatpush1.bf16.msra.mxu0 %v775
  %1389 = vmatprep.subr.bf16.mxu0 %v780
  %1390 = vmatpush1.bf16.msra.mxu0 %v779
  %1391 = vmatprep.mubr.bf16.mxu0 %v142
  %1392 = vmatmul.mubr.bf16.gmra.mrb[0].mxu0 %v141
  %v1393 = vpop.f32.mrb[0].mxu0
  %v1394 = vadd.f32 0.0, %v1393
  %v1395 = vpop.f32.mrb[0].mxu0
  %v1396 = vadd.f32 0.0, %v1395
  %v1397 = vpop.f32.mrb[0].mxu0
  %v1398 = vadd.f32 0.0, %v1397
  %v1399 = vpop.f32.mrb[0].mxu0
  %v1400 = vadd.f32 0.0, %v1399
  %1401 = vmatprep.mubr.bf16.mxu0 %v146
  %1402 = vmatmul.mubr.bf16.gmra.mrb[0].mxu0 %v145
  %v1403 = vpop.f32.mrb[0].mxu0
  %v1404 = vadd.f32 0.0, %v1403
  %v1405 = vpop.f32.mrb[0].mxu0
  %v1406 = vadd.f32 0.0, %v1405
  %v1407 = vpop.f32.mrb[0].mxu0
  %v1408 = vadd.f32 0.0, %v1407
  %v1409 = vpop.f32.mrb[0].mxu0
  %v1410 = vadd.f32 0.0, %v1409
  %1411 = vmatprep.mubr.bf16.mxu0 %v150
  %1412 = vmatmul.mubr.bf16.gmra.mrb[0].mxu0 %v149
  %v1413 = vpop.f32.mrb[0].mxu0
  %v1414 = vadd.f32 0.0, %v1413
  %v1415 = vpop.f32.mrb[0].mxu0
  %v1416 = vadd.f32 0.0, %v1415
  %v1417 = vpop.f32.mrb[0].mxu0
  %v1418 = vadd.f32 0.0, %v1417
  %v1419 = vpop.f32.mrb[0].mxu0
  %v1420 = vadd.f32 0.0, %v1419
  %1421 = vmatprep.mubr.bf16.mxu0 %v154
  %1422 = vmatmul.mubr.bf16.gmra.mrb[0].mxu0 %v153
  %v1423 = vpop.f32.mrb[0].mxu0
  %v1424 = vadd.f32 0.0, %v1423
  %v1425 = vpop.f32.mrb[0].mxu0
  %v1426 = vadd.f32 0.0, %v1425
  %v1427 = vpop.f32.mrb[0].mxu0
  %v1428 = vadd.f32 0.0, %v1427
  %v1429 = vpop.f32.mrb[0].mxu0
  %v1430 = vadd.f32 0.0, %v1429
  %1431 = vmatprep.mubr.bf16.mxu0 %v158
  %1432 = vmatmul.mubr.bf16.gmra.mrb[0].mxu0 %v157
  %v1433 = vpop.f32.mrb[0].mxu0
  %v1434 = vadd.f32 0.0, %v1433
  %v1435 = vpop.f32.mrb[0].mxu0
  %v1436 = vadd.f32 0.0, %v1435
  %v1437 = vpop.f32.mrb[0].mxu0
  %v1438 = vadd.f32 0.0, %v1437
  %v1439 = vpop.f32.mrb[0].mxu0
  %v1440 = vadd.f32 0.0, %v1439
  %1441 = vmatprep.mubr.bf16.mxu0 %v162
  %1442 = vmatmul.mubr.bf16.gmra.mrb[0].mxu0 %v161
  %v1443 = vpop.f32.mrb[0].mxu0
  %v1444 = vadd.f32 0.0, %v1443
  %v1445 = vpop.f32.mrb[0].mxu0
  %v1446 = vadd.f32 0.0, %v1445
  %v1447 = vpop.f32.mrb[0].mxu0
  %v1448 = vadd.f32 0.0, %v1447
  %v1449 = vpop.f32.mrb[0].mxu0
  %v1450 = vadd.f32 0.0, %v1449
  %1451 = vmatprep.mubr.bf16.mxu0 %v166
  %1452 = vmatmul.mubr.bf16.gmra.mrb[0].mxu0 %v165
  %v1453 = vpop.f32.mrb[0].mxu0
  %v1454 = vadd.f32 0.0, %v1453
  %v1455 = vpop.f32.mrb[0].mxu0
  %v1456 = vadd.f32 0.0, %v1455
  %v1457 = vpop.f32.mrb[0].mxu0
  %v1458 = vadd.f32 0.0, %v1457
  %v1459 = vpop.f32.mrb[0].mxu0
  %v1460 = vadd.f32 0.0, %v1459
  %1461 = vmatprep.mubr.bf16.mxu0 %v170
  %1462 = vmatmul.mubr.bf16.gmra.mrb[0].mxu0 %v169
  %v1463 = vpop.f32.mrb[0].mxu0
  %v1464 = vadd.f32 0.0, %v1463
  %v1465 = vpop.f32.mrb[0].mxu0
  %v1466 = vadd.f32 0.0, %v1465
  %v1467 = vpop.f32.mrb[0].mxu0
  %v1468 = vadd.f32 0.0, %v1467
  %v1469 = vpop.f32.mrb[0].mxu0
  %v1470 = vadd.f32 0.0, %v1469
  %1471 = vmatprep.mubr.bf16.mxu0 %v174
  %1472 = vmatmul.mubr.bf16.gmra.mrb[0].mxu0 %v173
  %v1473 = vpop.f32.mrb[0].mxu0
  %v1474 = vadd.f32 0.0, %v1473
  %v1475 = vpop.f32.mrb[0].mxu0
  %v1476 = vadd.f32 0.0, %v1475
  %v1477 = vpop.f32.mrb[0].mxu0
  %v1478 = vadd.f32 0.0, %v1477
  %v1479 = vpop.f32.mrb[0].mxu0
  %v1480 = vadd.f32 0.0, %v1479
  %1481 = vmatprep.mubr.bf16.mxu0 %v178
  %1482 = vmatmul.mubr.bf16.gmra.mrb[0].mxu0 %v177
  %v1483 = vpop.f32.mrb[0].mxu0
  %v1484 = vadd.f32 0.0, %v1483
  %v1485 = vpop.f32.mrb[0].mxu0
  %v1486 = vadd.f32 0.0, %v1485
  %v1487 = vpop.f32.mrb[0].mxu0
  %v1488 = vadd.f32 0.0, %v1487
  %v1489 = vpop.f32.mrb[0].mxu0
  %v1490 = vadd.f32 0.0, %v1489
  %1491 = vmatprep.mubr.bf16.mxu0 %v182
  %1492 = vmatmul.mubr.bf16.gmra.mrb[0].mxu0 %v181
  %v1493 = vpop.f32.mrb[0].mxu0
  %v1494 = vadd.f32 0.0, %v1493
  %v1495 = vpop.f32.mrb[0].mxu0
  %v1496 = vadd.f32 0.0, %v1495
  %v1497 = vpop.f32.mrb[0].mxu0
  %v1498 = vadd.f32 0.0, %v1497
  %v1499 = vpop.f32.mrb[0].mxu0
  %v1500 = vadd.f32 0.0, %v1499
  %1501 = vmatprep.mubr.bf16.mxu0 %v186
  %1502 = vmatmul.mubr.bf16.gmra.mrb[0].mxu0 %v185
  %v1503 = vpop.f32.mrb[0].mxu0
  %v1504 = vadd.f32 0.0, %v1503
  %v1505 = vpop.f32.mrb[0].mxu0
  %v1506 = vadd.f32 0.0, %v1505
  %v1507 = vpop.f32.mrb[0].mxu0
  %v1508 = vadd.f32 0.0, %v1507
  %v1509 = vpop.f32.mrb[0].mxu0
  %v1510 = vadd.f32 0.0, %v1509
  %1511 = vmatprep.mubr.bf16.mxu0 %v190
  %1512 = vmatmul.mubr.bf16.gmra.mrb[0].mxu0 %v189
  %v1513 = vpop.f32.mrb[0].mxu0
  %v1514 = vadd.f32 0.0, %v1513
  %v1515 = vpop.f32.mrb[0].mxu0
  %v1516 = vadd.f32 0.0, %v1515
  %v1517 = vpop.f32.mrb[0].mxu0
  %v1518 = vadd.f32 0.0, %v1517
  %v1519 = vpop.f32.mrb[0].mxu0
  %v1520 = vadd.f32 0.0, %v1519
  %1521 = vmatprep.mubr.bf16.mxu0 %v194
  %1522 = vmatmul.mubr.bf16.gmra.mrb[0].mxu0 %v193
  %v1523 = vpop.f32.mrb[0].mxu0
  %v1524 = vadd.f32 0.0, %v1523
  %v1525 = vpop.f32.mrb[0].mxu0
  %v1526 = vadd.f32 0.0, %v1525
  %v1527 = vpop.f32.mrb[0].mxu0
  %v1528 = vadd.f32 0.0, %v1527
  %v1529 = vpop.f32.mrb[0].mxu0
  %v1530 = vadd.f32 0.0, %v1529
  %1531 = vmatprep.mubr.bf16.mxu0 %v198
  %1532 = vmatmul.mubr.bf16.gmra.mrb[0].mxu0 %v197
  %v1533 = vpop.f32.mrb[0].mxu0
  %v1534 = vadd.f32 0.0, %v1533
  %v1535 = vpop.f32.mrb[0].mxu0
  %v1536 = vadd.f32 0.0, %v1535
  %v1537 = vpop.f32.mrb[0].mxu0
  %v1538 = vadd.f32 0.0, %v1537
  %v1539 = vpop.f32.mrb[0].mxu0
  %v1540 = vadd.f32 0.0, %v1539
  %1541 = vmatprep.mubr.bf16.mxu0 %v202
  %1542 = vmatmul.mubr.bf16.gmra.mrb[0].mxu0 %v201
  %v1543 = vpop.f32.mrb[0].mxu0
  %v1544 = vadd.f32 0.0, %v1543
  %v1545 = vpop.f32.mrb[0].mxu0
  %v1546 = vadd.f32 0.0, %v1545
  %v1547 = vpop.f32.mrb[0].mxu0
  %v1548 = vadd.f32 0.0, %v1547
  %v1549 = vpop.f32.mrb[0].mxu0
  %v1550 = vadd.f32 0.0, %v1549
  %1551 = vdwg.mxu0
  %1552 = vmatprep.subr.bf16.mxu0 %v784
  %1553 = vmatpush1.bf16.msra.mxu0 %v783
  %1554 = vmatprep.subr.bf16.mxu0 %v788
  %1555 = vmatpush1.bf16.msra.mxu0 %v787
  %1556 = vmatprep.subr.bf16.mxu0 %v792
  %1557 = vmatpush1.bf16.msra.mxu0 %v791
  %1558 = vmatprep.subr.bf16.mxu0 %v796
  %1559 = vmatpush1.bf16.msra.mxu0 %v795
  %1560 = vmatprep.subr.bf16.mxu0 %v800
  %1561 = vmatpush1.bf16.msra.mxu0 %v799
  %1562 = vmatprep.subr.bf16.mxu0 %v804
  %1563 = vmatpush1.bf16.msra.mxu0 %v803
  %1564 = vmatprep.subr.bf16.mxu0 %v808
  %1565 = vmatpush1.bf16.msra.mxu0 %v807
  %1566 = vmatprep.subr.bf16.mxu0 %v812
  %1567 = vmatpush1.bf16.msra.mxu0 %v811
  %1568 = vmatprep.subr.bf16.mxu0 %v816
  %1569 = vmatpush1.bf16.msra.mxu0 %v815
  %1570 = vmatprep.subr.bf16.mxu0 %v820
  %1571 = vmatpush1.bf16.msra.mxu0 %v819
  %1572 = vmatprep.subr.bf16.mxu0 %v824
  %1573 = vmatpush1.bf16.msra.mxu0 %v823
  %1574 = vmatprep.subr.bf16.mxu0 %v828
  %1575 = vmatpush1.bf16.msra.mxu0 %v827
  %1576 = vmatprep.subr.bf16.mxu0 %v832
  %1577 = vmatpush1.bf16.msra.mxu0 %v831
  %1578 = vmatprep.subr.bf16.mxu0 %v836
  %1579 = vmatpush1.bf16.msra.mxu0 %v835
  %1580 = vmatprep.subr.bf16.mxu0 %v840
  %1581 = vmatpush1.bf16.msra.mxu0 %v839
  %1582 = vmatprep.subr.bf16.mxu0 %v844
  %1583 = vmatpush1.bf16.msra.mxu0 %v843
  %1584 = vmatprep.mubr.bf16.mxu0 %v144
  %1585 = vmatmul.mubr.bf16.gmra.mrb[0].mxu0 %v143
  %v1586 = vpop.f32.mrb[0].mxu0
  %v1587 = vadd.f32 %v1394, %v1586
  %v1588 = vpop.f32.mrb[0].mxu0
  %v1589 = vadd.f32 %v1396, %v1588
  %v1590 = vpop.f32.mrb[0].mxu0
  %v1591 = vadd.f32 %v1398, %v1590
  %v1592 = vpop.f32.mrb[0].mxu0
  %v1593 = vadd.f32 %v1400, %v1592
  %1594 = vmatprep.mubr.bf16.mxu0 %v148
  %1595 = vmatmul.mubr.bf16.gmra.mrb[0].mxu0 %v147
  %v1596 = vpop.f32.mrb[0].mxu0
  %v1597 = vadd.f32 %v1404, %v1596
  %v1598 = vpop.f32.mrb[0].mxu0
  %v1599 = vadd.f32 %v1406, %v1598
  %v1600 = vpop.f32.mrb[0].mxu0
  %v1601 = vadd.f32 %v1408, %v1600
  %v1602 = vpop.f32.mrb[0].mxu0
  %v1603 = vadd.f32 %v1410, %v1602
  %1604 = vmatprep.mubr.bf16.mxu0 %v152
  %1605 = vmatmul.mubr.bf16.gmra.mrb[0].mxu0 %v151
  %v1606 = vpop.f32.mrb[0].mxu0
  %v1607 = vadd.f32 %v1414, %v1606
  %v1608 = vpop.f32.mrb[0].mxu0
  %v1609 = vadd.f32 %v1416, %v1608
  %v1610 = vpop.f32.mrb[0].mxu0
  %v1611 = vadd.f32 %v1418, %v1610
  %v1612 = vpop.f32.mrb[0].mxu0
  %v1613 = vadd.f32 %v1420, %v1612
  %1614 = vmatprep.mubr.bf16.mxu0 %v156
  %1615 = vmatmul.mubr.bf16.gmra.mrb[0].mxu0 %v155
  %v1616 = vpop.f32.mrb[0].mxu0
  %v1617 = vadd.f32 %v1424, %v1616
  %v1618 = vpop.f32.mrb[0].mxu0
  %v1619 = vadd.f32 %v1426, %v1618
  %v1620 = vpop.f32.mrb[0].mxu0
  %v1621 = vadd.f32 %v1428, %v1620
  %v1622 = vpop.f32.mrb[0].mxu0
  %v1623 = vadd.f32 %v1430, %v1622
  %1624 = vmatprep.mubr.bf16.mxu0 %v160
  %1625 = vmatmul.mubr.bf16.gmra.mrb[0].mxu0 %v159
  %v1626 = vpop.f32.mrb[0].mxu0
  %v1627 = vadd.f32 %v1434, %v1626
  %v1628 = vpop.f32.mrb[0].mxu0
  %v1629 = vadd.f32 %v1436, %v1628
  %v1630 = vpop.f32.mrb[0].mxu0
  %v1631 = vadd.f32 %v1438, %v1630
  %v1632 = vpop.f32.mrb[0].mxu0
  %v1633 = vadd.f32 %v1440, %v1632
  %1634 = vmatprep.mubr.bf16.mxu0 %v164
  %1635 = vmatmul.mubr.bf16.gmra.mrb[0].mxu0 %v163
  %v1636 = vpop.f32.mrb[0].mxu0
  %v1637 = vadd.f32 %v1444, %v1636
  %v1638 = vpop.f32.mrb[0].mxu0
  %v1639 = vadd.f32 %v1446, %v1638
  %v1640 = vpop.f32.mrb[0].mxu0
  %v1641 = vadd.f32 %v1448, %v1640
  %v1642 = vpop.f32.mrb[0].mxu0
  %v1643 = vadd.f32 %v1450, %v1642
  %1644 = vmatprep.mubr.bf16.mxu0 %v168
  %1645 = vmatmul.mubr.bf16.gmra.mrb[0].mxu0 %v167
  %v1646 = vpop.f32.mrb[0].mxu0
  %v1647 = vadd.f32 %v1454, %v1646
  %v1648 = vpop.f32.mrb[0].mxu0
  %v1649 = vadd.f32 %v1456, %v1648
  %v1650 = vpop.f32.mrb[0].mxu0
  %v1651 = vadd.f32 %v1458, %v1650
  %v1652 = vpop.f32.mrb[0].mxu0
  %v1653 = vadd.f32 %v1460, %v1652
  %1654 = vmatprep.mubr.bf16.mxu0 %v172
  %1655 = vmatmul.mubr.bf16.gmra.mrb[0].mxu0 %v171
  %v1656 = vpop.f32.mrb[0].mxu0
  %v1657 = vadd.f32 %v1464, %v1656
  %v1658 = vpop.f32.mrb[0].mxu0
  %v1659 = vadd.f32 %v1466, %v1658
  %v1660 = vpop.f32.mrb[0].mxu0
  %v1661 = vadd.f32 %v1468, %v1660
  %v1662 = vpop.f32.mrb[0].mxu0
  %v1663 = vadd.f32 %v1470, %v1662
  %1664 = vmatprep.mubr.bf16.mxu0 %v176
  %1665 = vmatmul.mubr.bf16.gmra.mrb[0].mxu0 %v175
  %v1666 = vpop.f32.mrb[0].mxu0
  %v1667 = vadd.f32 %v1474, %v1666
  %v1668 = vpop.f32.mrb[0].mxu0
  %v1669 = vadd.f32 %v1476, %v1668
  %v1670 = vpop.f32.mrb[0].mxu0
  %v1671 = vadd.f32 %v1478, %v1670
  %v1672 = vpop.f32.mrb[0].mxu0
  %v1673 = vadd.f32 %v1480, %v1672
  %1674 = vmatprep.mubr.bf16.mxu0 %v180
  %1675 = vmatmul.mubr.bf16.gmra.mrb[0].mxu0 %v179
  %v1676 = vpop.f32.mrb[0].mxu0
  %v1677 = vadd.f32 %v1484, %v1676
  %v1678 = vpop.f32.mrb[0].mxu0
  %v1679 = vadd.f32 %v1486, %v1678
  %v1680 = vpop.f32.mrb[0].mxu0
  %v1681 = vadd.f32 %v1488, %v1680
  %v1682 = vpop.f32.mrb[0].mxu0
  %v1683 = vadd.f32 %v1490, %v1682
  %1684 = vmatprep.mubr.bf16.mxu0 %v184
  %1685 = vmatmul.mubr.bf16.gmra.mrb[0].mxu0 %v183
  %v1686 = vpop.f32.mrb[0].mxu0
  %v1687 = vadd.f32 %v1494, %v1686
  %v1688 = vpop.f32.mrb[0].mxu0
  %v1689 = vadd.f32 %v1496, %v1688
  %v1690 = vpop.f32.mrb[0].mxu0
  %v1691 = vadd.f32 %v1498, %v1690
  %v1692 = vpop.f32.mrb[0].mxu0
  %v1693 = vadd.f32 %v1500, %v1692
  %1694 = vmatprep.mubr.bf16.mxu0 %v188
  %1695 = vmatmul.mubr.bf16.gmra.mrb[0].mxu0 %v187
  %v1696 = vpop.f32.mrb[0].mxu0
  %v1697 = vadd.f32 %v1504, %v1696
  %v1698 = vpop.f32.mrb[0].mxu0
  %v1699 = vadd.f32 %v1506, %v1698
  %v1700 = vpop.f32.mrb[0].mxu0
  %v1701 = vadd.f32 %v1508, %v1700
  %v1702 = vpop.f32.mrb[0].mxu0
  %v1703 = vadd.f32 %v1510, %v1702
  %1704 = vmatprep.mubr.bf16.mxu0 %v192
  %1705 = vmatmul.mubr.bf16.gmra.mrb[0].mxu0 %v191
  %v1706 = vpop.f32.mrb[0].mxu0
  %v1707 = vadd.f32 %v1514, %v1706
  %v1708 = vpop.f32.mrb[0].mxu0
  %v1709 = vadd.f32 %v1516, %v1708
  %v1710 = vpop.f32.mrb[0].mxu0
  %v1711 = vadd.f32 %v1518, %v1710
  %v1712 = vpop.f32.mrb[0].mxu0
  %v1713 = vadd.f32 %v1520, %v1712
  %1714 = vmatprep.mubr.bf16.mxu0 %v196
  %1715 = vmatmul.mubr.bf16.gmra.mrb[0].mxu0 %v195
  %v1716 = vpop.f32.mrb[0].mxu0
  %v1717 = vadd.f32 %v1524, %v1716
  %v1718 = vpop.f32.mrb[0].mxu0
  %v1719 = vadd.f32 %v1526, %v1718
  %v1720 = vpop.f32.mrb[0].mxu0
  %v1721 = vadd.f32 %v1528, %v1720
  %v1722 = vpop.f32.mrb[0].mxu0
  %v1723 = vadd.f32 %v1530, %v1722
  %1724 = vmatprep.mubr.bf16.mxu0 %v200
  %1725 = vmatmul.mubr.bf16.gmra.mrb[0].mxu0 %v199
  %v1726 = vpop.f32.mrb[0].mxu0
  %v1727 = vadd.f32 %v1534, %v1726
  %v1728 = vpop.f32.mrb[0].mxu0
  %v1729 = vadd.f32 %v1536, %v1728
  %v1730 = vpop.f32.mrb[0].mxu0
  %v1731 = vadd.f32 %v1538, %v1730
  %v1732 = vpop.f32.mrb[0].mxu0
  %v1733 = vadd.f32 %v1540, %v1732
  %1734 = vmatprep.mubr.bf16.mxu0 %v204
  %1735 = vmatmul.mubr.bf16.gmra.mrb[0].mxu0 %v203
  %v1736 = vpop.f32.mrb[0].mxu0
  %v1737 = vadd.f32 %v1544, %v1736
  %v1738 = vpop.f32.mrb[0].mxu0
  %v1739 = vadd.f32 %v1546, %v1738
  %v1740 = vpop.f32.mrb[0].mxu0
  %v1741 = vadd.f32 %v1548, %v1740
  %v1742 = vpop.f32.mrb[0].mxu0
  %v1743 = vadd.f32 %v1550, %v1742
  %1744 = vdwg.mxu0
  %v1745 = vadd.f32 %v1201, %v1205
  %v1746 = vadd.f32 %v1745, %v1211
  %v1747 = vadd.f32 %v1746, %v1215
  %v1748 = vadd.f32 %v1747, %v1221
  %v1749 = vadd.f32 %v1748, %v1225
  %v1750 = vadd.f32 %v1749, %v1231
  %v1751 = vadd.f32 %v1750, %v1235
  %v1752 = vadd.f32 %v1751, %v1241
  %v1753 = vadd.f32 %v1752, %v1245
  %v1754 = vadd.f32 %v1753, %v1251
  %v1755 = vadd.f32 %v1754, %v1255
  %v1756 = vadd.f32 %v1755, %v1261
  %v1757 = vadd.f32 %v1756, %v1265
  %v1758 = vadd.f32 %v1757, %v1271
  %v1759 = vadd.f32 %v1758, %v1275
  %v1760 = vadd.f32 %v1759, %v1281
  %v1761 = vadd.f32 %v1760, %v1285
  %v1762 = vadd.f32 %v1761, %v1291
  %v1763 = vadd.f32 %v1762, %v1295
  %v1764 = vadd.f32 %v1763, %v1301
  %v1765 = vadd.f32 %v1764, %v1305
  %v1766 = vadd.f32 %v1765, %v1311
  %v1767 = vadd.f32 %v1766, %v1315
  %v1768 = vadd.f32 %v1767, %v1321
  %v1769 = vadd.f32 %v1768, %v1325
  %v1770 = vadd.f32 %v1769, %v1331
  %v1771 = vadd.f32 %v1770, %v1335
  %v1772 = vadd.f32 %v1771, %v1341
  %v1773 = vadd.f32 %v1772, %v1345
  %v1774 = vadd.f32 %v1773, %v1351
  %v1775 = vadd.f32 %v1774, %v1355
  %v1776 = vrot.slane %v1775, 4
  %v1777 = vadd.f32 %v1775, %v1776
  %v1778 = vrot.slane %v1777, 2
  %v1779 = vadd.f32 %v1777, %v1778
  %v1780 = vrot.slane %v1779, 1
  %v1781 = vadd.f32 %v1779, %v1780
  %v1782 = vadd.f32 %v1203, %v1207
  %v1783 = vadd.f32 %v1782, %v1213
  %v1784 = vadd.f32 %v1783, %v1217
  %v1785 = vadd.f32 %v1784, %v1223
  %v1786 = vadd.f32 %v1785, %v1227
  %v1787 = vadd.f32 %v1786, %v1233
  %v1788 = vadd.f32 %v1787, %v1237
  %v1789 = vadd.f32 %v1788, %v1243
  %v1790 = vadd.f32 %v1789, %v1247
  %v1791 = vadd.f32 %v1790, %v1253
  %v1792 = vadd.f32 %v1791, %v1257
  %v1793 = vadd.f32 %v1792, %v1263
  %v1794 = vadd.f32 %v1793, %v1267
  %v1795 = vadd.f32 %v1794, %v1273
  %v1796 = vadd.f32 %v1795, %v1277
  %v1797 = vadd.f32 %v1796, %v1283
  %v1798 = vadd.f32 %v1797, %v1287
  %v1799 = vadd.f32 %v1798, %v1293
  %v1800 = vadd.f32 %v1799, %v1297
  %v1801 = vadd.f32 %v1800, %v1303
  %v1802 = vadd.f32 %v1801, %v1307
  %v1803 = vadd.f32 %v1802, %v1313
  %v1804 = vadd.f32 %v1803, %v1317
  %v1805 = vadd.f32 %v1804, %v1323
  %v1806 = vadd.f32 %v1805, %v1327
  %v1807 = vadd.f32 %v1806, %v1333
  %v1808 = vadd.f32 %v1807, %v1337
  %v1809 = vadd.f32 %v1808, %v1343
  %v1810 = vadd.f32 %v1809, %v1347
  %v1811 = vadd.f32 %v1810, %v1353
  %v1812 = vadd.f32 %v1811, %v1357
  %v1813 = vrot.slane %v1812, 4
  %v1814 = vadd.f32 %v1812, %v1813
  %v1815 = vrot.slane %v1814, 2
  %v1816 = vadd.f32 %v1814, %v1815
  %v1817 = vrot.slane %v1816, 1
  %v1818 = vadd.f32 %v1816, %v1817
  %v1819 = vadd.f32 %v1587, %v1591
  %v1820 = vadd.f32 %v1819, %v1597
  %v1821 = vadd.f32 %v1820, %v1601
  %v1822 = vadd.f32 %v1821, %v1607
  %v1823 = vadd.f32 %v1822, %v1611
  %v1824 = vadd.f32 %v1823, %v1617
  %v1825 = vadd.f32 %v1824, %v1621
  %v1826 = vadd.f32 %v1825, %v1627
  %v1827 = vadd.f32 %v1826, %v1631
  %v1828 = vadd.f32 %v1827, %v1637
  %v1829 = vadd.f32 %v1828, %v1641
  %v1830 = vadd.f32 %v1829, %v1647
  %v1831 = vadd.f32 %v1830, %v1651
  %v1832 = vadd.f32 %v1831, %v1657
  %v1833 = vadd.f32 %v1832, %v1661
  %v1834 = vadd.f32 %v1833, %v1667
  %v1835 = vadd.f32 %v1834, %v1671
  %v1836 = vadd.f32 %v1835, %v1677
  %v1837 = vadd.f32 %v1836, %v1681
  %v1838 = vadd.f32 %v1837, %v1687
  %v1839 = vadd.f32 %v1838, %v1691
  %v1840 = vadd.f32 %v1839, %v1697
  %v1841 = vadd.f32 %v1840, %v1701
  %v1842 = vadd.f32 %v1841, %v1707
  %v1843 = vadd.f32 %v1842, %v1711
  %v1844 = vadd.f32 %v1843, %v1717
  %v1845 = vadd.f32 %v1844, %v1721
  %v1846 = vadd.f32 %v1845, %v1727
  %v1847 = vadd.f32 %v1846, %v1731
  %v1848 = vadd.f32 %v1847, %v1737
  %v1849 = vadd.f32 %v1848, %v1741
  %v1850 = vrot.slane %v1849, 4
  %v1851 = vadd.f32 %v1849, %v1850
  %v1852 = vrot.slane %v1851, 2
  %v1853 = vadd.f32 %v1851, %v1852
  %v1854 = vrot.slane %v1853, 1
  %v1855 = vadd.f32 %v1853, %v1854
  %v1856 = vadd.f32 %v1589, %v1593
  %v1857 = vadd.f32 %v1856, %v1599
  %v1858 = vadd.f32 %v1857, %v1603
  %v1859 = vadd.f32 %v1858, %v1609
  %v1860 = vadd.f32 %v1859, %v1613
  %v1861 = vadd.f32 %v1860, %v1619
  %v1862 = vadd.f32 %v1861, %v1623
  %v1863 = vadd.f32 %v1862, %v1629
  %v1864 = vadd.f32 %v1863, %v1633
  %v1865 = vadd.f32 %v1864, %v1639
  %v1866 = vadd.f32 %v1865, %v1643
  %v1867 = vadd.f32 %v1866, %v1649
  %v1868 = vadd.f32 %v1867, %v1653
  %v1869 = vadd.f32 %v1868, %v1659
  %v1870 = vadd.f32 %v1869, %v1663
  %v1871 = vadd.f32 %v1870, %v1669
  %v1872 = vadd.f32 %v1871, %v1673
  %v1873 = vadd.f32 %v1872, %v1679
  %v1874 = vadd.f32 %v1873, %v1683
  %v1875 = vadd.f32 %v1874, %v1689
  %v1876 = vadd.f32 %v1875, %v1693
  %v1877 = vadd.f32 %v1876, %v1699
  %v1878 = vadd.f32 %v1877, %v1703
  %v1879 = vadd.f32 %v1878, %v1709
  %v1880 = vadd.f32 %v1879, %v1713
  %v1881 = vadd.f32 %v1880, %v1719
  %v1882 = vadd.f32 %v1881, %v1723
  %v1883 = vadd.f32 %v1882, %v1729
  %v1884 = vadd.f32 %v1883, %v1733
  %v1885 = vadd.f32 %v1884, %v1739
  %v1886 = vadd.f32 %v1885, %v1743
  %v1887 = vrot.slane %v1886, 4
  %v1888 = vadd.f32 %v1886, %v1887
  %v1889 = vrot.slane %v1888, 2
  %v1890 = vadd.f32 %v1888, %v1889
  %v1891 = vrot.slane %v1890, 1
  %v1892 = vadd.f32 %v1890, %v1891
  %v1897 = vcombine.low %v1781, %v1818
  %v1898 = vcombine.low %v1855, %v1892
  %v1900 = vunpack.c.l.s4 1966171168
  %v1901 = vunpack.c.0.s8 %v1900
  %v1902 = vlaneseq
  %v1903 = vshrl.u32 %v1902, 7
  %v1904 = vsub.s32 %v1901, %v1903
  %v1905 = vrot.slane %v1897, %v1904
  %v1907 = vunpack.c.l.s4 1966171168
  %v1908 = vunpack.c.0.s8 %v1907
  %v1909 = vlaneseq
  %v1910 = vshrl.u32 %v1909, 7
  %v1911 = vsub.s32 %v1908, %v1910
  %v1912 = vrot.slane %v1898, %v1911
  %v1913 = vcombine.low %v1905, %v1912
  %v1915 = vunpack.c.l.s4 1966171168
  %v1916 = vunpack.c.0.s8 %v1915
  %v1917 = vlaneseq
  %v1918 = vshrl.u32 %v1917, 7
  %v1919 = vsub.s32 %v1916, %v1918
  %v1920 = vrot.slane %v1913, %v1919
  %v1922 = vlaneseq
  %vm1923 = vcmp.ge.s32.totalorder %v1922, 0
  %vm1924 = vcmp.lt.s32.totalorder %v1922, 512
  %vm1925 = vmand %vm1923, %vm1924
  %1926 = vst.msk [vmem:[%s2] sm:$0xf] %vm1925, %v1920
  %v1927 = vmul.f32 %v1201, %v1201
  %v1928 = vmul.f32 %v1203, %v1203
  %v1929 = vmul.f32 %v1587, %v1587
  %v1930 = vmul.f32 %v1589, %v1589
  %v1931 = vmul.f32 %v1205, %v1205
  %v1932 = vmul.f32 %v1207, %v1207
  %v1933 = vmul.f32 %v1591, %v1591
  %v1934 = vmul.f32 %v1593, %v1593
  %v1935 = vmul.f32 %v1211, %v1211
  %v1936 = vmul.f32 %v1213, %v1213
  %v1937 = vmul.f32 %v1597, %v1597
  %v1938 = vmul.f32 %v1599, %v1599
  %v1939 = vmul.f32 %v1215, %v1215
  %v1940 = vmul.f32 %v1217, %v1217
  %v1941 = vmul.f32 %v1601, %v1601
  %v1942 = vmul.f32 %v1603, %v1603
  %v1943 = vmul.f32 %v1221, %v1221
  %v1944 = vmul.f32 %v1223, %v1223
  %v1945 = vmul.f32 %v1607, %v1607
  %v1946 = vmul.f32 %v1609, %v1609
  %v1947 = vmul.f32 %v1225, %v1225
  %v1948 = vmul.f32 %v1227, %v1227
  %v1949 = vmul.f32 %v1611, %v1611
  %v1950 = vmul.f32 %v1613, %v1613
  %v1951 = vmul.f32 %v1231, %v1231
  %v1952 = vmul.f32 %v1233, %v1233
  %v1953 = vmul.f32 %v1617, %v1617
  %v1954 = vmul.f32 %v1619, %v1619
  %v1955 = vmul.f32 %v1235, %v1235
  %v1956 = vmul.f32 %v1237, %v1237
  %v1957 = vmul.f32 %v1621, %v1621
  %v1958 = vmul.f32 %v1623, %v1623
  %v1959 = vmul.f32 %v1241, %v1241
  %v1960 = vmul.f32 %v1243, %v1243
  %v1961 = vmul.f32 %v1627, %v1627
  %v1962 = vmul.f32 %v1629, %v1629
  %v1963 = vmul.f32 %v1245, %v1245
  %v1964 = vmul.f32 %v1247, %v1247
  %v1965 = vmul.f32 %v1631, %v1631
  %v1966 = vmul.f32 %v1633, %v1633
  %v1967 = vmul.f32 %v1251, %v1251
  %v1968 = vmul.f32 %v1253, %v1253
  %v1969 = vmul.f32 %v1637, %v1637
  %v1970 = vmul.f32 %v1639, %v1639
  %v1971 = vmul.f32 %v1255, %v1255
  %v1972 = vmul.f32 %v1257, %v1257
  %v1973 = vmul.f32 %v1641, %v1641
  %v1974 = vmul.f32 %v1643, %v1643
  %v1975 = vmul.f32 %v1261, %v1261
  %v1976 = vmul.f32 %v1263, %v1263
  %v1977 = vmul.f32 %v1647, %v1647
  %v1978 = vmul.f32 %v1649, %v1649
  %v1979 = vmul.f32 %v1265, %v1265
  %v1980 = vmul.f32 %v1267, %v1267
  %v1981 = vmul.f32 %v1651, %v1651
  %v1982 = vmul.f32 %v1653, %v1653
  %v1983 = vmul.f32 %v1271, %v1271
  %v1984 = vmul.f32 %v1273, %v1273
  %v1985 = vmul.f32 %v1657, %v1657
  %v1986 = vmul.f32 %v1659, %v1659
  %v1987 = vmul.f32 %v1275, %v1275
  %v1988 = vmul.f32 %v1277, %v1277
  %v1989 = vmul.f32 %v1661, %v1661
  %v1990 = vmul.f32 %v1663, %v1663
  %v1991 = vmul.f32 %v1281, %v1281
  %v1992 = vmul.f32 %v1283, %v1283
  %v1993 = vmul.f32 %v1667, %v1667
  %v1994 = vmul.f32 %v1669, %v1669
  %v1995 = vmul.f32 %v1285, %v1285
  %v1996 = vmul.f32 %v1287, %v1287
  %v1997 = vmul.f32 %v1671, %v1671
  %v1998 = vmul.f32 %v1673, %v1673
  %v1999 = vmul.f32 %v1291, %v1291
  %v2000 = vmul.f32 %v1293, %v1293
  %v2001 = vmul.f32 %v1677, %v1677
  %v2002 = vmul.f32 %v1679, %v1679
  %v2003 = vmul.f32 %v1295, %v1295
  %v2004 = vmul.f32 %v1297, %v1297
  %v2005 = vmul.f32 %v1681, %v1681
  %v2006 = vmul.f32 %v1683, %v1683
  %v2007 = vmul.f32 %v1301, %v1301
  %v2008 = vmul.f32 %v1303, %v1303
  %v2009 = vmul.f32 %v1687, %v1687
  %v2010 = vmul.f32 %v1689, %v1689
  %v2011 = vmul.f32 %v1305, %v1305
  %v2012 = vmul.f32 %v1307, %v1307
  %v2013 = vmul.f32 %v1691, %v1691
  %v2014 = vmul.f32 %v1693, %v1693
  %v2015 = vmul.f32 %v1311, %v1311
  %v2016 = vmul.f32 %v1313, %v1313
  %v2017 = vmul.f32 %v1697, %v1697
  %v2018 = vmul.f32 %v1699, %v1699
  %v2019 = vmul.f32 %v1315, %v1315
  %v2020 = vmul.f32 %v1317, %v1317
  %v2021 = vmul.f32 %v1701, %v1701
  %v2022 = vmul.f32 %v1703, %v1703
  %v2023 = vmul.f32 %v1321, %v1321
  %v2024 = vmul.f32 %v1323, %v1323
  %v2025 = vmul.f32 %v1707, %v1707
  %v2026 = vmul.f32 %v1709, %v1709
  %v2027 = vmul.f32 %v1325, %v1325
  %v2028 = vmul.f32 %v1327, %v1327
  %v2029 = vmul.f32 %v1711, %v1711
  %v2030 = vmul.f32 %v1713, %v1713
  %v2031 = vmul.f32 %v1331, %v1331
  %v2032 = vmul.f32 %v1333, %v1333
  %v2033 = vmul.f32 %v1717, %v1717
  %v2034 = vmul.f32 %v1719, %v1719
  %v2035 = vmul.f32 %v1335, %v1335
  %v2036 = vmul.f32 %v1337, %v1337
  %v2037 = vmul.f32 %v1721, %v1721
  %v2038 = vmul.f32 %v1723, %v1723
  %v2039 = vmul.f32 %v1341, %v1341
  %v2040 = vmul.f32 %v1343, %v1343
  %v2041 = vmul.f32 %v1727, %v1727
  %v2042 = vmul.f32 %v1729, %v1729
  %v2043 = vmul.f32 %v1345, %v1345
  %v2044 = vmul.f32 %v1347, %v1347
  %v2045 = vmul.f32 %v1731, %v1731
  %v2046 = vmul.f32 %v1733, %v1733
  %v2047 = vmul.f32 %v1351, %v1351
  %v2048 = vmul.f32 %v1353, %v1353
  %v2049 = vmul.f32 %v1737, %v1737
  %v2050 = vmul.f32 %v1739, %v1739
  %v2051 = vmul.f32 %v1355, %v1355
  %v2052 = vmul.f32 %v1357, %v1357
  %v2053 = vmul.f32 %v1741, %v1741
  %v2054 = vmul.f32 %v1743, %v1743
  %v2055 = vadd.f32 %v1927, %v1931
  %v2056 = vadd.f32 %v2055, %v1935
  %v2057 = vadd.f32 %v2056, %v1939
  %v2058 = vadd.f32 %v2057, %v1943
  %v2059 = vadd.f32 %v2058, %v1947
  %v2060 = vadd.f32 %v2059, %v1951
  %v2061 = vadd.f32 %v2060, %v1955
  %v2062 = vadd.f32 %v2061, %v1959
  %v2063 = vadd.f32 %v2062, %v1963
  %v2064 = vadd.f32 %v2063, %v1967
  %v2065 = vadd.f32 %v2064, %v1971
  %v2066 = vadd.f32 %v2065, %v1975
  %v2067 = vadd.f32 %v2066, %v1979
  %v2068 = vadd.f32 %v2067, %v1983
  %v2069 = vadd.f32 %v2068, %v1987
  %v2070 = vadd.f32 %v2069, %v1991
  %v2071 = vadd.f32 %v2070, %v1995
  %v2072 = vadd.f32 %v2071, %v1999
  %v2073 = vadd.f32 %v2072, %v2003
  %v2074 = vadd.f32 %v2073, %v2007
  %v2075 = vadd.f32 %v2074, %v2011
  %v2076 = vadd.f32 %v2075, %v2015
  %v2077 = vadd.f32 %v2076, %v2019
  %v2078 = vadd.f32 %v2077, %v2023
  %v2079 = vadd.f32 %v2078, %v2027
  %v2080 = vadd.f32 %v2079, %v2031
  %v2081 = vadd.f32 %v2080, %v2035
  %v2082 = vadd.f32 %v2081, %v2039
  %v2083 = vadd.f32 %v2082, %v2043
  %v2084 = vadd.f32 %v2083, %v2047
  %v2085 = vadd.f32 %v2084, %v2051
  %v2086 = vrot.slane %v2085, 4
  %v2087 = vadd.f32 %v2085, %v2086
  %v2088 = vrot.slane %v2087, 2
  %v2089 = vadd.f32 %v2087, %v2088
  %v2090 = vrot.slane %v2089, 1
  %v2091 = vadd.f32 %v2089, %v2090
  %v2092 = vadd.f32 %v1928, %v1932
  %v2093 = vadd.f32 %v2092, %v1936
  %v2094 = vadd.f32 %v2093, %v1940
  %v2095 = vadd.f32 %v2094, %v1944
  %v2096 = vadd.f32 %v2095, %v1948
  %v2097 = vadd.f32 %v2096, %v1952
  %v2098 = vadd.f32 %v2097, %v1956
  %v2099 = vadd.f32 %v2098, %v1960
  %v2100 = vadd.f32 %v2099, %v1964
  %v2101 = vadd.f32 %v2100, %v1968
  %v2102 = vadd.f32 %v2101, %v1972
  %v2103 = vadd.f32 %v2102, %v1976
  %v2104 = vadd.f32 %v2103, %v1980
  %v2105 = vadd.f32 %v2104, %v1984
  %v2106 = vadd.f32 %v2105, %v1988
  %v2107 = vadd.f32 %v2106, %v1992
  %v2108 = vadd.f32 %v2107, %v1996
  %v2109 = vadd.f32 %v2108, %v2000
  %v2110 = vadd.f32 %v2109, %v2004
  %v2111 = vadd.f32 %v2110, %v2008
  %v2112 = vadd.f32 %v2111, %v2012
  %v2113 = vadd.f32 %v2112, %v2016
  %v2114 = vadd.f32 %v2113, %v2020
  %v2115 = vadd.f32 %v2114, %v2024
  %v2116 = vadd.f32 %v2115, %v2028
  %v2117 = vadd.f32 %v2116, %v2032
  %v2118 = vadd.f32 %v2117, %v2036
  %v2119 = vadd.f32 %v2118, %v2040
  %v2120 = vadd.f32 %v2119, %v2044
  %v2121 = vadd.f32 %v2120, %v2048
  %v2122 = vadd.f32 %v2121, %v2052
  %v2123 = vrot.slane %v2122, 4
  %v2124 = vadd.f32 %v2122, %v2123
  %v2125 = vrot.slane %v2124, 2
  %v2126 = vadd.f32 %v2124, %v2125
  %v2127 = vrot.slane %v2126, 1
  %v2128 = vadd.f32 %v2126, %v2127
  %v2129 = vadd.f32 %v1929, %v1933
  %v2130 = vadd.f32 %v2129, %v1937
  %v2131 = vadd.f32 %v2130, %v1941
  %v2132 = vadd.f32 %v2131, %v1945
  %v2133 = vadd.f32 %v2132, %v1949
  %v2134 = vadd.f32 %v2133, %v1953
  %v2135 = vadd.f32 %v2134, %v1957
  %v2136 = vadd.f32 %v2135, %v1961
  %v2137 = vadd.f32 %v2136, %v1965
  %v2138 = vadd.f32 %v2137, %v1969
  %v2139 = vadd.f32 %v2138, %v1973
  %v2140 = vadd.f32 %v2139, %v1977
  %v2141 = vadd.f32 %v2140, %v1981
  %v2142 = vadd.f32 %v2141, %v1985
  %v2143 = vadd.f32 %v2142, %v1989
  %v2144 = vadd.f32 %v2143, %v1993
  %v2145 = vadd.f32 %v2144, %v1997
  %v2146 = vadd.f32 %v2145, %v2001
  %v2147 = vadd.f32 %v2146, %v2005
  %v2148 = vadd.f32 %v2147, %v2009
  %v2149 = vadd.f32 %v2148, %v2013
  %v2150 = vadd.f32 %v2149, %v2017
  %v2151 = vadd.f32 %v2150, %v2021
  %v2152 = vadd.f32 %v2151, %v2025
  %v2153 = vadd.f32 %v2152, %v2029
  %v2154 = vadd.f32 %v2153, %v2033
  %v2155 = vadd.f32 %v2154, %v2037
  %v2156 = vadd.f32 %v2155, %v2041
  %v2157 = vadd.f32 %v2156, %v2045
  %v2158 = vadd.f32 %v2157, %v2049
  %v2159 = vadd.f32 %v2158, %v2053
  %v2160 = vrot.slane %v2159, 4
  %v2161 = vadd.f32 %v2159, %v2160
  %v2162 = vrot.slane %v2161, 2
  %v2163 = vadd.f32 %v2161, %v2162
  %v2164 = vrot.slane %v2163, 1
  %v2165 = vadd.f32 %v2163, %v2164
  %v2166 = vadd.f32 %v1930, %v1934
  %v2167 = vadd.f32 %v2166, %v1938
  %v2168 = vadd.f32 %v2167, %v1942
  %v2169 = vadd.f32 %v2168, %v1946
  %v2170 = vadd.f32 %v2169, %v1950
  %v2171 = vadd.f32 %v2170, %v1954
  %v2172 = vadd.f32 %v2171, %v1958
  %v2173 = vadd.f32 %v2172, %v1962
  %v2174 = vadd.f32 %v2173, %v1966
  %v2175 = vadd.f32 %v2174, %v1970
  %v2176 = vadd.f32 %v2175, %v1974
  %v2177 = vadd.f32 %v2176, %v1978
  %v2178 = vadd.f32 %v2177, %v1982
  %v2179 = vadd.f32 %v2178, %v1986
  %v2180 = vadd.f32 %v2179, %v1990
  %v2181 = vadd.f32 %v2180, %v1994
  %v2182 = vadd.f32 %v2181, %v1998
  %v2183 = vadd.f32 %v2182, %v2002
  %v2184 = vadd.f32 %v2183, %v2006
  %v2185 = vadd.f32 %v2184, %v2010
  %v2186 = vadd.f32 %v2185, %v2014
  %v2187 = vadd.f32 %v2186, %v2018
  %v2188 = vadd.f32 %v2187, %v2022
  %v2189 = vadd.f32 %v2188, %v2026
  %v2190 = vadd.f32 %v2189, %v2030
  %v2191 = vadd.f32 %v2190, %v2034
  %v2192 = vadd.f32 %v2191, %v2038
  %v2193 = vadd.f32 %v2192, %v2042
  %v2194 = vadd.f32 %v2193, %v2046
  %v2195 = vadd.f32 %v2194, %v2050
  %v2196 = vadd.f32 %v2195, %v2054
  %v2197 = vrot.slane %v2196, 4
  %v2198 = vadd.f32 %v2196, %v2197
  %v2199 = vrot.slane %v2198, 2
  %v2200 = vadd.f32 %v2198, %v2199
  %v2201 = vrot.slane %v2200, 1
  %v2202 = vadd.f32 %v2200, %v2201
  %v2207 = vcombine.low %v2091, %v2128
  %v2208 = vcombine.low %v2165, %v2202
  %v2210 = vunpack.c.l.s4 1966171168
  %v2211 = vunpack.c.0.s8 %v2210
  %v2212 = vlaneseq
  %v2213 = vshrl.u32 %v2212, 7
  %v2214 = vsub.s32 %v2211, %v2213
  %v2215 = vrot.slane %v2207, %v2214
  %v2217 = vunpack.c.l.s4 1966171168
  %v2218 = vunpack.c.0.s8 %v2217
  %v2219 = vlaneseq
  %v2220 = vshrl.u32 %v2219, 7
  %v2221 = vsub.s32 %v2218, %v2220
  %v2222 = vrot.slane %v2208, %v2221
  %v2223 = vcombine.low %v2215, %v2222
  %v2225 = vunpack.c.l.s4 1966171168
  %v2226 = vunpack.c.0.s8 %v2225
  %v2227 = vlaneseq
  %v2228 = vshrl.u32 %v2227, 7
  %v2229 = vsub.s32 %v2226, %v2228
  %v2230 = vrot.slane %v2223, %v2229
  %2232 = vst.msk [vmem:[%s3] sm:$0xf] %vm1925, %v2230
  // Predicated region
  $region10: #{projection_forward.2} parent=0 // pred_check
    _
  $region11: #{projection_forward.2} parent=0 // pred_check_branch
    %2234 = sbr.rel (0) target = $region13
  $region12: #{projection_forward.2} parent=0 // pred_region
    _
  $region13: #{projection_forward.2} parent=0 // pred_fallthru
    _
  // Predicated region
  $region14: #{projection_forward.2} parent=0 // pred_check
    _
  $region15: #{projection_forward.2} parent=0 // pred_check_branch
    %2236 = sbr.rel (0) target = $region17
  $region16: #{projection_forward.2} parent=0 // pred_region
    _
  $region17: #{projection_forward.2} parent=0 // pred_fallthru
    _
  // Predicated region
  $region18: #{projection_forward.2} parent=0 // pred_check
    _
  $region19: #{projection_forward.2} parent=0 // pred_check_branch
    %2238 = sbr.rel (0) target = $region21
  $region20: #{projection_forward.2} parent=0 // pred_region
    _
  $region21: #{projection_forward.2} parent=0 // pred_fallthru
    _
  // Predicated region
  $region22: #{projection_forward.2} parent=0 // pred_check
    _
  $region23: #{projection_forward.2} parent=0 // pred_check_branch
    %2240 = sbr.rel (0) target = $region25
  $region24: #{projection_forward.2} parent=0 // pred_region
    _
  $region25: #{projection_forward.2} parent=0 // pred_fallthru
    _

// kernel: projection_forward.3
$region0: #{projection_forward.3}
  #allocation0 [shape = 'u32[]', space=smem, size = 0x4, offset = 0x4, fixed_abs, tag = 'smem constant byte address 0x4 - core index']
  #allocation1 [shape = 'u32[144,128]{1,0:T(1,128)}', space=vmem, size = 0x12000, scoped, tag = 'internal scratch']
  %s0 = inlined_call_operand.vmem [shape: f32[256,512], index: 0, kind: input, shape index: {}]
  %s1 = inlined_call_operand.vmem [shape: bf16[512,512], index: 1, kind: input, shape index: {}]
  %s2 = inlined_call_operand.vmem [shape: f32[1,512], index: 2, kind: input, shape index: {}]
  %s3 = inlined_call_operand.vmem [shape: f32[1,512], index: 3, kind: input, shape index: {}]
  %s4 = inlined_call_operand.vmem [shape: bf16[512,128], index: 4, kind: input, shape index: {}]
  %s5 = inlined_call_operand.hbm [shape: f32[256,128], index: 5, kind: output, shape index: {}]
  %s6 = sld [smem:[#allocation0]]
  $region30: #{projection_forward.3} parent=0
    _
  %s8 = ssub.s32 1, %s6
  %s9 = scalar_select 0, %s8, %s6
  $region1: #{projection_forward.3} parent=0
    #allocation2 [shape = 'u8[131072]{0}', space=vmem, size = 0x20000, scoped, tag = 'output window, operand 0, single buffered']
    #allocation3 [shape = 's32[1]{0}', space=sflag, size = 0x4, scoped, tag = 'scoped memory for projection_forward.3']
    %10 = vsyncpa [#allocation3], 0
    // Predicated region
    $region2: #{projection_forward.3} parent=1 // pred_check
      _
    $region3: #{projection_forward.3} parent=1 // pred_check_branch
      %12 = sbr.rel (0) target = $region5
    $region4: #{projection_forward.3} parent=1 // pred_region
      _
    $region5: #{projection_forward.3} parent=1 // pred_fallthru
      _
    // Predicated region
    $region6: #{projection_forward.3} parent=1 // pred_check
      _
    $region7: #{projection_forward.3} parent=1 // pred_check_branch
      %14 = sbr.rel (0) target = $region9
    $region8: #{projection_forward.3} parent=1 // pred_region
      _
    $region9: #{projection_forward.3} parent=1 // pred_fallthru
      _
    // Predicated region
    $region10: #{projection_forward.3} parent=1 // pred_check
      _
    $region11: #{projection_forward.3} parent=1 // pred_check_branch
      %16 = sbr.rel (0) target = $region13
    $region12: #{projection_forward.3} parent=1 // pred_region
      _
    $region13: #{projection_forward.3} parent=1 // pred_fallthru
      _
    // Predicated region
    $region14: #{projection_forward.3} parent=1 // pred_check
      _
    $region15: #{projection_forward.3} parent=1 // pred_check_branch
      %18 = sbr.rel (0) target = $region17
    $region16: #{projection_forward.3} parent=1 // pred_region
      _
    $region17: #{projection_forward.3} parent=1 // pred_fallthru
      _
    // Predicated region
    $region18: #{projection_forward.3} parent=1 // pred_check
      _
    $region19: #{projection_forward.3} parent=1 // pred_check_branch
      %20 = sbr.rel (0) target = $region21
    $region20: #{projection_forward.3} parent=1 // pred_region
      _
    $region21: #{projection_forward.3} parent=1 // pred_fallthru
      _
    %v22 = vld [vmem:[%s0] sm:$0xff]
    %v23 = vld [vmem:[%s0 + $0x8] sm:$0xff]
    %v24 = vld [vmem:[%s0 + $0x10] sm:$0xff]
    %v25 = vld [vmem:[%s0 + $0x18] sm:$0xff]
    %v26 = vld [vmem:[%s0 + $0x20] sm:$0xff]
    %v27 = vld [vmem:[%s0 + $0x28] sm:$0xff]
    %v28 = vld [vmem:[%s0 + $0x30] sm:$0xff]
    %v29 = vld [vmem:[%s0 + $0x38] sm:$0xff]
    %v30 = vld [vmem:[%s0 + $0x40] sm:$0xff]
    %v31 = vld [vmem:[%s0 + $0x48] sm:$0xff]
    %v32 = vld [vmem:[%s0 + $0x50] sm:$0xff]
    %v33 = vld [vmem:[%s0 + $0x58] sm:$0xff]
    %v34 = vld [vmem:[%s0 + $0x60] sm:$0xff]
    %v35 = vld [vmem:[%s0 + $0x68] sm:$0xff]
    %v36 = vld [vmem:[%s0 + $0x70] sm:$0xff]
    %v37 = vld [vmem:[%s0 + $0x78] sm:$0xff]
    %v38 = vld [vmem:[%s0 + $0x80] sm:$0xff]
    %v39 = vld [vmem:[%s0 + $0x88] sm:$0xff]
    %v40 = vld [vmem:[%s0 + $0x90] sm:$0xff]
    %v41 = vld [vmem:[%s0 + $0x98] sm:$0xff]
    %v42 = vld [vmem:[%s0 + $0xa0] sm:$0xff]
    %v43 = vld [vmem:[%s0 + $0xa8] sm:$0xff]
    %v44 = vld [vmem:[%s0 + $0xb0] sm:$0xff]
    %v45 = vld [vmem:[%s0 + $0xb8] sm:$0xff]
    %v46 = vld [vmem:[%s0 + $0xc0] sm:$0xff]
    %v47 = vld [vmem:[%s0 + $0xc8] sm:$0xff]
    %v48 = vld [vmem:[%s0 + $0xd0] sm:$0xff]
    %v49 = vld [vmem:[%s0 + $0xd8] sm:$0xff]
    %v50 = vld [vmem:[%s0 + $0xe0] sm:$0xff]
    %v51 = vld [vmem:[%s0 + $0xe8] sm:$0xff]
    %v52 = vld [vmem:[%s0 + $0xf0] sm:$0xff]
    %v53 = vld [vmem:[%s0 + $0xf8] sm:$0xff]
    %v54 = vld [vmem:[%s0 + $0x100] sm:$0xff]
    %v55 = vld [vmem:[%s0 + $0x108] sm:$0xff]
    %v56 = vld [vmem:[%s0 + $0x110] sm:$0xff]
    %v57 = vld [vmem:[%s0 + $0x118] sm:$0xff]
    %v58 = vld [vmem:[%s0 + $0x120] sm:$0xff]
    %v59 = vld [vmem:[%s0 + $0x128] sm:$0xff]
    %v60 = vld [vmem:[%s0 + $0x130] sm:$0xff]
    %v61 = vld [vmem:[%s0 + $0x138] sm:$0xff]
    %v62 = vld [vmem:[%s0 + $0x140] sm:$0xff]
    %v63 = vld [vmem:[%s0 + $0x148] sm:$0xff]
    %v64 = vld [vmem:[%s0 + $0x150] sm:$0xff]
    %v65 = vld [vmem:[%s0 + $0x158] sm:$0xff]
    %v66 = vld [vmem:[%s0 + $0x160] sm:$0xff]
    %v67 = vld [vmem:[%s0 + $0x168] sm:$0xff]
    %v68 = vld [vmem:[%s0 + $0x170] sm:$0xff]
    %v69 = vld [vmem:[%s0 + $0x178] sm:$0xff]
    %v70 = vld [vmem:[%s0 + $0x180] sm:$0xff]
    %v71 = vld [vmem:[%s0 + $0x188] sm:$0xff]
    %v72 = vld [vmem:[%s0 + $0x190] sm:$0xff]
    %v73 = vld [vmem:[%s0 + $0x198] sm:$0xff]
    %v74 = vld [vmem:[%s0 + $0x1a0] sm:$0xff]
    %v75 = vld [vmem:[%s0 + $0x1a8] sm:$0xff]
    %v76 = vld [vmem:[%s0 + $0x1b0] sm:$0xff]
    %v77 = vld [vmem:[%s0 + $0x1b8] sm:$0xff]
    %v78 = vld [vmem:[%s0 + $0x1c0] sm:$0xff]
    %v79 = vld [vmem:[%s0 + $0x1c8] sm:$0xff]
    %v80 = vld [vmem:[%s0 + $0x1d0] sm:$0xff]
    %v81 = vld [vmem:[%s0 + $0x1d8] sm:$0xff]
    %v82 = vld [vmem:[%s0 + $0x1e0] sm:$0xff]
    %v83 = vld [vmem:[%s0 + $0x1e8] sm:$0xff]
    %v84 = vld [vmem:[%s0 + $0x1f0] sm:$0xff]
    %v85 = vld [vmem:[%s0 + $0x1f8] sm:$0xff]
    %v86 = vld [vmem:[%s0 + $0x200] sm:$0xff]
    %v87 = vld [vmem:[%s0 + $0x208] sm:$0xff]
    %v88 = vld [vmem:[%s0 + $0x210] sm:$0xff]
    %v89 = vld [vmem:[%s0 + $0x218] sm:$0xff]
    %v90 = vld [vmem:[%s0 + $0x220] sm:$0xff]
    %v91 = vld [vmem:[%s0 + $0x228] sm:$0xff]
    %v92 = vld [vmem:[%s0 + $0x230] sm:$0xff]
    %v93 = vld [vmem:[%s0 + $0x238] sm:$0xff]
    %v94 = vld [vmem:[%s0 + $0x240] sm:$0xff]
    %v95 = vld [vmem:[%s0 + $0x248] sm:$0xff]
    %v96 = vld [vmem:[%s0 + $0x250] sm:$0xff]
    %v97 = vld [vmem:[%s0 + $0x258] sm:$0xff]
    %v98 = vld [vmem:[%s0 + $0x260] sm:$0xff]
    %v99 = vld [vmem:[%s0 + $0x268] sm:$0xff]
    %v100 = vld [vmem:[%s0 + $0x270] sm:$0xff]
    %v101 = vld [vmem:[%s0 + $0x278] sm:$0xff]
    %v102 = vld [vmem:[%s0 + $0x280] sm:$0xff]
    %v103 = vld [vmem:[%s0 + $0x288] sm:$0xff]
    %v104 = vld [vmem:[%s0 + $0x290] sm:$0xff]
    %v105 = vld [vmem:[%s0 + $0x298] sm:$0xff]
    %v106 = vld [vmem:[%s0 + $0x2a0] sm:$0xff]
    %v107 = vld [vmem:[%s0 + $0x2a8] sm:$0xff]
    %v108 = vld [vmem:[%s0 + $0x2b0] sm:$0xff]
    %v109 = vld [vmem:[%s0 + $0x2b8] sm:$0xff]
    %v110 = vld [vmem:[%s0 + $0x2c0] sm:$0xff]
    %v111 = vld [vmem:[%s0 + $0x2c8] sm:$0xff]
    %v112 = vld [vmem:[%s0 + $0x2d0] sm:$0xff]
    %v113 = vld [vmem:[%s0 + $0x2d8] sm:$0xff]
    %v114 = vld [vmem:[%s0 + $0x2e0] sm:$0xff]
    %v115 = vld [vmem:[%s0 + $0x2e8] sm:$0xff]
    %v116 = vld [vmem:[%s0 + $0x2f0] sm:$0xff]
    %v117 = vld [vmem:[%s0 + $0x2f8] sm:$0xff]
    %v118 = vld [vmem:[%s0 + $0x300] sm:$0xff]
    %v119 = vld [vmem:[%s0 + $0x308] sm:$0xff]
    %v120 = vld [vmem:[%s0 + $0x310] sm:$0xff]
    %v121 = vld [vmem:[%s0 + $0x318] sm:$0xff]
    %v122 = vld [vmem:[%s0 + $0x320] sm:$0xff]
    %v123 = vld [vmem:[%s0 + $0x328] sm:$0xff]
    %v124 = vld [vmem:[%s0 + $0x330] sm:$0xff]
    %v125 = vld [vmem:[%s0 + $0x338] sm:$0xff]
    %v126 = vld [vmem:[%s0 + $0x340] sm:$0xff]
    %v127 = vld [vmem:[%s0 + $0x348] sm:$0xff]
    %v128 = vld [vmem:[%s0 + $0x350] sm:$0xff]
    %v129 = vld [vmem:[%s0 + $0x358] sm:$0xff]
    %v130 = vld [vmem:[%s0 + $0x360] sm:$0xff]
    %v131 = vld [vmem:[%s0 + $0x368] sm:$0xff]
    %v132 = vld [vmem:[%s0 + $0x370] sm:$0xff]
    %v133 = vld [vmem:[%s0 + $0x378] sm:$0xff]
    %v134 = vld [vmem:[%s0 + $0x380] sm:$0xff]
    %v135 = vld [vmem:[%s0 + $0x388] sm:$0xff]
    %v136 = vld [vmem:[%s0 + $0x390] sm:$0xff]
    %v137 = vld [vmem:[%s0 + $0x398] sm:$0xff]
    %v138 = vld [vmem:[%s0 + $0x3a0] sm:$0xff]
    %v139 = vld [vmem:[%s0 + $0x3a8] sm:$0xff]
    %v140 = vld [vmem:[%s0 + $0x3b0] sm:$0xff]
    %v141 = vld [vmem:[%s0 + $0x3b8] sm:$0xff]
    %v142 = vld [vmem:[%s0 + $0x3c0] sm:$0xff]
    %v143 = vld [vmem:[%s0 + $0x3c8] sm:$0xff]
    %v144 = vld [vmem:[%s0 + $0x3d0] sm:$0xff]
    %v145 = vld [vmem:[%s0 + $0x3d8] sm:$0xff]
    %v146 = vld [vmem:[%s0 + $0x3e0] sm:$0xff]
    %v147 = vld [vmem:[%s0 + $0x3e8] sm:$0xff]
    %v148 = vld [vmem:[%s0 + $0x3f0] sm:$0xff]
    %v149 = vld [vmem:[%s0 + $0x3f8] sm:$0xff]
    %v150 = vpack.c.bf16 %v26, %v22
    %v151 = vpack.c.bf16 %v27, %v23
    %v152 = vpack.c.bf16 %v28, %v24
    %v153 = vpack.c.bf16 %v29, %v25
    %v154 = vpack.c.bf16 %v34, %v30
    %v155 = vpack.c.bf16 %v35, %v31
    %v156 = vpack.c.bf16 %v36, %v32
    %v157 = vpack.c.bf16 %v37, %v33
    %v158 = vpack.c.bf16 %v42, %v38
    %v159 = vpack.c.bf16 %v43, %v39
    %v160 = vpack.c.bf16 %v44, %v40
    %v161 = vpack.c.bf16 %v45, %v41
    %v162 = vpack.c.bf16 %v50, %v46
    %v163 = vpack.c.bf16 %v51, %v47
    %v164 = vpack.c.bf16 %v52, %v48
    %v165 = vpack.c.bf16 %v53, %v49
    %v166 = vpack.c.bf16 %v58, %v54
    %v167 = vpack.c.bf16 %v59, %v55
    %v168 = vpack.c.bf16 %v60, %v56
    %v169 = vpack.c.bf16 %v61, %v57
    %v170 = vpack.c.bf16 %v66, %v62
    %v171 = vpack.c.bf16 %v67, %v63
    %v172 = vpack.c.bf16 %v68, %v64
    %v173 = vpack.c.bf16 %v69, %v65
    %v174 = vpack.c.bf16 %v74, %v70
    %v175 = vpack.c.bf16 %v75, %v71
    %v176 = vpack.c.bf16 %v76, %v72
    %v177 = vpack.c.bf16 %v77, %v73
    %v178 = vpack.c.bf16 %v82, %v78
    %v179 = vpack.c.bf16 %v83, %v79
    %v180 = vpack.c.bf16 %v84, %v80
    %v181 = vpack.c.bf16 %v85, %v81
    %v182 = vpack.c.bf16 %v90, %v86
    %v183 = vpack.c.bf16 %v91, %v87
    %v184 = vpack.c.bf16 %v92, %v88
    %v185 = vpack.c.bf16 %v93, %v89
    %v186 = vpack.c.bf16 %v98, %v94
    %v187 = vpack.c.bf16 %v99, %v95
    %v188 = vpack.c.bf16 %v100, %v96
    %v189 = vpack.c.bf16 %v101, %v97
    %v190 = vpack.c.bf16 %v106, %v102
    %v191 = vpack.c.bf16 %v107, %v103
    %v192 = vpack.c.bf16 %v108, %v104
    %v193 = vpack.c.bf16 %v109, %v105
    %v194 = vpack.c.bf16 %v114, %v110
    %v195 = vpack.c.bf16 %v115, %v111
    %v196 = vpack.c.bf16 %v116, %v112
    %v197 = vpack.c.bf16 %v117, %v113
    %v198 = vpack.c.bf16 %v122, %v118
    %v199 = vpack.c.bf16 %v123, %v119
    %v200 = vpack.c.bf16 %v124, %v120
    %v201 = vpack.c.bf16 %v125, %v121
    %v202 = vpack.c.bf16 %v130, %v126
    %v203 = vpack.c.bf16 %v131, %v127
    %v204 = vpack.c.bf16 %v132, %v128
    %v205 = vpack.c.bf16 %v133, %v129
    %v206 = vpack.c.bf16 %v138, %v134
    %v207 = vpack.c.bf16 %v139, %v135
    %v208 = vpack.c.bf16 %v140, %v136
    %v209 = vpack.c.bf16 %v141, %v137
    %v210 = vpack.c.bf16 %v146, %v142
    %v211 = vpack.c.bf16 %v147, %v143
    %v212 = vpack.c.bf16 %v148, %v144
    %v213 = vpack.c.bf16 %v149, %v145
    %v214 = vld [vmem:[%s1] sm:$0xff]
    %v215 = vld [vmem:[%s1 + $0x8] sm:$0xff]
    %v216 = vld [vmem:[%s1 + $0x10] sm:$0xff]
    %v217 = vld [vmem:[%s1 + $0x18] sm:$0xff]
    %v218 = vld [vmem:[%s1 + $0x20] sm:$0xff]
    %v219 = vld [vmem:[%s1 + $0x28] sm:$0xff]
    %v220 = vld [vmem:[%s1 + $0x30] sm:$0xff]
    %v221 = vld [vmem:[%s1 + $0x38] sm:$0xff]
    %v222 = vld [vmem:[%s1 + $0x40] sm:$0xff]
    %v223 = vld [vmem:[%s1 + $0x48] sm:$0xff]
    %v224 = vld [vmem:[%s1 + $0x50] sm:$0xff]
    %v225 = vld [vmem:[%s1 + $0x58] sm:$0xff]
    %v226 = vld [vmem:[%s1 + $0x60] sm:$0xff]
    %v227 = vld [vmem:[%s1 + $0x68] sm:$0xff]
    %v228 = vld [vmem:[%s1 + $0x70] sm:$0xff]
    %v229 = vld [vmem:[%s1 + $0x78] sm:$0xff]
    %v230 = vld [vmem:[%s1 + $0x80] sm:$0xff]
    %v231 = vld [vmem:[%s1 + $0x88] sm:$0xff]
    %v232 = vld [vmem:[%s1 + $0x90] sm:$0xff]
    %v233 = vld [vmem:[%s1 + $0x98] sm:$0xff]
    %v234 = vld [vmem:[%s1 + $0xa0] sm:$0xff]
    %v235 = vld [vmem:[%s1 + $0xa8] sm:$0xff]
    %v236 = vld [vmem:[%s1 + $0xb0] sm:$0xff]
    %v237 = vld [vmem:[%s1 + $0xb8] sm:$0xff]
    %v238 = vld [vmem:[%s1 + $0xc0] sm:$0xff]
    %v239 = vld [vmem:[%s1 + $0xc8] sm:$0xff]
    %v240 = vld [vmem:[%s1 + $0xd0] sm:$0xff]
    %v241 = vld [vmem:[%s1 + $0xd8] sm:$0xff]
    %v242 = vld [vmem:[%s1 + $0xe0] sm:$0xff]
    %v243 = vld [vmem:[%s1 + $0xe8] sm:$0xff]
    %v244 = vld [vmem:[%s1 + $0xf0] sm:$0xff]
    %v245 = vld [vmem:[%s1 + $0xf8] sm:$0xff]
    %v246 = vld [vmem:[%s1 + $0x100] sm:$0xff]
    %v247 = vld [vmem:[%s1 + $0x108] sm:$0xff]
    %v248 = vld [vmem:[%s1 + $0x110] sm:$0xff]
    %v249 = vld [vmem:[%s1 + $0x118] sm:$0xff]
    %v250 = vld [vmem:[%s1 + $0x120] sm:$0xff]
    %v251 = vld [vmem:[%s1 + $0x128] sm:$0xff]
    %v252 = vld [vmem:[%s1 + $0x130] sm:$0xff]
    %v253 = vld [vmem:[%s1 + $0x138] sm:$0xff]
    %v254 = vld [vmem:[%s1 + $0x140] sm:$0xff]
    %v255 = vld [vmem:[%s1 + $0x148] sm:$0xff]
    %v256 = vld [vmem:[%s1 + $0x150] sm:$0xff]
    %v257 = vld [vmem:[%s1 + $0x158] sm:$0xff]
    %v258 = vld [vmem:[%s1 + $0x160] sm:$0xff]
    %v259 = vld [vmem:[%s1 + $0x168] sm:$0xff]
    %v260 = vld [vmem:[%s1 + $0x170] sm:$0xff]
    %v261 = vld [vmem:[%s1 + $0x178] sm:$0xff]
    %v262 = vld [vmem:[%s1 + $0x180] sm:$0xff]
    %v263 = vld [vmem:[%s1 + $0x188] sm:$0xff]
    %v264 = vld [vmem:[%s1 + $0x190] sm:$0xff]
    %v265 = vld [vmem:[%s1 + $0x198] sm:$0xff]
    %v266 = vld [vmem:[%s1 + $0x1a0] sm:$0xff]
    %v267 = vld [vmem:[%s1 + $0x1a8] sm:$0xff]
    %v268 = vld [vmem:[%s1 + $0x1b0] sm:$0xff]
    %v269 = vld [vmem:[%s1 + $0x1b8] sm:$0xff]
    %v270 = vld [vmem:[%s1 + $0x1c0] sm:$0xff]
    %v271 = vld [vmem:[%s1 + $0x1c8] sm:$0xff]
    %v272 = vld [vmem:[%s1 + $0x1d0] sm:$0xff]
    %v273 = vld [vmem:[%s1 + $0x1d8] sm:$0xff]
    %v274 = vld [vmem:[%s1 + $0x1e0] sm:$0xff]
    %v275 = vld [vmem:[%s1 + $0x1e8] sm:$0xff]
    %v276 = vld [vmem:[%s1 + $0x1f0] sm:$0xff]
    %v277 = vld [vmem:[%s1 + $0x1f8] sm:$0xff]
    %v278 = vld [vmem:[%s1 + $0x200] sm:$0xff]
    %v279 = vld [vmem:[%s1 + $0x208] sm:$0xff]
    %v280 = vld [vmem:[%s1 + $0x210] sm:$0xff]
    %v281 = vld [vmem:[%s1 + $0x218] sm:$0xff]
    %v282 = vld [vmem:[%s1 + $0x220] sm:$0xff]
    %v283 = vld [vmem:[%s1 + $0x228] sm:$0xff]
    %v284 = vld [vmem:[%s1 + $0x230] sm:$0xff]
    %v285 = vld [vmem:[%s1 + $0x238] sm:$0xff]
    %v286 = vld [vmem:[%s1 + $0x240] sm:$0xff]
    %v287 = vld [vmem:[%s1 + $0x248] sm:$0xff]
    %v288 = vld [vmem:[%s1 + $0x250] sm:$0xff]
    %v289 = vld [vmem:[%s1 + $0x258] sm:$0xff]
    %v290 = vld [vmem:[%s1 + $0x260] sm:$0xff]
    %v291 = vld [vmem:[%s1 + $0x268] sm:$0xff]
    %v292 = vld [vmem:[%s1 + $0x270] sm:$0xff]
    %v293 = vld [vmem:[%s1 + $0x278] sm:$0xff]
    %v294 = vld [vmem:[%s1 + $0x280] sm:$0xff]
    %v295 = vld [vmem:[%s1 + $0x288] sm:$0xff]
    %v296 = vld [vmem:[%s1 + $0x290] sm:$0xff]
    %v297 = vld [vmem:[%s1 + $0x298] sm:$0xff]
    %v298 = vld [vmem:[%s1 + $0x2a0] sm:$0xff]
    %v299 = vld [vmem:[%s1 + $0x2a8] sm:$0xff]
    %v300 = vld [vmem:[%s1 + $0x2b0] sm:$0xff]
    %v301 = vld [vmem:[%s1 + $0x2b8] sm:$0xff]
    %v302 = vld [vmem:[%s1 + $0x2c0] sm:$0xff]
    %v303 = vld [vmem:[%s1 + $0x2c8] sm:$0xff]
    %v304 = vld [vmem:[%s1 + $0x2d0] sm:$0xff]
    %v305 = vld [vmem:[%s1 + $0x2d8] sm:$0xff]
    %v306 = vld [vmem:[%s1 + $0x2e0] sm:$0xff]
    %v307 = vld [vmem:[%s1 + $0x2e8] sm:$0xff]
    %v308 = vld [vmem:[%s1 + $0x2f0] sm:$0xff]
    %v309 = vld [vmem:[%s1 + $0x2f8] sm:$0xff]
    %v310 = vld [vmem:[%s1 + $0x300] sm:$0xff]
    %v311 = vld [vmem:[%s1 + $0x308] sm:$0xff]
    %v312 = vld [vmem:[%s1 + $0x310] sm:$0xff]
    %v313 = vld [vmem:[%s1 + $0x318] sm:$0xff]
    %v314 = vld [vmem:[%s1 + $0x320] sm:$0xff]
    %v315 = vld [vmem:[%s1 + $0x328] sm:$0xff]
    %v316 = vld [vmem:[%s1 + $0x330] sm:$0xff]
    %v317 = vld [vmem:[%s1 + $0x338] sm:$0xff]
    %v318 = vld [vmem:[%s1 + $0x340] sm:$0xff]
    %v319 = vld [vmem:[%s1 + $0x348] sm:$0xff]
    %v320 = vld [vmem:[%s1 + $0x350] sm:$0xff]
    %v321 = vld [vmem:[%s1 + $0x358] sm:$0xff]
    %v322 = vld [vmem:[%s1 + $0x360] sm:$0xff]
    %v323 = vld [vmem:[%s1 + $0x368] sm:$0xff]
    %v324 = vld [vmem:[%s1 + $0x370] sm:$0xff]
    %v325 = vld [vmem:[%s1 + $0x378] sm:$0xff]
    %v326 = vld [vmem:[%s1 + $0x380] sm:$0xff]
    %v327 = vld [vmem:[%s1 + $0x388] sm:$0xff]
    %v328 = vld [vmem:[%s1 + $0x390] sm:$0xff]
    %v329 = vld [vmem:[%s1 + $0x398] sm:$0xff]
    %v330 = vld [vmem:[%s1 + $0x3a0] sm:$0xff]
    %v331 = vld [vmem:[%s1 + $0x3a8] sm:$0xff]
    %v332 = vld [vmem:[%s1 + $0x3b0] sm:$0xff]
    %v333 = vld [vmem:[%s1 + $0x3b8] sm:$0xff]
    %v334 = vld [vmem:[%s1 + $0x3c0] sm:$0xff]
    %v335 = vld [vmem:[%s1 + $0x3c8] sm:$0xff]
    %v336 = vld [vmem:[%s1 + $0x3d0] sm:$0xff]
    %v337 = vld [vmem:[%s1 + $0x3d8] sm:$0xff]
    %v338 = vld [vmem:[%s1 + $0x3e0] sm:$0xff]
    %v339 = vld [vmem:[%s1 + $0x3e8] sm:$0xff]
    %v340 = vld [vmem:[%s1 + $0x3f0] sm:$0xff]
    %v341 = vld [vmem:[%s1 + $0x3f8] sm:$0xff]
    %v470 = vunpack.c.l.b16 %v214
    %v471 = vunpack.c.h.b16 %v214
    %v472 = vunpack.c.l.b16 %v215
    %v473 = vunpack.c.h.b16 %v215
    %v474 = vunpack.c.l.b16 %v216
    %v475 = vunpack.c.h.b16 %v216
    %v476 = vunpack.c.l.b16 %v217
    %v477 = vunpack.c.h.b16 %v217
    %v478 = vunpack.c.l.b16 %v218
    %v479 = vunpack.c.h.b16 %v218
    %v480 = vunpack.c.l.b16 %v219
    %v481 = vunpack.c.h.b16 %v219
    %v482 = vunpack.c.l.b16 %v220
    %v483 = vunpack.c.h.b16 %v220
    %v484 = vunpack.c.l.b16 %v221
    %v485 = vunpack.c.h.b16 %v221
    %v486 = vunpack.c.l.b16 %v222
    %v487 = vunpack.c.h.b16 %v222
    %v488 = vunpack.c.l.b16 %v223
    %v489 = vunpack.c.h.b16 %v223
    %v490 = vunpack.c.l.b16 %v224
    %v491 = vunpack.c.h.b16 %v224
    %v492 = vunpack.c.l.b16 %v225
    %v493 = vunpack.c.h.b16 %v225
    %v494 = vunpack.c.l.b16 %v226
    %v495 = vunpack.c.h.b16 %v226
    %v496 = vunpack.c.l.b16 %v227
    %v497 = vunpack.c.h.b16 %v227
    %v498 = vunpack.c.l.b16 %v228
    %v499 = vunpack.c.h.b16 %v228
    %v500 = vunpack.c.l.b16 %v229
    %v501 = vunpack.c.h.b16 %v229
    %v502 = vunpack.c.l.b16 %v230
    %v503 = vunpack.c.h.b16 %v230
    %v504 = vunpack.c.l.b16 %v231
    %v505 = vunpack.c.h.b16 %v231
    %v506 = vunpack.c.l.b16 %v232
    %v507 = vunpack.c.h.b16 %v232
    %v508 = vunpack.c.l.b16 %v233
    %v509 = vunpack.c.h.b16 %v233
    %v510 = vunpack.c.l.b16 %v234
    %v511 = vunpack.c.h.b16 %v234
    %v512 = vunpack.c.l.b16 %v235
    %v513 = vunpack.c.h.b16 %v235
    %v514 = vunpack.c.l.b16 %v236
    %v515 = vunpack.c.h.b16 %v236
    %v516 = vunpack.c.l.b16 %v237
    %v517 = vunpack.c.h.b16 %v237
    %v518 = vunpack.c.l.b16 %v238
    %v519 = vunpack.c.h.b16 %v238
    %v520 = vunpack.c.l.b16 %v239
    %v521 = vunpack.c.h.b16 %v239
    %v522 = vunpack.c.l.b16 %v240
    %v523 = vunpack.c.h.b16 %v240
    %v524 = vunpack.c.l.b16 %v241
    %v525 = vunpack.c.h.b16 %v241
    %v526 = vunpack.c.l.b16 %v242
    %v527 = vunpack.c.h.b16 %v242
    %v528 = vunpack.c.l.b16 %v243
    %v529 = vunpack.c.h.b16 %v243
    %v530 = vunpack.c.l.b16 %v244
    %v531 = vunpack.c.h.b16 %v244
    %v532 = vunpack.c.l.b16 %v245
    %v533 = vunpack.c.h.b16 %v245
    %v534 = vunpack.c.l.b16 %v246
    %v535 = vunpack.c.h.b16 %v246
    %v536 = vunpack.c.l.b16 %v247
    %v537 = vunpack.c.h.b16 %v247
    %v538 = vunpack.c.l.b16 %v248
    %v539 = vunpack.c.h.b16 %v248
    %v540 = vunpack.c.l.b16 %v249
    %v541 = vunpack.c.h.b16 %v249
    %v542 = vunpack.c.l.b16 %v250
    %v543 = vunpack.c.h.b16 %v250
    %v544 = vunpack.c.l.b16 %v251
    %v545 = vunpack.c.h.b16 %v251
    %v546 = vunpack.c.l.b16 %v252
    %v547 = vunpack.c.h.b16 %v252
    %v548 = vunpack.c.l.b16 %v253
    %v549 = vunpack.c.h.b16 %v253
    %v550 = vunpack.c.l.b16 %v254
    %v551 = vunpack.c.h.b16 %v254
    %v552 = vunpack.c.l.b16 %v255
    %v553 = vunpack.c.h.b16 %v255
    %v554 = vunpack.c.l.b16 %v256
    %v555 = vunpack.c.h.b16 %v256
    %v556 = vunpack.c.l.b16 %v257
    %v557 = vunpack.c.h.b16 %v257
    %v558 = vunpack.c.l.b16 %v258
    %v559 = vunpack.c.h.b16 %v258
    %v560 = vunpack.c.l.b16 %v259
    %v561 = vunpack.c.h.b16 %v259
    %v562 = vunpack.c.l.b16 %v260
    %v563 = vunpack.c.h.b16 %v260
    %v564 = vunpack.c.l.b16 %v261
    %v565 = vunpack.c.h.b16 %v261
    %v566 = vunpack.c.l.b16 %v262
    %v567 = vunpack.c.h.b16 %v262
    %v568 = vunpack.c.l.b16 %v263
    %v569 = vunpack.c.h.b16 %v263
    %v570 = vunpack.c.l.b16 %v264
    %v571 = vunpack.c.h.b16 %v264
    %v572 = vunpack.c.l.b16 %v265
    %v573 = vunpack.c.h.b16 %v265
    %v574 = vunpack.c.l.b16 %v266
    %v575 = vunpack.c.h.b16 %v266
    %v576 = vunpack.c.l.b16 %v267
    %v577 = vunpack.c.h.b16 %v267
    %v578 = vunpack.c.l.b16 %v268
    %v579 = vunpack.c.h.b16 %v268
    %v580 = vunpack.c.l.b16 %v269
    %v581 = vunpack.c.h.b16 %v269
    %v582 = vunpack.c.l.b16 %v270
    %v583 = vunpack.c.h.b16 %v270
    %v584 = vunpack.c.l.b16 %v271
    %v585 = vunpack.c.h.b16 %v271
    %v586 = vunpack.c.l.b16 %v272
    %v587 = vunpack.c.h.b16 %v272
    %v588 = vunpack.c.l.b16 %v273
    %v589 = vunpack.c.h.b16 %v273
    %v590 = vunpack.c.l.b16 %v274
    %v591 = vunpack.c.h.b16 %v274
    %v592 = vunpack.c.l.b16 %v275
    %v593 = vunpack.c.h.b16 %v275
    %v594 = vunpack.c.l.b16 %v276
    %v595 = vunpack.c.h.b16 %v276
    %v596 = vunpack.c.l.b16 %v277
    %v597 = vunpack.c.h.b16 %v277
    %v598 = vunpack.c.l.b16 %v278
    %v599 = vunpack.c.h.b16 %v278
    %v600 = vunpack.c.l.b16 %v279
    %v601 = vunpack.c.h.b16 %v279
    %v602 = vunpack.c.l.b16 %v280
    %v603 = vunpack.c.h.b16 %v280
    %v604 = vunpack.c.l.b16 %v281
    %v605 = vunpack.c.h.b16 %v281
    %v606 = vunpack.c.l.b16 %v282
    %v607 = vunpack.c.h.b16 %v282
    %v608 = vunpack.c.l.b16 %v283
    %v609 = vunpack.c.h.b16 %v283
    %v610 = vunpack.c.l.b16 %v284
    %v611 = vunpack.c.h.b16 %v284
    %v612 = vunpack.c.l.b16 %v285
    %v613 = vunpack.c.h.b16 %v285
    %v614 = vunpack.c.l.b16 %v286
    %v615 = vunpack.c.h.b16 %v286
    %v616 = vunpack.c.l.b16 %v287
    %v617 = vunpack.c.h.b16 %v287
    %v618 = vunpack.c.l.b16 %v288
    %v619 = vunpack.c.h.b16 %v288
    %v620 = vunpack.c.l.b16 %v289
    %v621 = vunpack.c.h.b16 %v289
    %v622 = vunpack.c.l.b16 %v290
    %v623 = vunpack.c.h.b16 %v290
    %v624 = vunpack.c.l.b16 %v291
    %v625 = vunpack.c.h.b16 %v291
    %v626 = vunpack.c.l.b16 %v292
    %v627 = vunpack.c.h.b16 %v292
    %v628 = vunpack.c.l.b16 %v293
    %v629 = vunpack.c.h.b16 %v293
    %v630 = vunpack.c.l.b16 %v294
    %v631 = vunpack.c.h.b16 %v294
    %v632 = vunpack.c.l.b16 %v295
    %v633 = vunpack.c.h.b16 %v295
    %v634 = vunpack.c.l.b16 %v296
    %v635 = vunpack.c.h.b16 %v296
    %v636 = vunpack.c.l.b16 %v297
    %v637 = vunpack.c.h.b16 %v297
    %v638 = vunpack.c.l.b16 %v298
    %v639 = vunpack.c.h.b16 %v298
    %v640 = vunpack.c.l.b16 %v299
    %v641 = vunpack.c.h.b16 %v299
    %v642 = vunpack.c.l.b16 %v300
    %v643 = vunpack.c.h.b16 %v300
    %v644 = vunpack.c.l.b16 %v301
    %v645 = vunpack.c.h.b16 %v301
    %v646 = vunpack.c.l.b16 %v302
    %v647 = vunpack.c.h.b16 %v302
    %v648 = vunpack.c.l.b16 %v303
    %v649 = vunpack.c.h.b16 %v303
    %v650 = vunpack.c.l.b16 %v304
    %v651 = vunpack.c.h.b16 %v304
    %v652 = vunpack.c.l.b16 %v305
    %v653 = vunpack.c.h.b16 %v305
    %v654 = vunpack.c.l.b16 %v306
    %v655 = vunpack.c.h.b16 %v306
    %v656 = vunpack.c.l.b16 %v307
    %v657 = vunpack.c.h.b16 %v307
    %v658 = vunpack.c.l.b16 %v308
    %v659 = vunpack.c.h.b16 %v308
    %v660 = vunpack.c.l.b16 %v309
    %v661 = vunpack.c.h.b16 %v309
    %v662 = vunpack.c.l.b16 %v310
    %v663 = vunpack.c.h.b16 %v310
    %v664 = vunpack.c.l.b16 %v311
    %v665 = vunpack.c.h.b16 %v311
    %v666 = vunpack.c.l.b16 %v312
    %v667 = vunpack.c.h.b16 %v312
    %v668 = vunpack.c.l.b16 %v313
    %v669 = vunpack.c.h.b16 %v313
    %v670 = vunpack.c.l.b16 %v314
    %v671 = vunpack.c.h.b16 %v314
    %v672 = vunpack.c.l.b16 %v315
    %v673 = vunpack.c.h.b16 %v315
    %v674 = vunpack.c.l.b16 %v316
    %v675 = vunpack.c.h.b16 %v316
    %v676 = vunpack.c.l.b16 %v317
    %v677 = vunpack.c.h.b16 %v317
    %v678 = vunpack.c.l.b16 %v318
    %v679 = vunpack.c.h.b16 %v318
    %v680 = vunpack.c.l.b16 %v319
    %v681 = vunpack.c.h.b16 %v319
    %v682 = vunpack.c.l.b16 %v320
    %v683 = vunpack.c.h.b16 %v320
    %v684 = vunpack.c.l.b16 %v321
    %v685 = vunpack.c.h.b16 %v321
    %v686 = vunpack.c.l.b16 %v322
    %v687 = vunpack.c.h.b16 %v322
    %v688 = vunpack.c.l.b16 %v323
    %v689 = vunpack.c.h.b16 %v323
    %v690 = vunpack.c.l.b16 %v324
    %v691 = vunpack.c.h.b16 %v324
    %v692 = vunpack.c.l.b16 %v325
    %v693 = vunpack.c.h.b16 %v325
    %v694 = vunpack.c.l.b16 %v326
    %v695 = vunpack.c.h.b16 %v326
    %v696 = vunpack.c.l.b16 %v327
    %v697 = vunpack.c.h.b16 %v327
    %v698 = vunpack.c.l.b16 %v328
    %v699 = vunpack.c.h.b16 %v328
    %v700 = vunpack.c.l.b16 %v329
    %v701 = vunpack.c.h.b16 %v329
    %v702 = vunpack.c.l.b16 %v330
    %v703 = vunpack.c.h.b16 %v330
    %v704 = vunpack.c.l.b16 %v331
    %v705 = vunpack.c.h.b16 %v331
    %v706 = vunpack.c.l.b16 %v332
    %v707 = vunpack.c.h.b16 %v332
    %v708 = vunpack.c.l.b16 %v333
    %v709 = vunpack.c.h.b16 %v333
    %v710 = vunpack.c.l.b16 %v334
    %v711 = vunpack.c.h.b16 %v334
    %v712 = vunpack.c.l.b16 %v335
    %v713 = vunpack.c.h.b16 %v335
    %v714 = vunpack.c.l.b16 %v336
    %v715 = vunpack.c.h.b16 %v336
    %v716 = vunpack.c.l.b16 %v337
    %v717 = vunpack.c.h.b16 %v337
    %v718 = vunpack.c.l.b16 %v338
    %v719 = vunpack.c.h.b16 %v338
    %v720 = vunpack.c.l.b16 %v339
    %v721 = vunpack.c.h.b16 %v339
    %v722 = vunpack.c.l.b16 %v340
    %v723 = vunpack.c.h.b16 %v340
    %v724 = vunpack.c.l.b16 %v341
    %v725 = vunpack.c.h.b16 %v341
    %v726 = vpack.c.b16 %v474, %v470
    %v727 = vpack.c.b16 %v475, %v471
    %v728 = vpack.c.b16 %v476, %v472
    %v729 = vpack.c.b16 %v477, %v473
    %v730 = vpack.c.b16 %v482, %v478
    %v731 = vpack.c.b16 %v483, %v479
    %v732 = vpack.c.b16 %v484, %v480
    %v733 = vpack.c.b16 %v485, %v481
    %v734 = vpack.c.b16 %v490, %v486
    %v735 = vpack.c.b16 %v491, %v487
    %v736 = vpack.c.b16 %v492, %v488
    %v737 = vpack.c.b16 %v493, %v489
    %v738 = vpack.c.b16 %v498, %v494
    %v739 = vpack.c.b16 %v499, %v495
    %v740 = vpack.c.b16 %v500, %v496
    %v741 = vpack.c.b16 %v501, %v497
    %v742 = vpack.c.b16 %v506, %v502
    %v743 = vpack.c.b16 %v507, %v503
    %v744 = vpack.c.b16 %v508, %v504
    %v745 = vpack.c.b16 %v509, %v505
    %v746 = vpack.c.b16 %v514, %v510
    %v747 = vpack.c.b16 %v515, %v511
    %v748 = vpack.c.b16 %v516, %v512
    %v749 = vpack.c.b16 %v517, %v513
    %v750 = vpack.c.b16 %v522, %v518
    %v751 = vpack.c.b16 %v523, %v519
    %v752 = vpack.c.b16 %v524, %v520
    %v753 = vpack.c.b16 %v525, %v521
    %v754 = vpack.c.b16 %v530, %v526
    %v755 = vpack.c.b16 %v531, %v527
    %v756 = vpack.c.b16 %v532, %v528
    %v757 = vpack.c.b16 %v533, %v529
    %v758 = vpack.c.b16 %v538, %v534
    %v759 = vpack.c.b16 %v539, %v535
    %v760 = vpack.c.b16 %v540, %v536
    %v761 = vpack.c.b16 %v541, %v537
    %v762 = vpack.c.b16 %v546, %v542
    %v763 = vpack.c.b16 %v547, %v543
    %v764 = vpack.c.b16 %v548, %v544
    %v765 = vpack.c.b16 %v549, %v545
    %v766 = vpack.c.b16 %v554, %v550
    %v767 = vpack.c.b16 %v555, %v551
    %v768 = vpack.c.b16 %v556, %v552
    %v769 = vpack.c.b16 %v557, %v553
    %v770 = vpack.c.b16 %v562, %v558
    %v771 = vpack.c.b16 %v563, %v559
    %v772 = vpack.c.b16 %v564, %v560
    %v773 = vpack.c.b16 %v565, %v561
    %v774 = vpack.c.b16 %v570, %v566
    %v775 = vpack.c.b16 %v571, %v567
    %v776 = vpack.c.b16 %v572, %v568
    %v777 = vpack.c.b16 %v573, %v569
    %v778 = vpack.c.b16 %v578, %v574
    %v779 = vpack.c.b16 %v579, %v575
    %v780 = vpack.c.b16 %v580, %v576
    %v781 = vpack.c.b16 %v581, %v577
    %v782 = vpack.c.b16 %v586, %v582
    %v783 = vpack.c.b16 %v587, %v583
    %v784 = vpack.c.b16 %v588, %v584
    %v785 = vpack.c.b16 %v589, %v585
    %v786 = vpack.c.b16 %v594, %v590
    %v787 = vpack.c.b16 %v595, %v591
    %v788 = vpack.c.b16 %v596, %v592
    %v789 = vpack.c.b16 %v597, %v593
    %v790 = vpack.c.b16 %v602, %v598
    %v791 = vpack.c.b16 %v603, %v599
    %v792 = vpack.c.b16 %v604, %v600
    %v793 = vpack.c.b16 %v605, %v601
    %v794 = vpack.c.b16 %v610, %v606
    %v795 = vpack.c.b16 %v611, %v607
    %v796 = vpack.c.b16 %v612, %v608
    %v797 = vpack.c.b16 %v613, %v609
    %v798 = vpack.c.b16 %v618, %v614
    %v799 = vpack.c.b16 %v619, %v615
    %v800 = vpack.c.b16 %v620, %v616
    %v801 = vpack.c.b16 %v621, %v617
    %v802 = vpack.c.b16 %v626, %v622
    %v803 = vpack.c.b16 %v627, %v623
    %v804 = vpack.c.b16 %v628, %v624
    %v805 = vpack.c.b16 %v629, %v625
    %v806 = vpack.c.b16 %v634, %v630
    %v807 = vpack.c.b16 %v635, %v631
    %v808 = vpack.c.b16 %v636, %v632
    %v809 = vpack.c.b16 %v637, %v633
    %v810 = vpack.c.b16 %v642, %v638
    %v811 = vpack.c.b16 %v643, %v639
    %v812 = vpack.c.b16 %v644, %v640
    %v813 = vpack.c.b16 %v645, %v641
    %v814 = vpack.c.b16 %v650, %v646
    %v815 = vpack.c.b16 %v651, %v647
    %v816 = vpack.c.b16 %v652, %v648
    %v817 = vpack.c.b16 %v653, %v649
    %v818 = vpack.c.b16 %v658, %v654
    %v819 = vpack.c.b16 %v659, %v655
    %v820 = vpack.c.b16 %v660, %v656
    %v821 = vpack.c.b16 %v661, %v657
    %v822 = vpack.c.b16 %v666, %v662
    %v823 = vpack.c.b16 %v667, %v663
    %v824 = vpack.c.b16 %v668, %v664
    %v825 = vpack.c.b16 %v669, %v665
    %v826 = vpack.c.b16 %v674, %v670
    %v827 = vpack.c.b16 %v675, %v671
    %v828 = vpack.c.b16 %v676, %v672
    %v829 = vpack.c.b16 %v677, %v673
    %v830 = vpack.c.b16 %v682, %v678
    %v831 = vpack.c.b16 %v683, %v679
    %v832 = vpack.c.b16 %v684, %v680
    %v833 = vpack.c.b16 %v685, %v681
    %v834 = vpack.c.b16 %v690, %v686
    %v835 = vpack.c.b16 %v691, %v687
    %v836 = vpack.c.b16 %v692, %v688
    %v837 = vpack.c.b16 %v693, %v689
    %v838 = vpack.c.b16 %v698, %v694
    %v839 = vpack.c.b16 %v699, %v695
    %v840 = vpack.c.b16 %v700, %v696
    %v841 = vpack.c.b16 %v701, %v697
    %v842 = vpack.c.b16 %v706, %v702
    %v843 = vpack.c.b16 %v707, %v703
    %v844 = vpack.c.b16 %v708, %v704
    %v845 = vpack.c.b16 %v709, %v705
    %v846 = vpack.c.b16 %v714, %v710
    %v847 = vpack.c.b16 %v715, %v711
    %v848 = vpack.c.b16 %v716, %v712
    %v849 = vpack.c.b16 %v717, %v713
    %v850 = vpack.c.b16 %v722, %v718
    %v851 = vpack.c.b16 %v723, %v719
    %v852 = vpack.c.b16 %v724, %v720
    %v853 = vpack.c.b16 %v725, %v721
    %982 = vmatprep.subr.bf16.mxu0 %v727
    %983 = vmatpush1.bf16.msra.mxu0 %v726
    %984 = vmatprep.subr.bf16.mxu0 %v731
    %985 = vmatpush1.bf16.msra.mxu0 %v730
    %986 = vmatprep.subr.bf16.mxu0 %v735
    %987 = vmatpush1.bf16.msra.mxu0 %v734
    %988 = vmatprep.subr.bf16.mxu0 %v739
    %989 = vmatpush1.bf16.msra.mxu0 %v738
    %990 = vmatprep.subr.bf16.mxu0 %v743
    %991 = vmatpush1.bf16.msra.mxu0 %v742
    %992 = vmatprep.subr.bf16.mxu0 %v747
    %993 = vmatpush1.bf16.msra.mxu0 %v746
    %994 = vmatprep.subr.bf16.mxu0 %v751
    %995 = vmatpush1.bf16.msra.mxu0 %v750
    %996 = vmatprep.subr.bf16.mxu0 %v755
    %997 = vmatpush1.bf16.msra.mxu0 %v754
    %998 = vmatprep.subr.bf16.mxu0 %v759
    %999 = vmatpush1.bf16.msra.mxu0 %v758
    %1000 = vmatprep.subr.bf16.mxu0 %v763
    %1001 = vmatpush1.bf16.msra.mxu0 %v762
    %1002 = vmatprep.subr.bf16.mxu0 %v767
    %1003 = vmatpush1.bf16.msra.mxu0 %v766
    %1004 = vmatprep.subr.bf16.mxu0 %v771
    %1005 = vmatpush1.bf16.msra.mxu0 %v770
    %1006 = vmatprep.subr.bf16.mxu0 %v775
    %1007 = vmatpush1.bf16.msra.mxu0 %v774
    %1008 = vmatprep.subr.bf16.mxu0 %v779
    %1009 = vmatpush1.bf16.msra.mxu0 %v778
    %1010 = vmatprep.subr.bf16.mxu0 %v783
    %1011 = vmatpush1.bf16.msra.mxu0 %v782
    %1012 = vmatprep.subr.bf16.mxu0 %v787
    %1013 = vmatpush1.bf16.msra.mxu0 %v786
    %1014 = vmatprep.mubr.bf16.mxu0 %v151
    %1015 = vmatmul.mubr.bf16.gmra.mrb[0].mxu0 %v150
    %v1016 = vpop.f32.mrb[0].mxu0
    %v1017 = vadd.f32 0.0, %v1016
    %v1018 = vpop.f32.mrb[0].mxu0
    %v1019 = vadd.f32 0.0, %v1018
    %v1020 = vpop.f32.mrb[0].mxu0
    %v1021 = vadd.f32 0.0, %v1020
    %v1022 = vpop.f32.mrb[0].mxu0
    %v1023 = vadd.f32 0.0, %v1022
    %1024 = vmatprep.mubr.bf16.mxu0 %v155
    %1025 = vmatmul.mubr.bf16.gmra.mrb[0].mxu0 %v154
    %v1026 = vpop.f32.mrb[0].mxu0
    %v1027 = vadd.f32 0.0, %v1026
    %v1028 = vpop.f32.mrb[0].mxu0
    %v1029 = vadd.f32 0.0, %v1028
    %v1030 = vpop.f32.mrb[0].mxu0
    %v1031 = vadd.f32 0.0, %v1030
    %v1032 = vpop.f32.mrb[0].mxu0
    %v1033 = vadd.f32 0.0, %v1032
    %1034 = vmatprep.mubr.bf16.mxu0 %v159
    %1035 = vmatmul.mubr.bf16.gmra.mrb[0].mxu0 %v158
    %v1036 = vpop.f32.mrb[0].mxu0
    %v1037 = vadd.f32 0.0, %v1036
    %v1038 = vpop.f32.mrb[0].mxu0
    %v1039 = vadd.f32 0.0, %v1038
    %v1040 = vpop.f32.mrb[0].mxu0
    %v1041 = vadd.f32 0.0, %v1040
    %v1042 = vpop.f32.mrb[0].mxu0
    %v1043 = vadd.f32 0.0, %v1042
    %1044 = vmatprep.mubr.bf16.mxu0 %v163
    %1045 = vmatmul.mubr.bf16.gmra.mrb[0].mxu0 %v162
    %v1046 = vpop.f32.mrb[0].mxu0
    %v1047 = vadd.f32 0.0, %v1046
    %v1048 = vpop.f32.mrb[0].mxu0
    %v1049 = vadd.f32 0.0, %v1048
    %v1050 = vpop.f32.mrb[0].mxu0
    %v1051 = vadd.f32 0.0, %v1050
    %v1052 = vpop.f32.mrb[0].mxu0
    %v1053 = vadd.f32 0.0, %v1052
    %1054 = vmatprep.mubr.bf16.mxu0 %v167
    %1055 = vmatmul.mubr.bf16.gmra.mrb[0].mxu0 %v166
    %v1056 = vpop.f32.mrb[0].mxu0
    %v1057 = vadd.f32 0.0, %v1056
    %v1058 = vpop.f32.mrb[0].mxu0
    %v1059 = vadd.f32 0.0, %v1058
    %v1060 = vpop.f32.mrb[0].mxu0
    %v1061 = vadd.f32 0.0, %v1060
    %v1062 = vpop.f32.mrb[0].mxu0
    %v1063 = vadd.f32 0.0, %v1062
    %1064 = vmatprep.mubr.bf16.mxu0 %v171
    %1065 = vmatmul.mubr.bf16.gmra.mrb[0].mxu0 %v170
    %v1066 = vpop.f32.mrb[0].mxu0
    %v1067 = vadd.f32 0.0, %v1066
    %v1068 = vpop.f32.mrb[0].mxu0
    %v1069 = vadd.f32 0.0, %v1068
    %v1070 = vpop.f32.mrb[0].mxu0
    %v1071 = vadd.f32 0.0, %v1070
    %v1072 = vpop.f32.mrb[0].mxu0
    %v1073 = vadd.f32 0.0, %v1072
    %1074 = vmatprep.mubr.bf16.mxu0 %v175
    %1075 = vmatmul.mubr.bf16.gmra.mrb[0].mxu0 %v174
    %v1076 = vpop.f32.mrb[0].mxu0
    %v1077 = vadd.f32 0.0, %v1076
    %v1078 = vpop.f32.mrb[0].mxu0
    %v1079 = vadd.f32 0.0, %v1078
    %v1080 = vpop.f32.mrb[0].mxu0
    %v1081 = vadd.f32 0.0, %v1080
    %v1082 = vpop.f32.mrb[0].mxu0
    %v1083 = vadd.f32 0.0, %v1082
    %1084 = vmatprep.mubr.bf16.mxu0 %v179
    %1085 = vmatmul.mubr.bf16.gmra.mrb[0].mxu0 %v178
    %v1086 = vpop.f32.mrb[0].mxu0
    %v1087 = vadd.f32 0.0, %v1086
    %v1088 = vpop.f32.mrb[0].mxu0
    %v1089 = vadd.f32 0.0, %v1088
    %v1090 = vpop.f32.mrb[0].mxu0
    %v1091 = vadd.f32 0.0, %v1090
    %v1092 = vpop.f32.mrb[0].mxu0
    %v1093 = vadd.f32 0.0, %v1092
    %1094 = vmatprep.mubr.bf16.mxu0 %v183
    %1095 = vmatmul.mubr.bf16.gmra.mrb[0].mxu0 %v182
    %v1096 = vpop.f32.mrb[0].mxu0
    %v1097 = vadd.f32 0.0, %v1096
    %v1098 = vpop.f32.mrb[0].mxu0
    %v1099 = vadd.f32 0.0, %v1098
    %v1100 = vpop.f32.mrb[0].mxu0
    %v1101 = vadd.f32 0.0, %v1100
    %v1102 = vpop.f32.mrb[0].mxu0
    %v1103 = vadd.f32 0.0, %v1102
    %1104 = vmatprep.mubr.bf16.mxu0 %v187
    %1105 = vmatmul.mubr.bf16.gmra.mrb[0].mxu0 %v186
    %v1106 = vpop.f32.mrb[0].mxu0
    %v1107 = vadd.f32 0.0, %v1106
    %v1108 = vpop.f32.mrb[0].mxu0
    %v1109 = vadd.f32 0.0, %v1108
    %v1110 = vpop.f32.mrb[0].mxu0
    %v1111 = vadd.f32 0.0, %v1110
    %v1112 = vpop.f32.mrb[0].mxu0
    %v1113 = vadd.f32 0.0, %v1112
    %1114 = vmatprep.mubr.bf16.mxu0 %v191
    %1115 = vmatmul.mubr.bf16.gmra.mrb[0].mxu0 %v190
    %v1116 = vpop.f32.mrb[0].mxu0
    %v1117 = vadd.f32 0.0, %v1116
    %v1118 = vpop.f32.mrb[0].mxu0
    %v1119 = vadd.f32 0.0, %v1118
    %v1120 = vpop.f32.mrb[0].mxu0
    %v1121 = vadd.f32 0.0, %v1120
    %v1122 = vpop.f32.mrb[0].mxu0
    %v1123 = vadd.f32 0.0, %v1122
    %1124 = vmatprep.mubr.bf16.mxu0 %v195
    %1125 = vmatmul.mubr.bf16.gmra.mrb[0].mxu0 %v194
    %v1126 = vpop.f32.mrb[0].mxu0
    %v1127 = vadd.f32 0.0, %v1126
    %v1128 = vpop.f32.mrb[0].mxu0
    %v1129 = vadd.f32 0.0, %v1128
    %v1130 = vpop.f32.mrb[0].mxu0
    %v1131 = vadd.f32 0.0, %v1130
    %v1132 = vpop.f32.mrb[0].mxu0
    %v1133 = vadd.f32 0.0, %v1132
    %1134 = vmatprep.mubr.bf16.mxu0 %v199
    %1135 = vmatmul.mubr.bf16.gmra.mrb[0].mxu0 %v198
    %v1136 = vpop.f32.mrb[0].mxu0
    %v1137 = vadd.f32 0.0, %v1136
    %v1138 = vpop.f32.mrb[0].mxu0
    %v1139 = vadd.f32 0.0, %v1138
    %v1140 = vpop.f32.mrb[0].mxu0
    %v1141 = vadd.f32 0.0, %v1140
    %v1142 = vpop.f32.mrb[0].mxu0
    %v1143 = vadd.f32 0.0, %v1142
    %1144 = vmatprep.mubr.bf16.mxu0 %v203
    %1145 = vmatmul.mubr.bf16.gmra.mrb[0].mxu0 %v202
    %v1146 = vpop.f32.mrb[0].mxu0
    %v1147 = vadd.f32 0.0, %v1146
    %v1148 = vpop.f32.mrb[0].mxu0
    %v1149 = vadd.f32 0.0, %v1148
    %v1150 = vpop.f32.mrb[0].mxu0
    %v1151 = vadd.f32 0.0, %v1150
    %v1152 = vpop.f32.mrb[0].mxu0
    %v1153 = vadd.f32 0.0, %v1152
    %1154 = vmatprep.mubr.bf16.mxu0 %v207
    %1155 = vmatmul.mubr.bf16.gmra.mrb[0].mxu0 %v206
    %v1156 = vpop.f32.mrb[0].mxu0
    %v1157 = vadd.f32 0.0, %v1156
    %v1158 = vpop.f32.mrb[0].mxu0
    %v1159 = vadd.f32 0.0, %v1158
    %v1160 = vpop.f32.mrb[0].mxu0
    %v1161 = vadd.f32 0.0, %v1160
    %v1162 = vpop.f32.mrb[0].mxu0
    %v1163 = vadd.f32 0.0, %v1162
    %1164 = vmatprep.mubr.bf16.mxu0 %v211
    %1165 = vmatmul.mubr.bf16.gmra.mrb[0].mxu0 %v210
    %v1166 = vpop.f32.mrb[0].mxu0
    %v1167 = vadd.f32 0.0, %v1166
    %v1168 = vpop.f32.mrb[0].mxu0
    %v1169 = vadd.f32 0.0, %v1168
    %v1170 = vpop.f32.mrb[0].mxu0
    %v1171 = vadd.f32 0.0, %v1170
    %v1172 = vpop.f32.mrb[0].mxu0
    %v1173 = vadd.f32 0.0, %v1172
    %1174 = vdwg.mxu0
    %1175 = vmatprep.subr.bf16.mxu0 %v791
    %1176 = vmatpush1.bf16.msra.mxu0 %v790
    %1177 = vmatprep.subr.bf16.mxu0 %v795
    %1178 = vmatpush1.bf16.msra.mxu0 %v794
    %1179 = vmatprep.subr.bf16.mxu0 %v799
    %1180 = vmatpush1.bf16.msra.mxu0 %v798
    %1181 = vmatprep.subr.bf16.mxu0 %v803
    %1182 = vmatpush1.bf16.msra.mxu0 %v802
    %1183 = vmatprep.subr.bf16.mxu0 %v807
    %1184 = vmatpush1.bf16.msra.mxu0 %v806
    %1185 = vmatprep.subr.bf16.mxu0 %v811
    %1186 = vmatpush1.bf16.msra.mxu0 %v810
    %1187 = vmatprep.subr.bf16.mxu0 %v815
    %1188 = vmatpush1.bf16.msra.mxu0 %v814
    %1189 = vmatprep.subr.bf16.mxu0 %v819
    %1190 = vmatpush1.bf16.msra.mxu0 %v818
    %1191 = vmatprep.subr.bf16.mxu0 %v823
    %1192 = vmatpush1.bf16.msra.mxu0 %v822
    %1193 = vmatprep.subr.bf16.mxu0 %v827
    %1194 = vmatpush1.bf16.msra.mxu0 %v826
    %1195 = vmatprep.subr.bf16.mxu0 %v831
    %1196 = vmatpush1.bf16.msra.mxu0 %v830
    %1197 = vmatprep.subr.bf16.mxu0 %v835
    %1198 = vmatpush1.bf16.msra.mxu0 %v834
    %1199 = vmatprep.subr.bf16.mxu0 %v839
    %1200 = vmatpush1.bf16.msra.mxu0 %v838
    %1201 = vmatprep.subr.bf16.mxu0 %v843
    %1202 = vmatpush1.bf16.msra.mxu0 %v842
    %1203 = vmatprep.subr.bf16.mxu0 %v847
    %1204 = vmatpush1.bf16.msra.mxu0 %v846
    %1205 = vmatprep.subr.bf16.mxu0 %v851
    %1206 = vmatpush1.bf16.msra.mxu0 %v850
    %1207 = vmatprep.mubr.bf16.mxu0 %v153
    %1208 = vmatmul.mubr.bf16.gmra.mrb[0].mxu0 %v152
    %v1209 = vpop.f32.mrb[0].mxu0
    %v1210 = vadd.f32 %v1017, %v1209
    %v1211 = vpop.f32.mrb[0].mxu0
    %v1212 = vadd.f32 %v1019, %v1211
    %v1213 = vpop.f32.mrb[0].mxu0
    %v1214 = vadd.f32 %v1021, %v1213
    %v1215 = vpop.f32.mrb[0].mxu0
    %v1216 = vadd.f32 %v1023, %v1215
    %1217 = vmatprep.mubr.bf16.mxu0 %v157
    %1218 = vmatmul.mubr.bf16.gmra.mrb[0].mxu0 %v156
    %v1219 = vpop.f32.mrb[0].mxu0
    %v1220 = vadd.f32 %v1027, %v1219
    %v1221 = vpop.f32.mrb[0].mxu0
    %v1222 = vadd.f32 %v1029, %v1221
    %v1223 = vpop.f32.mrb[0].mxu0
    %v1224 = vadd.f32 %v1031, %v1223
    %v1225 = vpop.f32.mrb[0].mxu0
    %v1226 = vadd.f32 %v1033, %v1225
    %1227 = vmatprep.mubr.bf16.mxu0 %v161
    %1228 = vmatmul.mubr.bf16.gmra.mrb[0].mxu0 %v160
    %v1229 = vpop.f32.mrb[0].mxu0
    %v1230 = vadd.f32 %v1037, %v1229
    %v1231 = vpop.f32.mrb[0].mxu0
    %v1232 = vadd.f32 %v1039, %v1231
    %v1233 = vpop.f32.mrb[0].mxu0
    %v1234 = vadd.f32 %v1041, %v1233
    %v1235 = vpop.f32.mrb[0].mxu0
    %v1236 = vadd.f32 %v1043, %v1235
    %1237 = vmatprep.mubr.bf16.mxu0 %v165
    %1238 = vmatmul.mubr.bf16.gmra.mrb[0].mxu0 %v164
    %v1239 = vpop.f32.mrb[0].mxu0
    %v1240 = vadd.f32 %v1047, %v1239
    %v1241 = vpop.f32.mrb[0].mxu0
    %v1242 = vadd.f32 %v1049, %v1241
    %v1243 = vpop.f32.mrb[0].mxu0
    %v1244 = vadd.f32 %v1051, %v1243
    %v1245 = vpop.f32.mrb[0].mxu0
    %v1246 = vadd.f32 %v1053, %v1245
    %1247 = vmatprep.mubr.bf16.mxu0 %v169
    %1248 = vmatmul.mubr.bf16.gmra.mrb[0].mxu0 %v168
    %v1249 = vpop.f32.mrb[0].mxu0
    %v1250 = vadd.f32 %v1057, %v1249
    %v1251 = vpop.f32.mrb[0].mxu0
    %v1252 = vadd.f32 %v1059, %v1251
    %v1253 = vpop.f32.mrb[0].mxu0
    %v1254 = vadd.f32 %v1061, %v1253
    %v1255 = vpop.f32.mrb[0].mxu0
    %v1256 = vadd.f32 %v1063, %v1255
    %1257 = vmatprep.mubr.bf16.mxu0 %v173
    %1258 = vmatmul.mubr.bf16.gmra.mrb[0].mxu0 %v172
    %v1259 = vpop.f32.mrb[0].mxu0
    %v1260 = vadd.f32 %v1067, %v1259
    %v1261 = vpop.f32.mrb[0].mxu0
    %v1262 = vadd.f32 %v1069, %v1261
    %v1263 = vpop.f32.mrb[0].mxu0
    %v1264 = vadd.f32 %v1071, %v1263
    %v1265 = vpop.f32.mrb[0].mxu0
    %v1266 = vadd.f32 %v1073, %v1265
    %1267 = vmatprep.mubr.bf16.mxu0 %v177
    %1268 = vmatmul.mubr.bf16.gmra.mrb[0].mxu0 %v176
    %v1269 = vpop.f32.mrb[0].mxu0
    %v1270 = vadd.f32 %v1077, %v1269
    %v1271 = vpop.f32.mrb[0].mxu0
    %v1272 = vadd.f32 %v1079, %v1271
    %v1273 = vpop.f32.mrb[0].mxu0
    %v1274 = vadd.f32 %v1081, %v1273
    %v1275 = vpop.f32.mrb[0].mxu0
    %v1276 = vadd.f32 %v1083, %v1275
    %1277 = vmatprep.mubr.bf16.mxu0 %v181
    %1278 = vmatmul.mubr.bf16.gmra.mrb[0].mxu0 %v180
    %v1279 = vpop.f32.mrb[0].mxu0
    %v1280 = vadd.f32 %v1087, %v1279
    %v1281 = vpop.f32.mrb[0].mxu0
    %v1282 = vadd.f32 %v1089, %v1281
    %v1283 = vpop.f32.mrb[0].mxu0
    %v1284 = vadd.f32 %v1091, %v1283
    %v1285 = vpop.f32.mrb[0].mxu0
    %v1286 = vadd.f32 %v1093, %v1285
    %1287 = vmatprep.mubr.bf16.mxu0 %v185
    %1288 = vmatmul.mubr.bf16.gmra.mrb[0].mxu0 %v184
    %v1289 = vpop.f32.mrb[0].mxu0
    %v1290 = vadd.f32 %v1097, %v1289
    %v1291 = vpop.f32.mrb[0].mxu0
    %v1292 = vadd.f32 %v1099, %v1291
    %v1293 = vpop.f32.mrb[0].mxu0
    %v1294 = vadd.f32 %v1101, %v1293
    %v1295 = vpop.f32.mrb[0].mxu0
    %v1296 = vadd.f32 %v1103, %v1295
    %1297 = vmatprep.mubr.bf16.mxu0 %v189
    %1298 = vmatmul.mubr.bf16.gmra.mrb[0].mxu0 %v188
    %v1299 = vpop.f32.mrb[0].mxu0
    %v1300 = vadd.f32 %v1107, %v1299
    %v1301 = vpop.f32.mrb[0].mxu0
    %v1302 = vadd.f32 %v1109, %v1301
    %v1303 = vpop.f32.mrb[0].mxu0
    %v1304 = vadd.f32 %v1111, %v1303
    %v1305 = vpop.f32.mrb[0].mxu0
    %v1306 = vadd.f32 %v1113, %v1305
    %1307 = vmatprep.mubr.bf16.mxu0 %v193
    %1308 = vmatmul.mubr.bf16.gmra.mrb[0].mxu0 %v192
    %v1309 = vpop.f32.mrb[0].mxu0
    %v1310 = vadd.f32 %v1117, %v1309
    %v1311 = vpop.f32.mrb[0].mxu0
    %v1312 = vadd.f32 %v1119, %v1311
    %v1313 = vpop.f32.mrb[0].mxu0
    %v1314 = vadd.f32 %v1121, %v1313
    %v1315 = vpop.f32.mrb[0].mxu0
    %v1316 = vadd.f32 %v1123, %v1315
    %1317 = vmatprep.mubr.bf16.mxu0 %v197
    %1318 = vmatmul.mubr.bf16.gmra.mrb[0].mxu0 %v196
    %v1319 = vpop.f32.mrb[0].mxu0
    %v1320 = vadd.f32 %v1127, %v1319
    %v1321 = vpop.f32.mrb[0].mxu0
    %v1322 = vadd.f32 %v1129, %v1321
    %v1323 = vpop.f32.mrb[0].mxu0
    %v1324 = vadd.f32 %v1131, %v1323
    %v1325 = vpop.f32.mrb[0].mxu0
    %v1326 = vadd.f32 %v1133, %v1325
    %1327 = vmatprep.mubr.bf16.mxu0 %v201
    %1328 = vmatmul.mubr.bf16.gmra.mrb[0].mxu0 %v200
    %v1329 = vpop.f32.mrb[0].mxu0
    %v1330 = vadd.f32 %v1137, %v1329
    %v1331 = vpop.f32.mrb[0].mxu0
    %v1332 = vadd.f32 %v1139, %v1331
    %v1333 = vpop.f32.mrb[0].mxu0
    %v1334 = vadd.f32 %v1141, %v1333
    %v1335 = vpop.f32.mrb[0].mxu0
    %v1336 = vadd.f32 %v1143, %v1335
    %1337 = vmatprep.mubr.bf16.mxu0 %v205
    %1338 = vmatmul.mubr.bf16.gmra.mrb[0].mxu0 %v204
    %v1339 = vpop.f32.mrb[0].mxu0
    %v1340 = vadd.f32 %v1147, %v1339
    %v1341 = vpop.f32.mrb[0].mxu0
    %v1342 = vadd.f32 %v1149, %v1341
    %v1343 = vpop.f32.mrb[0].mxu0
    %v1344 = vadd.f32 %v1151, %v1343
    %v1345 = vpop.f32.mrb[0].mxu0
    %v1346 = vadd.f32 %v1153, %v1345
    %1347 = vmatprep.mubr.bf16.mxu0 %v209
    %1348 = vmatmul.mubr.bf16.gmra.mrb[0].mxu0 %v208
    %v1349 = vpop.f32.mrb[0].mxu0
    %v1350 = vadd.f32 %v1157, %v1349
    %v1351 = vpop.f32.mrb[0].mxu0
    %v1352 = vadd.f32 %v1159, %v1351
    %v1353 = vpop.f32.mrb[0].mxu0
    %v1354 = vadd.f32 %v1161, %v1353
    %v1355 = vpop.f32.mrb[0].mxu0
    %v1356 = vadd.f32 %v1163, %v1355
    %1357 = vmatprep.mubr.bf16.mxu0 %v213
    %1358 = vmatmul.mubr.bf16.gmra.mrb[0].mxu0 %v212
    %v1359 = vpop.f32.mrb[0].mxu0
    %v1360 = vadd.f32 %v1167, %v1359
    %v1361 = vpop.f32.mrb[0].mxu0
    %v1362 = vadd.f32 %v1169, %v1361
    %v1363 = vpop.f32.mrb[0].mxu0
    %v1364 = vadd.f32 %v1171, %v1363
    %v1365 = vpop.f32.mrb[0].mxu0
    %v1366 = vadd.f32 %v1173, %v1365
    %1367 = vdwg.mxu0
    %1368 = vmatprep.subr.bf16.mxu0 %v729
    %1369 = vmatpush1.bf16.msra.mxu0 %v728
    %1370 = vmatprep.subr.bf16.mxu0 %v733
    %1371 = vmatpush1.bf16.msra.mxu0 %v732
    %1372 = vmatprep.subr.bf16.mxu0 %v737
    %1373 = vmatpush1.bf16.msra.mxu0 %v736
    %1374 = vmatprep.subr.bf16.mxu0 %v741
    %1375 = vmatpush1.bf16.msra.mxu0 %v740
    %1376 = vmatprep.subr.bf16.mxu0 %v745
    %1377 = vmatpush1.bf16.msra.mxu0 %v744
    %1378 = vmatprep.subr.bf16.mxu0 %v749
    %1379 = vmatpush1.bf16.msra.mxu0 %v748
    %1380 = vmatprep.subr.bf16.mxu0 %v753
    %1381 = vmatpush1.bf16.msra.mxu0 %v752
    %1382 = vmatprep.subr.bf16.mxu0 %v757
    %1383 = vmatpush1.bf16.msra.mxu0 %v756
    %1384 = vmatprep.subr.bf16.mxu0 %v761
    %1385 = vmatpush1.bf16.msra.mxu0 %v760
    %1386 = vmatprep.subr.bf16.mxu0 %v765
    %1387 = vmatpush1.bf16.msra.mxu0 %v764
    %1388 = vmatprep.subr.bf16.mxu0 %v769
    %1389 = vmatpush1.bf16.msra.mxu0 %v768
    %1390 = vmatprep.subr.bf16.mxu0 %v773
    %1391 = vmatpush1.bf16.msra.mxu0 %v772
    %1392 = vmatprep.subr.bf16.mxu0 %v777
    %1393 = vmatpush1.bf16.msra.mxu0 %v776
    %1394 = vmatprep.subr.bf16.mxu0 %v781
    %1395 = vmatpush1.bf16.msra.mxu0 %v780
    %1396 = vmatprep.subr.bf16.mxu0 %v785
    %1397 = vmatpush1.bf16.msra.mxu0 %v784
    %1398 = vmatprep.subr.bf16.mxu0 %v789
    %1399 = vmatpush1.bf16.msra.mxu0 %v788
    %1400 = vmatprep.mubr.bf16.mxu0 %v151
    %1401 = vmatmul.mubr.bf16.gmra.mrb[0].mxu0 %v150
    %v1402 = vpop.f32.mrb[0].mxu0
    %v1403 = vadd.f32 0.0, %v1402
    %v1404 = vpop.f32.mrb[0].mxu0
    %v1405 = vadd.f32 0.0, %v1404
    %v1406 = vpop.f32.mrb[0].mxu0
    %v1407 = vadd.f32 0.0, %v1406
    %v1408 = vpop.f32.mrb[0].mxu0
    %v1409 = vadd.f32 0.0, %v1408
    %1410 = vmatprep.mubr.bf16.mxu0 %v155
    %1411 = vmatmul.mubr.bf16.gmra.mrb[0].mxu0 %v154
    %v1412 = vpop.f32.mrb[0].mxu0
    %v1413 = vadd.f32 0.0, %v1412
    %v1414 = vpop.f32.mrb[0].mxu0
    %v1415 = vadd.f32 0.0, %v1414
    %v1416 = vpop.f32.mrb[0].mxu0
    %v1417 = vadd.f32 0.0, %v1416
    %v1418 = vpop.f32.mrb[0].mxu0
    %v1419 = vadd.f32 0.0, %v1418
    %1420 = vmatprep.mubr.bf16.mxu0 %v159
    %1421 = vmatmul.mubr.bf16.gmra.mrb[0].mxu0 %v158
    %v1422 = vpop.f32.mrb[0].mxu0
    %v1423 = vadd.f32 0.0, %v1422
    %v1424 = vpop.f32.mrb[0].mxu0
    %v1425 = vadd.f32 0.0, %v1424
    %v1426 = vpop.f32.mrb[0].mxu0
    %v1427 = vadd.f32 0.0, %v1426
    %v1428 = vpop.f32.mrb[0].mxu0
    %v1429 = vadd.f32 0.0, %v1428
    %1430 = vmatprep.mubr.bf16.mxu0 %v163
    %1431 = vmatmul.mubr.bf16.gmra.mrb[0].mxu0 %v162
    %v1432 = vpop.f32.mrb[0].mxu0
    %v1433 = vadd.f32 0.0, %v1432
    %v1434 = vpop.f32.mrb[0].mxu0
    %v1435 = vadd.f32 0.0, %v1434
    %v1436 = vpop.f32.mrb[0].mxu0
    %v1437 = vadd.f32 0.0, %v1436
    %v1438 = vpop.f32.mrb[0].mxu0
    %v1439 = vadd.f32 0.0, %v1438
    %1440 = vmatprep.mubr.bf16.mxu0 %v167
    %1441 = vmatmul.mubr.bf16.gmra.mrb[0].mxu0 %v166
    %v1442 = vpop.f32.mrb[0].mxu0
    %v1443 = vadd.f32 0.0, %v1442
    %v1444 = vpop.f32.mrb[0].mxu0
    %v1445 = vadd.f32 0.0, %v1444
    %v1446 = vpop.f32.mrb[0].mxu0
    %v1447 = vadd.f32 0.0, %v1446
    %v1448 = vpop.f32.mrb[0].mxu0
    %v1449 = vadd.f32 0.0, %v1448
    %1450 = vmatprep.mubr.bf16.mxu0 %v171
    %1451 = vmatmul.mubr.bf16.gmra.mrb[0].mxu0 %v170
    %v1452 = vpop.f32.mrb[0].mxu0
    %v1453 = vadd.f32 0.0, %v1452
    %v1454 = vpop.f32.mrb[0].mxu0
    %v1455 = vadd.f32 0.0, %v1454
    %v1456 = vpop.f32.mrb[0].mxu0
    %v1457 = vadd.f32 0.0, %v1456
    %v1458 = vpop.f32.mrb[0].mxu0
    %v1459 = vadd.f32 0.0, %v1458
    %1460 = vmatprep.mubr.bf16.mxu0 %v175
    %1461 = vmatmul.mubr.bf16.gmra.mrb[0].mxu0 %v174
    %v1462 = vpop.f32.mrb[0].mxu0
    %v1463 = vadd.f32 0.0, %v1462
    %v1464 = vpop.f32.mrb[0].mxu0
    %v1465 = vadd.f32 0.0, %v1464
    %v1466 = vpop.f32.mrb[0].mxu0
    %v1467 = vadd.f32 0.0, %v1466
    %v1468 = vpop.f32.mrb[0].mxu0
    %v1469 = vadd.f32 0.0, %v1468
    %1470 = vmatprep.mubr.bf16.mxu0 %v179
    %1471 = vmatmul.mubr.bf16.gmra.mrb[0].mxu0 %v178
    %v1472 = vpop.f32.mrb[0].mxu0
    %v1473 = vadd.f32 0.0, %v1472
    %v1474 = vpop.f32.mrb[0].mxu0
    %v1475 = vadd.f32 0.0, %v1474
    %v1476 = vpop.f32.mrb[0].mxu0
    %v1477 = vadd.f32 0.0, %v1476
    %v1478 = vpop.f32.mrb[0].mxu0
    %v1479 = vadd.f32 0.0, %v1478
    %1480 = vmatprep.mubr.bf16.mxu0 %v183
    %1481 = vmatmul.mubr.bf16.gmra.mrb[0].mxu0 %v182
    %v1482 = vpop.f32.mrb[0].mxu0
    %v1483 = vadd.f32 0.0, %v1482
    %v1484 = vpop.f32.mrb[0].mxu0
    %v1485 = vadd.f32 0.0, %v1484
    %v1486 = vpop.f32.mrb[0].mxu0
    %v1487 = vadd.f32 0.0, %v1486
    %v1488 = vpop.f32.mrb[0].mxu0
    %v1489 = vadd.f32 0.0, %v1488
    %1490 = vmatprep.mubr.bf16.mxu0 %v187
    %1491 = vmatmul.mubr.bf16.gmra.mrb[0].mxu0 %v186
    %v1492 = vpop.f32.mrb[0].mxu0
    %v1493 = vadd.f32 0.0, %v1492
    %v1494 = vpop.f32.mrb[0].mxu0
    %v1495 = vadd.f32 0.0, %v1494
    %v1496 = vpop.f32.mrb[0].mxu0
    %v1497 = vadd.f32 0.0, %v1496
    %v1498 = vpop.f32.mrb[0].mxu0
    %v1499 = vadd.f32 0.0, %v1498
    %1500 = vmatprep.mubr.bf16.mxu0 %v191
    %1501 = vmatmul.mubr.bf16.gmra.mrb[0].mxu0 %v190
    %v1502 = vpop.f32.mrb[0].mxu0
    %v1503 = vadd.f32 0.0, %v1502
    %v1504 = vpop.f32.mrb[0].mxu0
    %v1505 = vadd.f32 0.0, %v1504
    %v1506 = vpop.f32.mrb[0].mxu0
    %v1507 = vadd.f32 0.0, %v1506
    %v1508 = vpop.f32.mrb[0].mxu0
    %v1509 = vadd.f32 0.0, %v1508
    %1510 = vmatprep.mubr.bf16.mxu0 %v195
    %1511 = vmatmul.mubr.bf16.gmra.mrb[0].mxu0 %v194
    %v1512 = vpop.f32.mrb[0].mxu0
    %v1513 = vadd.f32 0.0, %v1512
    %v1514 = vpop.f32.mrb[0].mxu0
    %v1515 = vadd.f32 0.0, %v1514
    %v1516 = vpop.f32.mrb[0].mxu0
    %v1517 = vadd.f32 0.0, %v1516
    %v1518 = vpop.f32.mrb[0].mxu0
    %v1519 = vadd.f32 0.0, %v1518
    %1520 = vmatprep.mubr.bf16.mxu0 %v199
    %1521 = vmatmul.mubr.bf16.gmra.mrb[0].mxu0 %v198
    %v1522 = vpop.f32.mrb[0].mxu0
    %v1523 = vadd.f32 0.0, %v1522
    %v1524 = vpop.f32.mrb[0].mxu0
    %v1525 = vadd.f32 0.0, %v1524
    %v1526 = vpop.f32.mrb[0].mxu0
    %v1527 = vadd.f32 0.0, %v1526
    %v1528 = vpop.f32.mrb[0].mxu0
    %v1529 = vadd.f32 0.0, %v1528
    %1530 = vmatprep.mubr.bf16.mxu0 %v203
    %1531 = vmatmul.mubr.bf16.gmra.mrb[0].mxu0 %v202
    %v1532 = vpop.f32.mrb[0].mxu0
    %v1533 = vadd.f32 0.0, %v1532
    %v1534 = vpop.f32.mrb[0].mxu0
    %v1535 = vadd.f32 0.0, %v1534
    %v1536 = vpop.f32.mrb[0].mxu0
    %v1537 = vadd.f32 0.0, %v1536
    %v1538 = vpop.f32.mrb[0].mxu0
    %v1539 = vadd.f32 0.0, %v1538
    %1540 = vmatprep.mubr.bf16.mxu0 %v207
    %1541 = vmatmul.mubr.bf16.gmra.mrb[0].mxu0 %v206
    %v1542 = vpop.f32.mrb[0].mxu0
    %v1543 = vadd.f32 0.0, %v1542
    %v1544 = vpop.f32.mrb[0].mxu0
    %v1545 = vadd.f32 0.0, %v1544
    %v1546 = vpop.f32.mrb[0].mxu0
    %v1547 = vadd.f32 0.0, %v1546
    %v1548 = vpop.f32.mrb[0].mxu0
    %v1549 = vadd.f32 0.0, %v1548
    %1550 = vmatprep.mubr.bf16.mxu0 %v211
    %1551 = vmatmul.mubr.bf16.gmra.mrb[0].mxu0 %v210
    %v1552 = vpop.f32.mrb[0].mxu0
    %v1553 = vadd.f32 0.0, %v1552
    %v1554 = vpop.f32.mrb[0].mxu0
    %v1555 = vadd.f32 0.0, %v1554
    %v1556 = vpop.f32.mrb[0].mxu0
    %v1557 = vadd.f32 0.0, %v1556
    %v1558 = vpop.f32.mrb[0].mxu0
    %v1559 = vadd.f32 0.0, %v1558
    %1560 = vdwg.mxu0
    %1561 = vmatprep.subr.bf16.mxu0 %v793
    %1562 = vmatpush1.bf16.msra.mxu0 %v792
    %1563 = vmatprep.subr.bf16.mxu0 %v797
    %1564 = vmatpush1.bf16.msra.mxu0 %v796
    %1565 = vmatprep.subr.bf16.mxu0 %v801
    %1566 = vmatpush1.bf16.msra.mxu0 %v800
    %1567 = vmatprep.subr.bf16.mxu0 %v805
    %1568 = vmatpush1.bf16.msra.mxu0 %v804
    %1569 = vmatprep.subr.bf16.mxu0 %v809
    %1570 = vmatpush1.bf16.msra.mxu0 %v808
    %1571 = vmatprep.subr.bf16.mxu0 %v813
    %1572 = vmatpush1.bf16.msra.mxu0 %v812
    %1573 = vmatprep.subr.bf16.mxu0 %v817
    %1574 = vmatpush1.bf16.msra.mxu0 %v816
    %1575 = vmatprep.subr.bf16.mxu0 %v821
    %1576 = vmatpush1.bf16.msra.mxu0 %v820
    %1577 = vmatprep.subr.bf16.mxu0 %v825
    %1578 = vmatpush1.bf16.msra.mxu0 %v824
    %1579 = vmatprep.subr.bf16.mxu0 %v829
    %1580 = vmatpush1.bf16.msra.mxu0 %v828
    %1581 = vmatprep.subr.bf16.mxu0 %v833
    %1582 = vmatpush1.bf16.msra.mxu0 %v832
    %1583 = vmatprep.subr.bf16.mxu0 %v837
    %1584 = vmatpush1.bf16.msra.mxu0 %v836
    %1585 = vmatprep.subr.bf16.mxu0 %v841
    %1586 = vmatpush1.bf16.msra.mxu0 %v840
    %1587 = vmatprep.subr.bf16.mxu0 %v845
    %1588 = vmatpush1.bf16.msra.mxu0 %v844
    %1589 = vmatprep.subr.bf16.mxu0 %v849
    %1590 = vmatpush1.bf16.msra.mxu0 %v848
    %1591 = vmatprep.subr.bf16.mxu0 %v853
    %1592 = vmatpush1.bf16.msra.mxu0 %v852
    %1593 = vmatprep.mubr.bf16.mxu0 %v153
    %1594 = vmatmul.mubr.bf16.gmra.mrb[0].mxu0 %v152
    %v1595 = vpop.f32.mrb[0].mxu0
    %v1596 = vadd.f32 %v1403, %v1595
    %v1597 = vpop.f32.mrb[0].mxu0
    %v1598 = vadd.f32 %v1405, %v1597
    %v1599 = vpop.f32.mrb[0].mxu0
    %v1600 = vadd.f32 %v1407, %v1599
    %v1601 = vpop.f32.mrb[0].mxu0
    %v1602 = vadd.f32 %v1409, %v1601
    %1603 = vmatprep.mubr.bf16.mxu0 %v157
    %1604 = vmatmul.mubr.bf16.gmra.mrb[0].mxu0 %v156
    %v1605 = vpop.f32.mrb[0].mxu0
    %v1606 = vadd.f32 %v1413, %v1605
    %v1607 = vpop.f32.mrb[0].mxu0
    %v1608 = vadd.f32 %v1415, %v1607
    %v1609 = vpop.f32.mrb[0].mxu0
    %v1610 = vadd.f32 %v1417, %v1609
    %v1611 = vpop.f32.mrb[0].mxu0
    %v1612 = vadd.f32 %v1419, %v1611
    %1613 = vmatprep.mubr.bf16.mxu0 %v161
    %1614 = vmatmul.mubr.bf16.gmra.mrb[0].mxu0 %v160
    %v1615 = vpop.f32.mrb[0].mxu0
    %v1616 = vadd.f32 %v1423, %v1615
    %v1617 = vpop.f32.mrb[0].mxu0
    %v1618 = vadd.f32 %v1425, %v1617
    %v1619 = vpop.f32.mrb[0].mxu0
    %v1620 = vadd.f32 %v1427, %v1619
    %v1621 = vpop.f32.mrb[0].mxu0
    %v1622 = vadd.f32 %v1429, %v1621
    %1623 = vmatprep.mubr.bf16.mxu0 %v165
    %1624 = vmatmul.mubr.bf16.gmra.mrb[0].mxu0 %v164
    %v1625 = vpop.f32.mrb[0].mxu0
    %v1626 = vadd.f32 %v1433, %v1625
    %v1627 = vpop.f32.mrb[0].mxu0
    %v1628 = vadd.f32 %v1435, %v1627
    %v1629 = vpop.f32.mrb[0].mxu0
    %v1630 = vadd.f32 %v1437, %v1629
    %v1631 = vpop.f32.mrb[0].mxu0
    %v1632 = vadd.f32 %v1439, %v1631
    %1633 = vmatprep.mubr.bf16.mxu0 %v169
    %1634 = vmatmul.mubr.bf16.gmra.mrb[0].mxu0 %v168
    %v1635 = vpop.f32.mrb[0].mxu0
    %v1636 = vadd.f32 %v1443, %v1635
    %v1637 = vpop.f32.mrb[0].mxu0
    %v1638 = vadd.f32 %v1445, %v1637
    %v1639 = vpop.f32.mrb[0].mxu0
    %v1640 = vadd.f32 %v1447, %v1639
    %v1641 = vpop.f32.mrb[0].mxu0
    %v1642 = vadd.f32 %v1449, %v1641
    %1643 = vmatprep.mubr.bf16.mxu0 %v173
    %1644 = vmatmul.mubr.bf16.gmra.mrb[0].mxu0 %v172
    %v1645 = vpop.f32.mrb[0].mxu0
    %v1646 = vadd.f32 %v1453, %v1645
    %v1647 = vpop.f32.mrb[0].mxu0
    %v1648 = vadd.f32 %v1455, %v1647
    %v1649 = vpop.f32.mrb[0].mxu0
    %v1650 = vadd.f32 %v1457, %v1649
    %v1651 = vpop.f32.mrb[0].mxu0
    %v1652 = vadd.f32 %v1459, %v1651
    %1653 = vmatprep.mubr.bf16.mxu0 %v177
    %1654 = vmatmul.mubr.bf16.gmra.mrb[0].mxu0 %v176
    %v1655 = vpop.f32.mrb[0].mxu0
    %v1656 = vadd.f32 %v1463, %v1655
    %v1657 = vpop.f32.mrb[0].mxu0
    %v1658 = vadd.f32 %v1465, %v1657
    %v1659 = vpop.f32.mrb[0].mxu0
    %v1660 = vadd.f32 %v1467, %v1659
    %v1661 = vpop.f32.mrb[0].mxu0
    %v1662 = vadd.f32 %v1469, %v1661
    %1663 = vmatprep.mubr.bf16.mxu0 %v181
    %1664 = vmatmul.mubr.bf16.gmra.mrb[0].mxu0 %v180
    %v1665 = vpop.f32.mrb[0].mxu0
    %v1666 = vadd.f32 %v1473, %v1665
    %v1667 = vpop.f32.mrb[0].mxu0
    %v1668 = vadd.f32 %v1475, %v1667
    %v1669 = vpop.f32.mrb[0].mxu0
    %v1670 = vadd.f32 %v1477, %v1669
    %v1671 = vpop.f32.mrb[0].mxu0
    %v1672 = vadd.f32 %v1479, %v1671
    %1673 = vmatprep.mubr.bf16.mxu0 %v185
    %1674 = vmatmul.mubr.bf16.gmra.mrb[0].mxu0 %v184
    %v1675 = vpop.f32.mrb[0].mxu0
    %v1676 = vadd.f32 %v1483, %v1675
    %v1677 = vpop.f32.mrb[0].mxu0
    %v1678 = vadd.f32 %v1485, %v1677
    %v1679 = vpop.f32.mrb[0].mxu0
    %v1680 = vadd.f32 %v1487, %v1679
    %v1681 = vpop.f32.mrb[0].mxu0
    %v1682 = vadd.f32 %v1489, %v1681
    %1683 = vmatprep.mubr.bf16.mxu0 %v189
    %1684 = vmatmul.mubr.bf16.gmra.mrb[0].mxu0 %v188
    %v1685 = vpop.f32.mrb[0].mxu0
    %v1686 = vadd.f32 %v1493, %v1685
    %v1687 = vpop.f32.mrb[0].mxu0
    %v1688 = vadd.f32 %v1495, %v1687
    %v1689 = vpop.f32.mrb[0].mxu0
    %v1690 = vadd.f32 %v1497, %v1689
    %v1691 = vpop.f32.mrb[0].mxu0
    %v1692 = vadd.f32 %v1499, %v1691
    %1693 = vmatprep.mubr.bf16.mxu0 %v193
    %1694 = vmatmul.mubr.bf16.gmra.mrb[0].mxu0 %v192
    %v1695 = vpop.f32.mrb[0].mxu0
    %v1696 = vadd.f32 %v1503, %v1695
    %v1697 = vpop.f32.mrb[0].mxu0
    %v1698 = vadd.f32 %v1505, %v1697
    %v1699 = vpop.f32.mrb[0].mxu0
    %v1700 = vadd.f32 %v1507, %v1699
    %v1701 = vpop.f32.mrb[0].mxu0
    %v1702 = vadd.f32 %v1509, %v1701
    %1703 = vmatprep.mubr.bf16.mxu0 %v197
    %1704 = vmatmul.mubr.bf16.gmra.mrb[0].mxu0 %v196
    %v1705 = vpop.f32.mrb[0].mxu0
    %v1706 = vadd.f32 %v1513, %v1705
    %v1707 = vpop.f32.mrb[0].mxu0
    %v1708 = vadd.f32 %v1515, %v1707
    %v1709 = vpop.f32.mrb[0].mxu0
    %v1710 = vadd.f32 %v1517, %v1709
    %v1711 = vpop.f32.mrb[0].mxu0
    %v1712 = vadd.f32 %v1519, %v1711
    %1713 = vmatprep.mubr.bf16.mxu0 %v201
    %1714 = vmatmul.mubr.bf16.gmra.mrb[0].mxu0 %v200
    %v1715 = vpop.f32.mrb[0].mxu0
    %v1716 = vadd.f32 %v1523, %v1715
    %v1717 = vpop.f32.mrb[0].mxu0
    %v1718 = vadd.f32 %v1525, %v1717
    %v1719 = vpop.f32.mrb[0].mxu0
    %v1720 = vadd.f32 %v1527, %v1719
    %v1721 = vpop.f32.mrb[0].mxu0
    %v1722 = vadd.f32 %v1529, %v1721
    %1723 = vmatprep.mubr.bf16.mxu0 %v205
    %1724 = vmatmul.mubr.bf16.gmra.mrb[0].mxu0 %v204
    %v1725 = vpop.f32.mrb[0].mxu0
    %v1726 = vadd.f32 %v1533, %v1725
    %v1727 = vpop.f32.mrb[0].mxu0
    %v1728 = vadd.f32 %v1535, %v1727
    %v1729 = vpop.f32.mrb[0].mxu0
    %v1730 = vadd.f32 %v1537, %v1729
    %v1731 = vpop.f32.mrb[0].mxu0
    %v1732 = vadd.f32 %v1539, %v1731
    %1733 = vmatprep.mubr.bf16.mxu0 %v209
    %1734 = vmatmul.mubr.bf16.gmra.mrb[0].mxu0 %v208
    %v1735 = vpop.f32.mrb[0].mxu0
    %v1736 = vadd.f32 %v1543, %v1735
    %v1737 = vpop.f32.mrb[0].mxu0
    %v1738 = vadd.f32 %v1545, %v1737
    %v1739 = vpop.f32.mrb[0].mxu0
    %v1740 = vadd.f32 %v1547, %v1739
    %v1741 = vpop.f32.mrb[0].mxu0
    %v1742 = vadd.f32 %v1549, %v1741
    %1743 = vmatprep.mubr.bf16.mxu0 %v213
    %1744 = vmatmul.mubr.bf16.gmra.mrb[0].mxu0 %v212
    %v1745 = vpop.f32.mrb[0].mxu0
    %v1746 = vadd.f32 %v1553, %v1745
    %v1747 = vpop.f32.mrb[0].mxu0
    %v1748 = vadd.f32 %v1555, %v1747
    %v1749 = vpop.f32.mrb[0].mxu0
    %v1750 = vadd.f32 %v1557, %v1749
    %v1751 = vpop.f32.mrb[0].mxu0
    %v1752 = vadd.f32 %v1559, %v1751
    %1753 = vdwg.mxu0
    %v1754 = vld [vmem:[%s2] sm:$0xf]
    %v1756 = vlaneseq
    %v1757 = vshrl.u32 %v1756, 7
    %v1758 = vsub.s32 0, %v1757
    %v1759 = vrot.slane %v1754, %v1758
    %v1760 = vlaneseq
    %v1761 = vshrl.u32 %v1760, 7
    %v1762 = vsub.s32 1, %v1761
    %v1763 = vrot.slane %v1754, %v1762
    %v1764 = vlaneseq
    %v1765 = vshrl.u32 %v1764, 7
    %v1766 = vsub.s32 2, %v1765
    %v1767 = vrot.slane %v1754, %v1766
    %v1768 = vlaneseq
    %v1769 = vshrl.u32 %v1768, 7
    %v1770 = vsub.s32 3, %v1769
    %v1771 = vrot.slane %v1754, %v1770
    %v1776 = vmul.f32 %v1210, %v1759
    %v1777 = vmul.f32 %v1212, %v1763
    %v1778 = vmul.f32 %v1596, %v1767
    %v1779 = vmul.f32 %v1598, %v1771
    %v1780 = vmul.f32 %v1214, %v1759
    %v1781 = vmul.f32 %v1216, %v1763
    %v1782 = vmul.f32 %v1600, %v1767
    %v1783 = vmul.f32 %v1602, %v1771
    %v1784 = vmul.f32 %v1220, %v1759
    %v1785 = vmul.f32 %v1222, %v1763
    %v1786 = vmul.f32 %v1606, %v1767
    %v1787 = vmul.f32 %v1608, %v1771
    %v1788 = vmul.f32 %v1224, %v1759
    %v1789 = vmul.f32 %v1226, %v1763
    %v1790 = vmul.f32 %v1610, %v1767
    %v1791 = vmul.f32 %v1612, %v1771
    %v1792 = vmul.f32 %v1230, %v1759
    %v1793 = vmul.f32 %v1232, %v1763
    %v1794 = vmul.f32 %v1616, %v1767
    %v1795 = vmul.f32 %v1618, %v1771
    %v1796 = vmul.f32 %v1234, %v1759
    %v1797 = vmul.f32 %v1236, %v1763
    %v1798 = vmul.f32 %v1620, %v1767
    %v1799 = vmul.f32 %v1622, %v1771
    %v1800 = vmul.f32 %v1240, %v1759
    %v1801 = vmul.f32 %v1242, %v1763
    %v1802 = vmul.f32 %v1626, %v1767
    %v1803 = vmul.f32 %v1628, %v1771
    %v1804 = vmul.f32 %v1244, %v1759
    %v1805 = vmul.f32 %v1246, %v1763
    %v1806 = vmul.f32 %v1630, %v1767
    %v1807 = vmul.f32 %v1632, %v1771
    %v1808 = vmul.f32 %v1250, %v1759
    %v1809 = vmul.f32 %v1252, %v1763
    %v1810 = vmul.f32 %v1636, %v1767
    %v1811 = vmul.f32 %v1638, %v1771
    %v1812 = vmul.f32 %v1254, %v1759
    %v1813 = vmul.f32 %v1256, %v1763
    %v1814 = vmul.f32 %v1640, %v1767
    %v1815 = vmul.f32 %v1642, %v1771
    %v1816 = vmul.f32 %v1260, %v1759
    %v1817 = vmul.f32 %v1262, %v1763
    %v1818 = vmul.f32 %v1646, %v1767
    %v1819 = vmul.f32 %v1648, %v1771
    %v1820 = vmul.f32 %v1264, %v1759
    %v1821 = vmul.f32 %v1266, %v1763
    %v1822 = vmul.f32 %v1650, %v1767
    %v1823 = vmul.f32 %v1652, %v1771
    %v1824 = vmul.f32 %v1270, %v1759
    %v1825 = vmul.f32 %v1272, %v1763
    %v1826 = vmul.f32 %v1656, %v1767
    %v1827 = vmul.f32 %v1658, %v1771
    %v1828 = vmul.f32 %v1274, %v1759
    %v1829 = vmul.f32 %v1276, %v1763
    %v1830 = vmul.f32 %v1660, %v1767
    %v1831 = vmul.f32 %v1662, %v1771
    %v1832 = vmul.f32 %v1280, %v1759
    %v1833 = vmul.f32 %v1282, %v1763
    %v1834 = vmul.f32 %v1666, %v1767
    %v1835 = vmul.f32 %v1668, %v1771
    %v1836 = vmul.f32 %v1284, %v1759
    %v1837 = vmul.f32 %v1286, %v1763
    %v1838 = vmul.f32 %v1670, %v1767
    %v1839 = vmul.f32 %v1672, %v1771
    %v1840 = vmul.f32 %v1290, %v1759
    %v1841 = vmul.f32 %v1292, %v1763
    %v1842 = vmul.f32 %v1676, %v1767
    %v1843 = vmul.f32 %v1678, %v1771
    %v1844 = vmul.f32 %v1294, %v1759
    %v1845 = vmul.f32 %v1296, %v1763
    %v1846 = vmul.f32 %v1680, %v1767
    %v1847 = vmul.f32 %v1682, %v1771
    %v1848 = vmul.f32 %v1300, %v1759
    %v1849 = vmul.f32 %v1302, %v1763
    %v1850 = vmul.f32 %v1686, %v1767
    %v1851 = vmul.f32 %v1688, %v1771
    %v1852 = vmul.f32 %v1304, %v1759
    %v1853 = vmul.f32 %v1306, %v1763
    %v1854 = vmul.f32 %v1690, %v1767
    %v1855 = vmul.f32 %v1692, %v1771
    %v1856 = vmul.f32 %v1310, %v1759
    %v1857 = vmul.f32 %v1312, %v1763
    %v1858 = vmul.f32 %v1696, %v1767
    %v1859 = vmul.f32 %v1698, %v1771
    %v1860 = vmul.f32 %v1314, %v1759
    %v1861 = vmul.f32 %v1316, %v1763
    %v1862 = vmul.f32 %v1700, %v1767
    %v1863 = vmul.f32 %v1702, %v1771
    %v1864 = vmul.f32 %v1320, %v1759
    %v1865 = vmul.f32 %v1322, %v1763
    %v1866 = vmul.f32 %v1706, %v1767
    %v1867 = vmul.f32 %v1708, %v1771
    %v1868 = vmul.f32 %v1324, %v1759
    %v1869 = vmul.f32 %v1326, %v1763
    %v1870 = vmul.f32 %v1710, %v1767
    %v1871 = vmul.f32 %v1712, %v1771
    %v1872 = vmul.f32 %v1330, %v1759
    %v1873 = vmul.f32 %v1332, %v1763
    %v1874 = vmul.f32 %v1716, %v1767
    %v1875 = vmul.f32 %v1718, %v1771
    %v1876 = vmul.f32 %v1334, %v1759
    %v1877 = vmul.f32 %v1336, %v1763
    %v1878 = vmul.f32 %v1720, %v1767
    %v1879 = vmul.f32 %v1722, %v1771
    %v1880 = vmul.f32 %v1340, %v1759
    %v1881 = vmul.f32 %v1342, %v1763
    %v1882 = vmul.f32 %v1726, %v1767
    %v1883 = vmul.f32 %v1728, %v1771
    %v1884 = vmul.f32 %v1344, %v1759
    %v1885 = vmul.f32 %v1346, %v1763
    %v1886 = vmul.f32 %v1730, %v1767
    %v1887 = vmul.f32 %v1732, %v1771
    %v1888 = vmul.f32 %v1350, %v1759
    %v1889 = vmul.f32 %v1352, %v1763
    %v1890 = vmul.f32 %v1736, %v1767
    %v1891 = vmul.f32 %v1738, %v1771
    %v1892 = vmul.f32 %v1354, %v1759
    %v1893 = vmul.f32 %v1356, %v1763
    %v1894 = vmul.f32 %v1740, %v1767
    %v1895 = vmul.f32 %v1742, %v1771
    %v1896 = vmul.f32 %v1360, %v1759
    %v1897 = vmul.f32 %v1362, %v1763
    %v1898 = vmul.f32 %v1746, %v1767
    %v1899 = vmul.f32 %v1748, %v1771
    %v1900 = vmul.f32 %v1364, %v1759
    %v1901 = vmul.f32 %v1366, %v1763
    %v1902 = vmul.f32 %v1750, %v1767
    %v1903 = vmul.f32 %v1752, %v1771
    %v1904 = vld [vmem:[%s3] sm:$0xf]
    %v1906 = vlaneseq
    %v1907 = vshrl.u32 %v1906, 7
    %v1908 = vsub.s32 0, %v1907
    %v1909 = vrot.slane %v1904, %v1908
    %v1910 = vlaneseq
    %v1911 = vshrl.u32 %v1910, 7
    %v1912 = vsub.s32 1, %v1911
    %v1913 = vrot.slane %v1904, %v1912
    %v1914 = vlaneseq
    %v1915 = vshrl.u32 %v1914, 7
    %v1916 = vsub.s32 2, %v1915
    %v1917 = vrot.slane %v1904, %v1916
    %v1918 = vlaneseq
    %v1919 = vshrl.u32 %v1918, 7
    %v1920 = vsub.s32 3, %v1919
    %v1921 = vrot.slane %v1904, %v1920
    %v1926 = vadd.f32 %v1776, %v1909
    %v1927 = vadd.f32 %v1777, %v1913
    %v1928 = vadd.f32 %v1778, %v1917
    %v1929 = vadd.f32 %v1779, %v1921
    %v1930 = vadd.f32 %v1780, %v1909
    %v1931 = vadd.f32 %v1781, %v1913
    %v1932 = vadd.f32 %v1782, %v1917
    %v1933 = vadd.f32 %v1783, %v1921
    %v1934 = vadd.f32 %v1784, %v1909
    %v1935 = vadd.f32 %v1785, %v1913
    %v1936 = vadd.f32 %v1786, %v1917
    %v1937 = vadd.f32 %v1787, %v1921
    %v1938 = vadd.f32 %v1788, %v1909
    %v1939 = vadd.f32 %v1789, %v1913
    %v1940 = vadd.f32 %v1790, %v1917
    %v1941 = vadd.f32 %v1791, %v1921
    %v1942 = vadd.f32 %v1792, %v1909
    %v1943 = vadd.f32 %v1793, %v1913
    %v1944 = vadd.f32 %v1794, %v1917
    %v1945 = vadd.f32 %v1795, %v1921
    %v1946 = vadd.f32 %v1796, %v1909
    %v1947 = vadd.f32 %v1797, %v1913
    %v1948 = vadd.f32 %v1798, %v1917
    %v1949 = vadd.f32 %v1799, %v1921
    %v1950 = vadd.f32 %v1800, %v1909
    %v1951 = vadd.f32 %v1801, %v1913
    %v1952 = vadd.f32 %v1802, %v1917
    %v1953 = vadd.f32 %v1803, %v1921
    %v1954 = vadd.f32 %v1804, %v1909
    %v1955 = vadd.f32 %v1805, %v1913
    %v1956 = vadd.f32 %v1806, %v1917
    %v1957 = vadd.f32 %v1807, %v1921
    %v1958 = vadd.f32 %v1808, %v1909
    %v1959 = vadd.f32 %v1809, %v1913
    %v1960 = vadd.f32 %v1810, %v1917
    %v1961 = vadd.f32 %v1811, %v1921
    %v1962 = vadd.f32 %v1812, %v1909
    %v1963 = vadd.f32 %v1813, %v1913
    %v1964 = vadd.f32 %v1814, %v1917
    %v1965 = vadd.f32 %v1815, %v1921
    %v1966 = vadd.f32 %v1816, %v1909
    %v1967 = vadd.f32 %v1817, %v1913
    %v1968 = vadd.f32 %v1818, %v1917
    %v1969 = vadd.f32 %v1819, %v1921
    %v1970 = vadd.f32 %v1820, %v1909
    %v1971 = vadd.f32 %v1821, %v1913
    %v1972 = vadd.f32 %v1822, %v1917
    %v1973 = vadd.f32 %v1823, %v1921
    %v1974 = vadd.f32 %v1824, %v1909
    %v1975 = vadd.f32 %v1825, %v1913
    %v1976 = vadd.f32 %v1826, %v1917
    %v1977 = vadd.f32 %v1827, %v1921
    %v1978 = vadd.f32 %v1828, %v1909
    %v1979 = vadd.f32 %v1829, %v1913
    %v1980 = vadd.f32 %v1830, %v1917
    %v1981 = vadd.f32 %v1831, %v1921
    %v1982 = vadd.f32 %v1832, %v1909
    %v1983 = vadd.f32 %v1833, %v1913
    %v1984 = vadd.f32 %v1834, %v1917
    %v1985 = vadd.f32 %v1835, %v1921
    %v1986 = vadd.f32 %v1836, %v1909
    %v1987 = vadd.f32 %v1837, %v1913
    %v1988 = vadd.f32 %v1838, %v1917
    %v1989 = vadd.f32 %v1839, %v1921
    %v1990 = vadd.f32 %v1840, %v1909
    %v1991 = vadd.f32 %v1841, %v1913
    %v1992 = vadd.f32 %v1842, %v1917
    %v1993 = vadd.f32 %v1843, %v1921
    %v1994 = vadd.f32 %v1844, %v1909
    %v1995 = vadd.f32 %v1845, %v1913
    %v1996 = vadd.f32 %v1846, %v1917
    %v1997 = vadd.f32 %v1847, %v1921
    %v1998 = vadd.f32 %v1848, %v1909
    %v1999 = vadd.f32 %v1849, %v1913
    %v2000 = vadd.f32 %v1850, %v1917
    %v2001 = vadd.f32 %v1851, %v1921
    %v2002 = vadd.f32 %v1852, %v1909
    %v2003 = vadd.f32 %v1853, %v1913
    %v2004 = vadd.f32 %v1854, %v1917
    %v2005 = vadd.f32 %v1855, %v1921
    %v2006 = vadd.f32 %v1856, %v1909
    %v2007 = vadd.f32 %v1857, %v1913
    %v2008 = vadd.f32 %v1858, %v1917
    %v2009 = vadd.f32 %v1859, %v1921
    %v2010 = vadd.f32 %v1860, %v1909
    %v2011 = vadd.f32 %v1861, %v1913
    %v2012 = vadd.f32 %v1862, %v1917
    %v2013 = vadd.f32 %v1863, %v1921
    %v2014 = vadd.f32 %v1864, %v1909
    %v2015 = vadd.f32 %v1865, %v1913
    %v2016 = vadd.f32 %v1866, %v1917
    %v2017 = vadd.f32 %v1867, %v1921
    %v2018 = vadd.f32 %v1868, %v1909
    %v2019 = vadd.f32 %v1869, %v1913
    %v2020 = vadd.f32 %v1870, %v1917
    %v2021 = vadd.f32 %v1871, %v1921
    %v2022 = vadd.f32 %v1872, %v1909
    %v2023 = vadd.f32 %v1873, %v1913
    %v2024 = vadd.f32 %v1874, %v1917
    %v2025 = vadd.f32 %v1875, %v1921
    %v2026 = vadd.f32 %v1876, %v1909
    %v2027 = vadd.f32 %v1877, %v1913
    %v2028 = vadd.f32 %v1878, %v1917
    %v2029 = vadd.f32 %v1879, %v1921
    %v2030 = vadd.f32 %v1880, %v1909
    %v2031 = vadd.f32 %v1881, %v1913
    %v2032 = vadd.f32 %v1882, %v1917
    %v2033 = vadd.f32 %v1883, %v1921
    %v2034 = vadd.f32 %v1884, %v1909
    %v2035 = vadd.f32 %v1885, %v1913
    %v2036 = vadd.f32 %v1886, %v1917
    %v2037 = vadd.f32 %v1887, %v1921
    %v2038 = vadd.f32 %v1888, %v1909
    %v2039 = vadd.f32 %v1889, %v1913
    %v2040 = vadd.f32 %v1890, %v1917
    %v2041 = vadd.f32 %v1891, %v1921
    %v2042 = vadd.f32 %v1892, %v1909
    %v2043 = vadd.f32 %v1893, %v1913
    %v2044 = vadd.f32 %v1894, %v1917
    %v2045 = vadd.f32 %v1895, %v1921
    %v2046 = vadd.f32 %v1896, %v1909
    %v2047 = vadd.f32 %v1897, %v1913
    %v2048 = vadd.f32 %v1898, %v1917
    %v2049 = vadd.f32 %v1899, %v1921
    %v2050 = vadd.f32 %v1900, %v1909
    %v2051 = vadd.f32 %v1901, %v1913
    %v2052 = vadd.f32 %v1902, %v1917
    %v2053 = vadd.f32 %v1903, %v1921
    %v2054 = vmax.f32 %v1926, 0.0
    %v2055 = vmax.f32 %v1927, 0.0
    %v2056 = vmax.f32 %v1928, 0.0
    %v2057 = vmax.f32 %v1929, 0.0
    %v2058 = vmax.f32 %v1930, 0.0
    %v2059 = vmax.f32 %v1931, 0.0
    %v2060 = vmax.f32 %v1932, 0.0
    %v2061 = vmax.f32 %v1933, 0.0
    %v2062 = vmax.f32 %v1934, 0.0
    %v2063 = vmax.f32 %v1935, 0.0
    %v2064 = vmax.f32 %v1936, 0.0
    %v2065 = vmax.f32 %v1937, 0.0
    %v2066 = vmax.f32 %v1938, 0.0
    %v2067 = vmax.f32 %v1939, 0.0
    %v2068 = vmax.f32 %v1940, 0.0
    %v2069 = vmax.f32 %v1941, 0.0
    %v2070 = vmax.f32 %v1942, 0.0
    %v2071 = vmax.f32 %v1943, 0.0
    %v2072 = vmax.f32 %v1944, 0.0
    %v2073 = vmax.f32 %v1945, 0.0
    %v2074 = vmax.f32 %v1946, 0.0
    %v2075 = vmax.f32 %v1947, 0.0
    %v2076 = vmax.f32 %v1948, 0.0
    %v2077 = vmax.f32 %v1949, 0.0
    %v2078 = vmax.f32 %v1950, 0.0
    %v2079 = vmax.f32 %v1951, 0.0
    %v2080 = vmax.f32 %v1952, 0.0
    %v2081 = vmax.f32 %v1953, 0.0
    %v2082 = vmax.f32 %v1954, 0.0
    %v2083 = vmax.f32 %v1955, 0.0
    %v2084 = vmax.f32 %v1956, 0.0
    %v2085 = vmax.f32 %v1957, 0.0
    %v2086 = vmax.f32 %v1958, 0.0
    %v2087 = vmax.f32 %v1959, 0.0
    %v2088 = vmax.f32 %v1960, 0.0
    %v2089 = vmax.f32 %v1961, 0.0
    %v2090 = vmax.f32 %v1962, 0.0
    %v2091 = vmax.f32 %v1963, 0.0
    %v2092 = vmax.f32 %v1964, 0.0
    %v2093 = vmax.f32 %v1965, 0.0
    %v2094 = vmax.f32 %v1966, 0.0
    %v2095 = vmax.f32 %v1967, 0.0
    %v2096 = vmax.f32 %v1968, 0.0
    %v2097 = vmax.f32 %v1969, 0.0
    %v2098 = vmax.f32 %v1970, 0.0
    %v2099 = vmax.f32 %v1971, 0.0
    %v2100 = vmax.f32 %v1972, 0.0
    %v2101 = vmax.f32 %v1973, 0.0
    %v2102 = vmax.f32 %v1974, 0.0
    %v2103 = vmax.f32 %v1975, 0.0
    %v2104 = vmax.f32 %v1976, 0.0
    %v2105 = vmax.f32 %v1977, 0.0
    %v2106 = vmax.f32 %v1978, 0.0
    %v2107 = vmax.f32 %v1979, 0.0
    %v2108 = vmax.f32 %v1980, 0.0
    %v2109 = vmax.f32 %v1981, 0.0
    %v2110 = vmax.f32 %v1982, 0.0
    %v2111 = vmax.f32 %v1983, 0.0
    %v2112 = vmax.f32 %v1984, 0.0
    %v2113 = vmax.f32 %v1985, 0.0
    %v2114 = vmax.f32 %v1986, 0.0
    %v2115 = vmax.f32 %v1987, 0.0
    %v2116 = vmax.f32 %v1988, 0.0
    %v2117 = vmax.f32 %v1989, 0.0
    %v2118 = vmax.f32 %v1990, 0.0
    %v2119 = vmax.f32 %v1991, 0.0
    %v2120 = vmax.f32 %v1992, 0.0
    %v2121 = vmax.f32 %v1993, 0.0
    %v2122 = vmax.f32 %v1994, 0.0
    %v2123 = vmax.f32 %v1995, 0.0
    %v2124 = vmax.f32 %v1996, 0.0
    %v2125 = vmax.f32 %v1997, 0.0
    %v2126 = vmax.f32 %v1998, 0.0
    %v2127 = vmax.f32 %v1999, 0.0
    %v2128 = vmax.f32 %v2000, 0.0
    %v2129 = vmax.f32 %v2001, 0.0
    %v2130 = vmax.f32 %v2002, 0.0
    %v2131 = vmax.f32 %v2003, 0.0
    %v2132 = vmax.f32 %v2004, 0.0
    %v2133 = vmax.f32 %v2005, 0.0
    %v2134 = vmax.f32 %v2006, 0.0
    %v2135 = vmax.f32 %v2007, 0.0
    %v2136 = vmax.f32 %v2008, 0.0
    %v2137 = vmax.f32 %v2009, 0.0
    %v2138 = vmax.f32 %v2010, 0.0
    %v2139 = vmax.f32 %v2011, 0.0
    %v2140 = vmax.f32 %v2012, 0.0
    %v2141 = vmax.f32 %v2013, 0.0
    %v2142 = vmax.f32 %v2014, 0.0
    %v2143 = vmax.f32 %v2015, 0.0
    %v2144 = vmax.f32 %v2016, 0.0
    %v2145 = vmax.f32 %v2017, 0.0
    %v2146 = vmax.f32 %v2018, 0.0
    %v2147 = vmax.f32 %v2019, 0.0
    %v2148 = vmax.f32 %v2020, 0.0
    %v2149 = vmax.f32 %v2021, 0.0
    %v2150 = vmax.f32 %v2022, 0.0
    %v2151 = vmax.f32 %v2023, 0.0
    %v2152 = vmax.f32 %v2024, 0.0
    %v2153 = vmax.f32 %v2025, 0.0
    %v2154 = vmax.f32 %v2026, 0.0
    %v2155 = vmax.f32 %v2027, 0.0
    %v2156 = vmax.f32 %v2028, 0.0
    %v2157 = vmax.f32 %v2029, 0.0
    %v2158 = vmax.f32 %v2030, 0.0
    %v2159 = vmax.f32 %v2031, 0.0
    %v2160 = vmax.f32 %v2032, 0.0
    %v2161 = vmax.f32 %v2033, 0.0
    %v2162 = vmax.f32 %v2034, 0.0
    %v2163 = vmax.f32 %v2035, 0.0
    %v2164 = vmax.f32 %v2036, 0.0
    %v2165 = vmax.f32 %v2037, 0.0
    %v2166 = vmax.f32 %v2038, 0.0
    %v2167 = vmax.f32 %v2039, 0.0
    %v2168 = vmax.f32 %v2040, 0.0
    %v2169 = vmax.f32 %v2041, 0.0
    %v2170 = vmax.f32 %v2042, 0.0
    %v2171 = vmax.f32 %v2043, 0.0
    %v2172 = vmax.f32 %v2044, 0.0
    %v2173 = vmax.f32 %v2045, 0.0
    %v2174 = vmax.f32 %v2046, 0.0
    %v2175 = vmax.f32 %v2047, 0.0
    %v2176 = vmax.f32 %v2048, 0.0
    %v2177 = vmax.f32 %v2049, 0.0
    %v2178 = vmax.f32 %v2050, 0.0
    %v2179 = vmax.f32 %v2051, 0.0
    %v2180 = vmax.f32 %v2052, 0.0
    %v2181 = vmax.f32 %v2053, 0.0
    %v2182 = vpack.c.bf16 %v2058, %v2054
    %v2183 = vpack.c.bf16 %v2059, %v2055
    %v2184 = vpack.c.bf16 %v2060, %v2056
    %v2185 = vpack.c.bf16 %v2061, %v2057
    %v2186 = vpack.c.bf16 %v2066, %v2062
    %v2187 = vpack.c.bf16 %v2067, %v2063
    %v2188 = vpack.c.bf16 %v2068, %v2064
    %v2189 = vpack.c.bf16 %v2069, %v2065
    %v2190 = vpack.c.bf16 %v2074, %v2070
    %v2191 = vpack.c.bf16 %v2075, %v2071
    %v2192 = vpack.c.bf16 %v2076, %v2072
    %v2193 = vpack.c.bf16 %v2077, %v2073
    %v2194 = vpack.c.bf16 %v2082, %v2078
    %v2195 = vpack.c.bf16 %v2083, %v2079
    %v2196 = vpack.c.bf16 %v2084, %v2080
    %v2197 = vpack.c.bf16 %v2085, %v2081
    %v2198 = vpack.c.bf16 %v2090, %v2086
    %v2199 = vpack.c.bf16 %v2091, %v2087
    %v2200 = vpack.c.bf16 %v2092, %v2088
    %v2201 = vpack.c.bf16 %v2093, %v2089
    %v2202 = vpack.c.bf16 %v2098, %v2094
    %v2203 = vpack.c.bf16 %v2099, %v2095
    %v2204 = vpack.c.bf16 %v2100, %v2096
    %v2205 = vpack.c.bf16 %v2101, %v2097
    %v2206 = vpack.c.bf16 %v2106, %v2102
    %v2207 = vpack.c.bf16 %v2107, %v2103
    %v2208 = vpack.c.bf16 %v2108, %v2104
    %v2209 = vpack.c.bf16 %v2109, %v2105
    %v2210 = vpack.c.bf16 %v2114, %v2110
    %v2211 = vpack.c.bf16 %v2115, %v2111
    %v2212 = vpack.c.bf16 %v2116, %v2112
    %v2213 = vpack.c.bf16 %v2117, %v2113
    %v2214 = vpack.c.bf16 %v2122, %v2118
    %v2215 = vpack.c.bf16 %v2123, %v2119
    %v2216 = vpack.c.bf16 %v2124, %v2120
    %v2217 = vpack.c.bf16 %v2125, %v2121
    %v2218 = vpack.c.bf16 %v2130, %v2126
    %v2219 = vpack.c.bf16 %v2131, %v2127
    %v2220 = vpack.c.bf16 %v2132, %v2128
    %v2221 = vpack.c.bf16 %v2133, %v2129
    %v2222 = vpack.c.bf16 %v2138, %v2134
    %v2223 = vpack.c.bf16 %v2139, %v2135
    %v2224 = vpack.c.bf16 %v2140, %v2136
    %v2225 = vpack.c.bf16 %v2141, %v2137
    %v2226 = vpack.c.bf16 %v2146, %v2142
    %v2227 = vpack.c.bf16 %v2147, %v2143
    %v2228 = vpack.c.bf16 %v2148, %v2144
    %v2229 = vpack.c.bf16 %v2149, %v2145
    %v2230 = vpack.c.bf16 %v2154, %v2150
    %v2231 = vpack.c.bf16 %v2155, %v2151
    %v2232 = vpack.c.bf16 %v2156, %v2152
    %v2233 = vpack.c.bf16 %v2157, %v2153
    %v2234 = vpack.c.bf16 %v2162, %v2158
    %v2235 = vpack.c.bf16 %v2163, %v2159
    %v2236 = vpack.c.bf16 %v2164, %v2160
    %v2237 = vpack.c.bf16 %v2165, %v2161
    %v2238 = vpack.c.bf16 %v2170, %v2166
    %v2239 = vpack.c.bf16 %v2171, %v2167
    %v2240 = vpack.c.bf16 %v2172, %v2168
    %v2241 = vpack.c.bf16 %v2173, %v2169
    %v2242 = vpack.c.bf16 %v2178, %v2174
    %v2243 = vpack.c.bf16 %v2179, %v2175
    %v2244 = vpack.c.bf16 %v2180, %v2176
    %v2245 = vpack.c.bf16 %v2181, %v2177
    %v2246 = vld [vmem:[%s4] sm:$0xf]
    %v2247 = vld [vmem:[%s4 + $0x4] sm:$0xf]
    %v2248 = vld [vmem:[%s4 + $0x8] sm:$0xf]
    %v2249 = vld [vmem:[%s4 + $0xc] sm:$0xf]
    %v2250 = vld [vmem:[%s4 + $0x10] sm:$0xf]
    %v2251 = vld [vmem:[%s4 + $0x14] sm:$0xf]
    %v2252 = vld [vmem:[%s4 + $0x18] sm:$0xf]
    %v2253 = vld [vmem:[%s4 + $0x1c] sm:$0xf]
    %v2254 = vld [vmem:[%s4 + $0x20] sm:$0xf]
    %v2255 = vld [vmem:[%s4 + $0x24] sm:$0xf]
    %v2256 = vld [vmem:[%s4 + $0x28] sm:$0xf]
    %v2257 = vld [vmem:[%s4 + $0x2c] sm:$0xf]
    %v2258 = vld [vmem:[%s4 + $0x30] sm:$0xf]
    %v2259 = vld [vmem:[%s4 + $0x34] sm:$0xf]
    %v2260 = vld [vmem:[%s4 + $0x38] sm:$0xf]
    %v2261 = vld [vmem:[%s4 + $0x3c] sm:$0xf]
    %v2262 = vld [vmem:[%s4 + $0x40] sm:$0xf]
    %v2263 = vld [vmem:[%s4 + $0x44] sm:$0xf]
    %v2264 = vld [vmem:[%s4 + $0x48] sm:$0xf]
    %v2265 = vld [vmem:[%s4 + $0x4c] sm:$0xf]
    %v2266 = vld [vmem:[%s4 + $0x50] sm:$0xf]
    %v2267 = vld [vmem:[%s4 + $0x54] sm:$0xf]
    %v2268 = vld [vmem:[%s4 + $0x58] sm:$0xf]
    %v2269 = vld [vmem:[%s4 + $0x5c] sm:$0xf]
    %v2270 = vld [vmem:[%s4 + $0x60] sm:$0xf]
    %v2271 = vld [vmem:[%s4 + $0x64] sm:$0xf]
    %v2272 = vld [vmem:[%s4 + $0x68] sm:$0xf]
    %v2273 = vld [vmem:[%s4 + $0x6c] sm:$0xf]
    %v2274 = vld [vmem:[%s4 + $0x70] sm:$0xf]
    %v2275 = vld [vmem:[%s4 + $0x74] sm:$0xf]
    %v2276 = vld [vmem:[%s4 + $0x78] sm:$0xf]
    %v2277 = vld [vmem:[%s4 + $0x7c] sm:$0xf]
    %v2278 = vld [vmem:[%s4 + $0x80] sm:$0xf]
    %v2279 = vld [vmem:[%s4 + $0x84] sm:$0xf]
    %v2280 = vld [vmem:[%s4 + $0x88] sm:$0xf]
    %v2281 = vld [vmem:[%s4 + $0x8c] sm:$0xf]
    %v2282 = vld [vmem:[%s4 + $0x90] sm:$0xf]
    %v2283 = vld [vmem:[%s4 + $0x94] sm:$0xf]
    %v2284 = vld [vmem:[%s4 + $0x98] sm:$0xf]
    %v2285 = vld [vmem:[%s4 + $0x9c] sm:$0xf]
    %v2286 = vld [vmem:[%s4 + $0xa0] sm:$0xf]
    %v2287 = vld [vmem:[%s4 + $0xa4] sm:$0xf]
    %v2288 = vld [vmem:[%s4 + $0xa8] sm:$0xf]
    %v2289 = vld [vmem:[%s4 + $0xac] sm:$0xf]
    %v2290 = vld [vmem:[%s4 + $0xb0] sm:$0xf]
    %v2291 = vld [vmem:[%s4 + $0xb4] sm:$0xf]
    %v2292 = vld [vmem:[%s4 + $0xb8] sm:$0xf]
    %v2293 = vld [vmem:[%s4 + $0xbc] sm:$0xf]
    %v2294 = vld [vmem:[%s4 + $0xc0] sm:$0xf]
    %v2295 = vld [vmem:[%s4 + $0xc4] sm:$0xf]
    %v2296 = vld [vmem:[%s4 + $0xc8] sm:$0xf]
    %v2297 = vld [vmem:[%s4 + $0xcc] sm:$0xf]
    %v2298 = vld [vmem:[%s4 + $0xd0] sm:$0xf]
    %v2299 = vld [vmem:[%s4 + $0xd4] sm:$0xf]
    %v2300 = vld [vmem:[%s4 + $0xd8] sm:$0xf]
    %v2301 = vld [vmem:[%s4 + $0xdc] sm:$0xf]
    %v2302 = vld [vmem:[%s4 + $0xe0] sm:$0xf]
    %v2303 = vld [vmem:[%s4 + $0xe4] sm:$0xf]
    %v2304 = vld [vmem:[%s4 + $0xe8] sm:$0xf]
    %v2305 = vld [vmem:[%s4 + $0xec] sm:$0xf]
    %v2306 = vld [vmem:[%s4 + $0xf0] sm:$0xf]
    %v2307 = vld [vmem:[%s4 + $0xf4] sm:$0xf]
    %v2308 = vld [vmem:[%s4 + $0xf8] sm:$0xf]
    %v2309 = vld [vmem:[%s4 + $0xfc] sm:$0xf]
    %v2374 = vunpack.c.l.b16 %v2246
    %v2375 = vunpack.c.l.b16 %v2247
    %v2376 = vunpack.c.l.b16 %v2248
    %v2377 = vunpack.c.l.b16 %v2249
    %v2378 = vunpack.c.l.b16 %v2250
    %v2379 = vunpack.c.l.b16 %v2251
    %v2380 = vunpack.c.l.b16 %v2252
    %v2381 = vunpack.c.l.b16 %v2253
    %v2382 = vunpack.c.l.b16 %v2254
    %v2383 = vunpack.c.l.b16 %v2255
    %v2384 = vunpack.c.l.b16 %v2256
    %v2385 = vunpack.c.l.b16 %v2257
    %v2386 = vunpack.c.l.b16 %v2258
    %v2387 = vunpack.c.l.b16 %v2259
    %v2388 = vunpack.c.l.b16 %v2260
    %v2389 = vunpack.c.l.b16 %v2261
    %v2390 = vunpack.c.l.b16 %v2262
    %v2391 = vunpack.c.l.b16 %v2263
    %v2392 = vunpack.c.l.b16 %v2264
    %v2393 = vunpack.c.l.b16 %v2265
    %v2394 = vunpack.c.l.b16 %v2266
    %v2395 = vunpack.c.l.b16 %v2267
    %v2396 = vunpack.c.l.b16 %v2268
    %v2397 = vunpack.c.l.b16 %v2269
    %v2398 = vunpack.c.l.b16 %v2270
    %v2399 = vunpack.c.l.b16 %v2271
    %v2400 = vunpack.c.l.b16 %v2272
    %v2401 = vunpack.c.l.b16 %v2273
    %v2402 = vunpack.c.l.b16 %v2274
    %v2403 = vunpack.c.l.b16 %v2275
    %v2404 = vunpack.c.l.b16 %v2276
    %v2405 = vunpack.c.l.b16 %v2277
    %v2406 = vunpack.c.l.b16 %v2278
    %v2407 = vunpack.c.l.b16 %v2279
    %v2408 = vunpack.c.l.b16 %v2280
    %v2409 = vunpack.c.l.b16 %v2281
    %v2410 = vunpack.c.l.b16 %v2282
    %v2411 = vunpack.c.l.b16 %v2283
    %v2412 = vunpack.c.l.b16 %v2284
    %v2413 = vunpack.c.l.b16 %v2285
    %v2414 = vunpack.c.l.b16 %v2286
    %v2415 = vunpack.c.l.b16 %v2287
    %v2416 = vunpack.c.l.b16 %v2288
    %v2417 = vunpack.c.l.b16 %v2289
    %v2418 = vunpack.c.l.b16 %v2290
    %v2419 = vunpack.c.l.b16 %v2291
    %v2420 = vunpack.c.l.b16 %v2292
    %v2421 = vunpack.c.l.b16 %v2293
    %v2422 = vunpack.c.l.b16 %v2294
    %v2423 = vunpack.c.l.b16 %v2295
    %v2424 = vunpack.c.l.b16 %v2296
    %v2425 = vunpack.c.l.b16 %v2297
    %v2426 = vunpack.c.l.b16 %v2298
    %v2427 = vunpack.c.l.b16 %v2299
    %v2428 = vunpack.c.l.b16 %v2300
    %v2429 = vunpack.c.l.b16 %v2301
    %v2430 = vunpack.c.l.b16 %v2302
    %v2431 = vunpack.c.l.b16 %v2303
    %v2432 = vunpack.c.l.b16 %v2304
    %v2433 = vunpack.c.l.b16 %v2305
    %v2434 = vunpack.c.l.b16 %v2306
    %v2435 = vunpack.c.l.b16 %v2307
    %v2436 = vunpack.c.l.b16 %v2308
    %v2437 = vunpack.c.l.b16 %v2309
    %v2438 = vpack.c.b16 %v2375, %v2374
    %v2439 = vpack.c.b16 %v2377, %v2376
    %v2440 = vpack.c.b16 %v2379, %v2378
    %v2441 = vpack.c.b16 %v2381, %v2380
    %v2442 = vpack.c.b16 %v2383, %v2382
    %v2443 = vpack.c.b16 %v2385, %v2384
    %v2444 = vpack.c.b16 %v2387, %v2386
    %v2445 = vpack.c.b16 %v2389, %v2388
    %v2446 = vpack.c.b16 %v2391, %v2390
    %v2447 = vpack.c.b16 %v2393, %v2392
    %v2448 = vpack.c.b16 %v2395, %v2394
    %v2449 = vpack.c.b16 %v2397, %v2396
    %v2450 = vpack.c.b16 %v2399, %v2398
    %v2451 = vpack.c.b16 %v2401, %v2400
    %v2452 = vpack.c.b16 %v2403, %v2402
    %v2453 = vpack.c.b16 %v2405, %v2404
    %v2454 = vpack.c.b16 %v2407, %v2406
    %v2455 = vpack.c.b16 %v2409, %v2408
    %v2456 = vpack.c.b16 %v2411, %v2410
    %v2457 = vpack.c.b16 %v2413, %v2412
    %v2458 = vpack.c.b16 %v2415, %v2414
    %v2459 = vpack.c.b16 %v2417, %v2416
    %v2460 = vpack.c.b16 %v2419, %v2418
    %v2461 = vpack.c.b16 %v2421, %v2420
    %v2462 = vpack.c.b16 %v2423, %v2422
    %v2463 = vpack.c.b16 %v2425, %v2424
    %v2464 = vpack.c.b16 %v2427, %v2426
    %v2465 = vpack.c.b16 %v2429, %v2428
    %v2466 = vpack.c.b16 %v2431, %v2430
    %v2467 = vpack.c.b16 %v2433, %v2432
    %v2468 = vpack.c.b16 %v2435, %v2434
    %v2469 = vpack.c.b16 %v2437, %v2436
    %2502 = vmatprep.subr.bf16.mxu0 0
    %2503 = vmatpush1.bf16.msra.mxu0 %v2438
    %2504 = vmatprep.subr.bf16.mxu0 0
    %2505 = vmatpush1.bf16.msra.mxu0 %v2439
    %2506 = vmatprep.subr.bf16.mxu0 0
    %2507 = vmatpush1.bf16.msra.mxu0 %v2440
    %2508 = vmatprep.subr.bf16.mxu0 0
    %2509 = vmatpush1.bf16.msra.mxu0 %v2441
    %2510 = vmatprep.subr.bf16.mxu0 0
    %2511 = vmatpush1.bf16.msra.mxu0 %v2442
    %2512 = vmatprep.subr.bf16.mxu0 0
    %2513 = vmatpush1.bf16.msra.mxu0 %v2443
    %2514 = vmatprep.subr.bf16.mxu0 0
    %2515 = vmatpush1.bf16.msra.mxu0 %v2444
    %2516 = vmatprep.subr.bf16.mxu0 0
    %2517 = vmatpush1.bf16.msra.mxu0 %v2445
    %2518 = vmatprep.subr.bf16.mxu0 0
    %2519 = vmatpush1.bf16.msra.mxu0 %v2446
    %2520 = vmatprep.subr.bf16.mxu0 0
    %2521 = vmatpush1.bf16.msra.mxu0 %v2447
    %2522 = vmatprep.subr.bf16.mxu0 0
    %2523 = vmatpush1.bf16.msra.mxu0 %v2448
    %2524 = vmatprep.subr.bf16.mxu0 0
    %2525 = vmatpush1.bf16.msra.mxu0 %v2449
    %2526 = vmatprep.subr.bf16.mxu0 0
    %2527 = vmatpush1.bf16.msra.mxu0 %v2450
    %2528 = vmatprep.subr.bf16.mxu0 0
    %2529 = vmatpush1.bf16.msra.mxu0 %v2451
    %2530 = vmatprep.subr.bf16.mxu0 0
    %2531 = vmatpush1.bf16.msra.mxu0 %v2452
    %2532 = vmatprep.subr.bf16.mxu0 0
    %2533 = vmatpush1.bf16.msra.mxu0 %v2453
    %2534 = vmatprep.mubr.bf16.mxu0 %v2183
    %2535 = vmatmul.mubr.bf16.gmra.mrb[0].mxu0 %v2182
    %v2536 = vpop.f32.mrb[0].mxu0
    %v2537 = vadd.f32 0.0, %v2536
    %v2538 = vpop.f32.mrb[0].mxu0
    %v2539 = vpop.f32.mrb[0].mxu0
    %v2540 = vadd.f32 0.0, %v2539
    %v2541 = vpop.f32.mrb[0].mxu0
    %2542 = vmatprep.mubr.bf16.mxu0 %v2187
    %2543 = vmatmul.mubr.bf16.gmra.mrb[0].mxu0 %v2186
    %v2544 = vpop.f32.mrb[0].mxu0
    %v2545 = vadd.f32 0.0, %v2544
    %v2546 = vpop.f32.mrb[0].mxu0
    %v2547 = vpop.f32.mrb[0].mxu0
    %v2548 = vadd.f32 0.0, %v2547
    %v2549 = vpop.f32.mrb[0].mxu0
    %2550 = vmatprep.mubr.bf16.mxu0 %v2191
    %2551 = vmatmul.mubr.bf16.gmra.mrb[0].mxu0 %v2190
    %v2552 = vpop.f32.mrb[0].mxu0
    %v2553 = vadd.f32 0.0, %v2552
    %v2554 = vpop.f32.mrb[0].mxu0
    %v2555 = vpop.f32.mrb[0].mxu0
    %v2556 = vadd.f32 0.0, %v2555
    %v2557 = vpop.f32.mrb[0].mxu0
    %2558 = vmatprep.mubr.bf16.mxu0 %v2195
    %2559 = vmatmul.mubr.bf16.gmra.mrb[0].mxu0 %v2194
    %v2560 = vpop.f32.mrb[0].mxu0
    %v2561 = vadd.f32 0.0, %v2560
    %v2562 = vpop.f32.mrb[0].mxu0
    %v2563 = vpop.f32.mrb[0].mxu0
    %v2564 = vadd.f32 0.0, %v2563
    %v2565 = vpop.f32.mrb[0].mxu0
    %2566 = vmatprep.mubr.bf16.mxu0 %v2199
    %2567 = vmatmul.mubr.bf16.gmra.mrb[0].mxu0 %v2198
    %v2568 = vpop.f32.mrb[0].mxu0
    %v2569 = vadd.f32 0.0, %v2568
    %v2570 = vpop.f32.mrb[0].mxu0
    %v2571 = vpop.f32.mrb[0].mxu0
    %v2572 = vadd.f32 0.0, %v2571
    %v2573 = vpop.f32.mrb[0].mxu0
    %2574 = vmatprep.mubr.bf16.mxu0 %v2203
    %2575 = vmatmul.mubr.bf16.gmra.mrb[0].mxu0 %v2202
    %v2576 = vpop.f32.mrb[0].mxu0
    %v2577 = vadd.f32 0.0, %v2576
    %v2578 = vpop.f32.mrb[0].mxu0
    %v2579 = vpop.f32.mrb[0].mxu0
    %v2580 = vadd.f32 0.0, %v2579
    %v2581 = vpop.f32.mrb[0].mxu0
    %2582 = vmatprep.mubr.bf16.mxu0 %v2207
    %2583 = vmatmul.mubr.bf16.gmra.mrb[0].mxu0 %v2206
    %v2584 = vpop.f32.mrb[0].mxu0
    %v2585 = vadd.f32 0.0, %v2584
    %v2586 = vpop.f32.mrb[0].mxu0
    %v2587 = vpop.f32.mrb[0].mxu0
    %v2588 = vadd.f32 0.0, %v2587
    %v2589 = vpop.f32.mrb[0].mxu0
    %2590 = vmatprep.mubr.bf16.mxu0 %v2211
    %2591 = vmatmul.mubr.bf16.gmra.mrb[0].mxu0 %v2210
    %v2592 = vpop.f32.mrb[0].mxu0
    %v2593 = vadd.f32 0.0, %v2592
    %v2594 = vpop.f32.mrb[0].mxu0
    %v2595 = vpop.f32.mrb[0].mxu0
    %v2596 = vadd.f32 0.0, %v2595
    %v2597 = vpop.f32.mrb[0].mxu0
    %2598 = vmatprep.mubr.bf16.mxu0 %v2215
    %2599 = vmatmul.mubr.bf16.gmra.mrb[0].mxu0 %v2214
    %v2600 = vpop.f32.mrb[0].mxu0
    %v2601 = vadd.f32 0.0, %v2600
    %v2602 = vpop.f32.mrb[0].mxu0
    %v2603 = vpop.f32.mrb[0].mxu0
    %v2604 = vadd.f32 0.0, %v2603
    %v2605 = vpop.f32.mrb[0].mxu0
    %2606 = vmatprep.mubr.bf16.mxu0 %v2219
    %2607 = vmatmul.mubr.bf16.gmra.mrb[0].mxu0 %v2218
    %v2608 = vpop.f32.mrb[0].mxu0
    %v2609 = vadd.f32 0.0, %v2608
    %v2610 = vpop.f32.mrb[0].mxu0
    %v2611 = vpop.f32.mrb[0].mxu0
    %v2612 = vadd.f32 0.0, %v2611
    %v2613 = vpop.f32.mrb[0].mxu0
    %2614 = vmatprep.mubr.bf16.mxu0 %v2223
    %2615 = vmatmul.mubr.bf16.gmra.mrb[0].mxu0 %v2222
    %v2616 = vpop.f32.mrb[0].mxu0
    %v2617 = vadd.f32 0.0, %v2616
    %v2618 = vpop.f32.mrb[0].mxu0
    %v2619 = vpop.f32.mrb[0].mxu0
    %v2620 = vadd.f32 0.0, %v2619
    %v2621 = vpop.f32.mrb[0].mxu0
    %2622 = vmatprep.mubr.bf16.mxu0 %v2227
    %2623 = vmatmul.mubr.bf16.gmra.mrb[0].mxu0 %v2226
    %v2624 = vpop.f32.mrb[0].mxu0
    %v2625 = vadd.f32 0.0, %v2624
    %v2626 = vpop.f32.mrb[0].mxu0
    %v2627 = vpop.f32.mrb[0].mxu0
    %v2628 = vadd.f32 0.0, %v2627
    %v2629 = vpop.f32.mrb[0].mxu0
    %2630 = vmatprep.mubr.bf16.mxu0 %v2231
    %2631 = vmatmul.mubr.bf16.gmra.mrb[0].mxu0 %v2230
    %v2632 = vpop.f32.mrb[0].mxu0
    %v2633 = vadd.f32 0.0, %v2632
    %v2634 = vpop.f32.mrb[0].mxu0
    %v2635 = vpop.f32.mrb[0].mxu0
    %v2636 = vadd.f32 0.0, %v2635
    %v2637 = vpop.f32.mrb[0].mxu0
    %2638 = vmatprep.mubr.bf16.mxu0 %v2235
    %2639 = vmatmul.mubr.bf16.gmra.mrb[0].mxu0 %v2234
    %v2640 = vpop.f32.mrb[0].mxu0
    %v2641 = vadd.f32 0.0, %v2640
    %v2642 = vpop.f32.mrb[0].mxu0
    %v2643 = vpop.f32.mrb[0].mxu0
    %v2644 = vadd.f32 0.0, %v2643
    %v2645 = vpop.f32.mrb[0].mxu0
    %2646 = vmatprep.mubr.bf16.mxu0 %v2239
    %2647 = vmatmul.mubr.bf16.gmra.mrb[0].mxu0 %v2238
    %v2648 = vpop.f32.mrb[0].mxu0
    %v2649 = vadd.f32 0.0, %v2648
    %v2650 = vpop.f32.mrb[0].mxu0
    %v2651 = vpop.f32.mrb[0].mxu0
    %v2652 = vadd.f32 0.0, %v2651
    %v2653 = vpop.f32.mrb[0].mxu0
    %2654 = vmatprep.mubr.bf16.mxu0 %v2243
    %2655 = vmatmul.mubr.bf16.gmra.mrb[0].mxu0 %v2242
    %v2656 = vpop.f32.mrb[0].mxu0
    %v2657 = vadd.f32 0.0, %v2656
    %v2658 = vpop.f32.mrb[0].mxu0
    %v2659 = vpop.f32.mrb[0].mxu0
    %v2660 = vadd.f32 0.0, %v2659
    %v2661 = vpop.f32.mrb[0].mxu0
    %2662 = vdwg.mxu0
    %2663 = vmatprep.subr.bf16.mxu0 0
    %2664 = vmatpush1.bf16.msra.mxu0 %v2454
    %2665 = vmatprep.subr.bf16.mxu0 0
    %2666 = vmatpush1.bf16.msra.mxu0 %v2455
    %2667 = vmatprep.subr.bf16.mxu0 0
    %2668 = vmatpush1.bf16.msra.mxu0 %v2456
    %2669 = vmatprep.subr.bf16.mxu0 0
    %2670 = vmatpush1.bf16.msra.mxu0 %v2457
    %2671 = vmatprep.subr.bf16.mxu0 0
    %2672 = vmatpush1.bf16.msra.mxu0 %v2458
    %2673 = vmatprep.subr.bf16.mxu0 0
    %2674 = vmatpush1.bf16.msra.mxu0 %v2459
    %2675 = vmatprep.subr.bf16.mxu0 0
    %2676 = vmatpush1.bf16.msra.mxu0 %v2460
    %2677 = vmatprep.subr.bf16.mxu0 0
    %2678 = vmatpush1.bf16.msra.mxu0 %v2461
    %2679 = vmatprep.subr.bf16.mxu0 0
    %2680 = vmatpush1.bf16.msra.mxu0 %v2462
    %2681 = vmatprep.subr.bf16.mxu0 0
    %2682 = vmatpush1.bf16.msra.mxu0 %v2463
    %2683 = vmatprep.subr.bf16.mxu0 0
    %2684 = vmatpush1.bf16.msra.mxu0 %v2464
    %2685 = vmatprep.subr.bf16.mxu0 0
    %2686 = vmatpush1.bf16.msra.mxu0 %v2465
    %2687 = vmatprep.subr.bf16.mxu0 0
    %2688 = vmatpush1.bf16.msra.mxu0 %v2466
    %2689 = vmatprep.subr.bf16.mxu0 0
    %2690 = vmatpush1.bf16.msra.mxu0 %v2467
    %2691 = vmatprep.subr.bf16.mxu0 0
    %2692 = vmatpush1.bf16.msra.mxu0 %v2468
    %2693 = vmatprep.subr.bf16.mxu0 0
    %2694 = vmatpush1.bf16.msra.mxu0 %v2469
    %2695 = vmatprep.mubr.bf16.mxu0 %v2185
    %2696 = vmatmul.mubr.bf16.gmra.mrb[0].mxu0 %v2184
    %v2697 = vpop.f32.mrb[0].mxu0
    %v2698 = vadd.f32 %v2537, %v2697
    %v2699 = vpop.f32.mrb[0].mxu0
    %v2700 = vpop.f32.mrb[0].mxu0
    %v2701 = vadd.f32 %v2540, %v2700
    %v2702 = vpop.f32.mrb[0].mxu0
    %2703 = vmatprep.mubr.bf16.mxu0 %v2189
    %2704 = vmatmul.mubr.bf16.gmra.mrb[0].mxu0 %v2188
    %v2705 = vpop.f32.mrb[0].mxu0
    %v2706 = vadd.f32 %v2545, %v2705
    %v2707 = vpop.f32.mrb[0].mxu0
    %v2708 = vpop.f32.mrb[0].mxu0
    %v2709 = vadd.f32 %v2548, %v2708
    %v2710 = vpop.f32.mrb[0].mxu0
    %2711 = vmatprep.mubr.bf16.mxu0 %v2193
    %2712 = vmatmul.mubr.bf16.gmra.mrb[0].mxu0 %v2192
    %v2713 = vpop.f32.mrb[0].mxu0
    %v2714 = vadd.f32 %v2553, %v2713
    %v2715 = vpop.f32.mrb[0].mxu0
    %v2716 = vpop.f32.mrb[0].mxu0
    %v2717 = vadd.f32 %v2556, %v2716
    %v2718 = vpop.f32.mrb[0].mxu0
    %2719 = vmatprep.mubr.bf16.mxu0 %v2197
    %2720 = vmatmul.mubr.bf16.gmra.mrb[0].mxu0 %v2196
    %v2721 = vpop.f32.mrb[0].mxu0
    %v2722 = vadd.f32 %v2561, %v2721
    %v2723 = vpop.f32.mrb[0].mxu0
    %v2724 = vpop.f32.mrb[0].mxu0
    %v2725 = vadd.f32 %v2564, %v2724
    %v2726 = vpop.f32.mrb[0].mxu0
    %2727 = vmatprep.mubr.bf16.mxu0 %v2201
    %2728 = vmatmul.mubr.bf16.gmra.mrb[0].mxu0 %v2200
    %v2729 = vpop.f32.mrb[0].mxu0
    %v2730 = vadd.f32 %v2569, %v2729
    %v2731 = vpop.f32.mrb[0].mxu0
    %v2732 = vpop.f32.mrb[0].mxu0
    %v2733 = vadd.f32 %v2572, %v2732
    %v2734 = vpop.f32.mrb[0].mxu0
    %2735 = vmatprep.mubr.bf16.mxu0 %v2205
    %2736 = vmatmul.mubr.bf16.gmra.mrb[0].mxu0 %v2204
    %v2737 = vpop.f32.mrb[0].mxu0
    %v2738 = vadd.f32 %v2577, %v2737
    %v2739 = vpop.f32.mrb[0].mxu0
    %v2740 = vpop.f32.mrb[0].mxu0
    %v2741 = vadd.f32 %v2580, %v2740
    %v2742 = vpop.f32.mrb[0].mxu0
    %2743 = vmatprep.mubr.bf16.mxu0 %v2209
    %2744 = vmatmul.mubr.bf16.gmra.mrb[0].mxu0 %v2208
    %v2745 = vpop.f32.mrb[0].mxu0
    %v2746 = vadd.f32 %v2585, %v2745
    %v2747 = vpop.f32.mrb[0].mxu0
    %v2748 = vpop.f32.mrb[0].mxu0
    %v2749 = vadd.f32 %v2588, %v2748
    %v2750 = vpop.f32.mrb[0].mxu0
    %2751 = vmatprep.mubr.bf16.mxu0 %v2213
    %2752 = vmatmul.mubr.bf16.gmra.mrb[0].mxu0 %v2212
    %v2753 = vpop.f32.mrb[0].mxu0
    %v2754 = vadd.f32 %v2593, %v2753
    %v2755 = vpop.f32.mrb[0].mxu0
    %v2756 = vpop.f32.mrb[0].mxu0
    %v2757 = vadd.f32 %v2596, %v2756
    %v2758 = vpop.f32.mrb[0].mxu0
    %2759 = vmatprep.mubr.bf16.mxu0 %v2217
    %2760 = vmatmul.mubr.bf16.gmra.mrb[0].mxu0 %v2216
    %v2761 = vpop.f32.mrb[0].mxu0
    %v2762 = vadd.f32 %v2601, %v2761
    %v2763 = vpop.f32.mrb[0].mxu0
    %v2764 = vpop.f32.mrb[0].mxu0
    %v2765 = vadd.f32 %v2604, %v2764
    %v2766 = vpop.f32.mrb[0].mxu0
    %2767 = vmatprep.mubr.bf16.mxu0 %v2221
    %2768 = vmatmul.mubr.bf16.gmra.mrb[0].mxu0 %v2220
    %v2769 = vpop.f32.mrb[0].mxu0
    %v2770 = vadd.f32 %v2609, %v2769
    %v2771 = vpop.f32.mrb[0].mxu0
    %v2772 = vpop.f32.mrb[0].mxu0
    %v2773 = vadd.f32 %v2612, %v2772
    %v2774 = vpop.f32.mrb[0].mxu0
    %2775 = vmatprep.mubr.bf16.mxu0 %v2225
    %2776 = vmatmul.mubr.bf16.gmra.mrb[0].mxu0 %v2224
    %v2777 = vpop.f32.mrb[0].mxu0
    %v2778 = vadd.f32 %v2617, %v2777
    %v2779 = vpop.f32.mrb[0].mxu0
    %v2780 = vpop.f32.mrb[0].mxu0
    %v2781 = vadd.f32 %v2620, %v2780
    %v2782 = vpop.f32.mrb[0].mxu0
    %2783 = vmatprep.mubr.bf16.mxu0 %v2229
    %2784 = vmatmul.mubr.bf16.gmra.mrb[0].mxu0 %v2228
    %v2785 = vpop.f32.mrb[0].mxu0
    %v2786 = vadd.f32 %v2625, %v2785
    %v2787 = vpop.f32.mrb[0].mxu0
    %v2788 = vpop.f32.mrb[0].mxu0
    %v2789 = vadd.f32 %v2628, %v2788
    %v2790 = vpop.f32.mrb[0].mxu0
    %2791 = vmatprep.mubr.bf16.mxu0 %v2233
    %2792 = vmatmul.mubr.bf16.gmra.mrb[0].mxu0 %v2232
    %v2793 = vpop.f32.mrb[0].mxu0
    %v2794 = vadd.f32 %v2633, %v2793
    %v2795 = vpop.f32.mrb[0].mxu0
    %v2796 = vpop.f32.mrb[0].mxu0
    %v2797 = vadd.f32 %v2636, %v2796
    %v2798 = vpop.f32.mrb[0].mxu0
    %2799 = vmatprep.mubr.bf16.mxu0 %v2237
    %2800 = vmatmul.mubr.bf16.gmra.mrb[0].mxu0 %v2236
    %v2801 = vpop.f32.mrb[0].mxu0
    %v2802 = vadd.f32 %v2641, %v2801
    %v2803 = vpop.f32.mrb[0].mxu0
    %v2804 = vpop.f32.mrb[0].mxu0
    %v2805 = vadd.f32 %v2644, %v2804
    %v2806 = vpop.f32.mrb[0].mxu0
    %2807 = vmatprep.mubr.bf16.mxu0 %v2241
    %2808 = vmatmul.mubr.bf16.gmra.mrb[0].mxu0 %v2240
    %v2809 = vpop.f32.mrb[0].mxu0
    %v2810 = vadd.f32 %v2649, %v2809
    %v2811 = vpop.f32.mrb[0].mxu0
    %v2812 = vpop.f32.mrb[0].mxu0
    %v2813 = vadd.f32 %v2652, %v2812
    %v2814 = vpop.f32.mrb[0].mxu0
    %2815 = vmatprep.mubr.bf16.mxu0 %v2245
    %2816 = vmatmul.mubr.bf16.gmra.mrb[0].mxu0 %v2244
    %v2817 = vpop.f32.mrb[0].mxu0
    %v2818 = vadd.f32 %v2657, %v2817
    %v2819 = vpop.f32.mrb[0].mxu0
    %v2820 = vpop.f32.mrb[0].mxu0
    %v2821 = vadd.f32 %v2660, %v2820
    %v2822 = vpop.f32.mrb[0].mxu0
    %2823 = vdwg.mxu0
    %v2824 = vmul.f32 %v2698, %v2698
    %v2825 = vmul.f32 %v2701, %v2701
    %v2826 = vmul.f32 %v2706, %v2706
    %v2827 = vmul.f32 %v2709, %v2709
    %v2828 = vmul.f32 %v2714, %v2714
    %v2829 = vmul.f32 %v2717, %v2717
    %v2830 = vmul.f32 %v2722, %v2722
    %v2831 = vmul.f32 %v2725, %v2725
    %v2832 = vmul.f32 %v2730, %v2730
    %v2833 = vmul.f32 %v2733, %v2733
    %v2834 = vmul.f32 %v2738, %v2738
    %v2835 = vmul.f32 %v2741, %v2741
    %v2836 = vmul.f32 %v2746, %v2746
    %v2837 = vmul.f32 %v2749, %v2749
    %v2838 = vmul.f32 %v2754, %v2754
    %v2839 = vmul.f32 %v2757, %v2757
    %v2840 = vmul.f32 %v2762, %v2762
    %v2841 = vmul.f32 %v2765, %v2765
    %v2842 = vmul.f32 %v2770, %v2770
    %v2843 = vmul.f32 %v2773, %v2773
    %v2844 = vmul.f32 %v2778, %v2778
    %v2845 = vmul.f32 %v2781, %v2781
    %v2846 = vmul.f32 %v2786, %v2786
    %v2847 = vmul.f32 %v2789, %v2789
    %v2848 = vmul.f32 %v2794, %v2794
    %v2849 = vmul.f32 %v2797, %v2797
    %v2850 = vmul.f32 %v2802, %v2802
    %v2851 = vmul.f32 %v2805, %v2805
    %v2852 = vmul.f32 %v2810, %v2810
    %v2853 = vmul.f32 %v2813, %v2813
    %v2854 = vmul.f32 %v2818, %v2818
    %v2855 = vmul.f32 %v2821, %v2821
    %2856 = vadd.xlane.f32.xlu0 %v2824
    %v2857 = vpop.xlane.xlu0 %2856
    %2858 = vadd.xlane.f32.xlu0 %v2825
    %v2859 = vpop.xlane.xlu0 %2858
    %2860 = vadd.xlane.f32.xlu0 %v2826
    %v2861 = vpop.xlane.xlu0 %2860
    %2862 = vadd.xlane.f32.xlu0 %v2827
    %v2863 = vpop.xlane.xlu0 %2862
    %2864 = vadd.xlane.f32.xlu0 %v2828
    %v2865 = vpop.xlane.xlu0 %2864
    %2866 = vadd.xlane.f32.xlu0 %v2829
    %v2867 = vpop.xlane.xlu0 %2866
    %2868 = vadd.xlane.f32.xlu0 %v2830
    %v2869 = vpop.xlane.xlu0 %2868
    %2870 = vadd.xlane.f32.xlu0 %v2831
    %v2871 = vpop.xlane.xlu0 %2870
    %2872 = vadd.xlane.f32.xlu0 %v2832
    %v2873 = vpop.xlane.xlu0 %2872
    %2874 = vadd.xlane.f32.xlu0 %v2833
    %v2875 = vpop.xlane.xlu0 %2874
    %2876 = vadd.xlane.f32.xlu0 %v2834
    %v2877 = vpop.xlane.xlu0 %2876
    %2878 = vadd.xlane.f32.xlu0 %v2835
    %v2879 = vpop.xlane.xlu0 %2878
    %2880 = vadd.xlane.f32.xlu0 %v2836
    %v2881 = vpop.xlane.xlu0 %2880
    %2882 = vadd.xlane.f32.xlu0 %v2837
    %v2883 = vpop.xlane.xlu0 %2882
    %2884 = vadd.xlane.f32.xlu0 %v2838
    %v2885 = vpop.xlane.xlu0 %2884
    %2886 = vadd.xlane.f32.xlu0 %v2839
    %v2887 = vpop.xlane.xlu0 %2886
    %2888 = vadd.xlane.f32.xlu0 %v2840
    %v2889 = vpop.xlane.xlu0 %2888
    %2890 = vadd.xlane.f32.xlu0 %v2841
    %v2891 = vpop.xlane.xlu0 %2890
    %2892 = vadd.xlane.f32.xlu0 %v2842
    %v2893 = vpop.xlane.xlu0 %2892
    %2894 = vadd.xlane.f32.xlu0 %v2843
    %v2895 = vpop.xlane.xlu0 %2894
    %2896 = vadd.xlane.f32.xlu0 %v2844
    %v2897 = vpop.xlane.xlu0 %2896
    %2898 = vadd.xlane.f32.xlu0 %v2845
    %v2899 = vpop.xlane.xlu0 %2898
    %2900 = vadd.xlane.f32.xlu0 %v2846
    %v2901 = vpop.xlane.xlu0 %2900
    %2902 = vadd.xlane.f32.xlu0 %v2847
    %v2903 = vpop.xlane.xlu0 %2902
    %2904 = vadd.xlane.f32.xlu0 %v2848
    %v2905 = vpop.xlane.xlu0 %2904
    %2906 = vadd.xlane.f32.xlu0 %v2849
    %v2907 = vpop.xlane.xlu0 %2906
    %2908 = vadd.xlane.f32.xlu0 %v2850
    %v2909 = vpop.xlane.xlu0 %2908
    %2910 = vadd.xlane.f32.xlu0 %v2851
    %v2911 = vpop.xlane.xlu0 %2910
    %2912 = vadd.xlane.f32.xlu0 %v2852
    %v2913 = vpop.xlane.xlu0 %2912
    %2914 = vadd.xlane.f32.xlu0 %v2853
    %v2915 = vpop.xlane.xlu0 %2914
    %2916 = vadd.xlane.f32.xlu0 %v2854
    %v2917 = vpop.xlane.xlu0 %2916
    %2918 = vadd.xlane.f32.xlu0 %v2855
    %v2919 = vpop.xlane.xlu0 %2918
    %v2920 = vmax.f32 %v2857, 1e-24
    %v2921 = vmax.f32 %v2859, 1e-24
    %v2922 = vmax.f32 %v2861, 1e-24
    %v2923 = vmax.f32 %v2863, 1e-24
    %v2924 = vmax.f32 %v2865, 1e-24
    %v2925 = vmax.f32 %v2867, 1e-24
    %v2926 = vmax.f32 %v2869, 1e-24
    %v2927 = vmax.f32 %v2871, 1e-24
    %v2928 = vmax.f32 %v2873, 1e-24
    %v2929 = vmax.f32 %v2875, 1e-24
    %v2930 = vmax.f32 %v2877, 1e-24
    %v2931 = vmax.f32 %v2879, 1e-24
    %v2932 = vmax.f32 %v2881, 1e-24
    %v2933 = vmax.f32 %v2883, 1e-24
    %v2934 = vmax.f32 %v2885, 1e-24
    %v2935 = vmax.f32 %v2887, 1e-24
    %v2936 = vmax.f32 %v2889, 1e-24
    %v2937 = vmax.f32 %v2891, 1e-24
    %v2938 = vmax.f32 %v2893, 1e-24
    %v2939 = vmax.f32 %v2895, 1e-24
    %v2940 = vmax.f32 %v2897, 1e-24
    %v2941 = vmax.f32 %v2899, 1e-24
    %v2942 = vmax.f32 %v2901, 1e-24
    %v2943 = vmax.f32 %v2903, 1e-24
    %v2944 = vmax.f32 %v2905, 1e-24
    %v2945 = vmax.f32 %v2907, 1e-24
    %v2946 = vmax.f32 %v2909, 1e-24
    %v2947 = vmax.f32 %v2911, 1e-24
    %v2948 = vmax.f32 %v2913, 1e-24
    %v2949 = vmax.f32 %v2915, 1e-24
    %v2950 = vmax.f32 %v2917, 1e-24
    %v2951 = vmax.f32 %v2919, 1e-24
    %v2952 = vrsqrt.pop %v2920
    %v2953 = vrsqrt.pop %v2921
    %v2954 = vrsqrt.pop %v2922
    %v2955 = vrsqrt.pop %v2923
    %v2956 = vrsqrt.pop %v2924
    %v2957 = vrsqrt.pop %v2925
    %v2958 = vrsqrt.pop %v2926
    %v2959 = vrsqrt.pop %v2927
    %v2960 = vrsqrt.pop %v2928
    %v2961 = vrsqrt.pop %v2929
    %v2962 = vrsqrt.pop %v2930
    %v2963 = vrsqrt.pop %v2931
    %v2964 = vrsqrt.pop %v2932
    %v2965 = vrsqrt.pop %v2933
    %v2966 = vrsqrt.pop %v2934
    %v2967 = vrsqrt.pop %v2935
    %v2968 = vrsqrt.pop %v2936
    %v2969 = vrsqrt.pop %v2937
    %v2970 = vrsqrt.pop %v2938
    %v2971 = vrsqrt.pop %v2939
    %v2972 = vrsqrt.pop %v2940
    %v2973 = vrsqrt.pop %v2941
    %v2974 = vrsqrt.pop %v2942
    %v2975 = vrsqrt.pop %v2943
    %v2976 = vrsqrt.pop %v2944
    %v2977 = vrsqrt.pop %v2945
    %v2978 = vrsqrt.pop %v2946
    %v2979 = vrsqrt.pop %v2947
    %v2980 = vrsqrt.pop %v2948
    %v2981 = vrsqrt.pop %v2949
    %v2982 = vrsqrt.pop %v2950
    %v2983 = vrsqrt.pop %v2951
    %v2984 = vmul.f32 %v2698, %v2952
    %v2985 = vmul.f32 %v2701, %v2953
    %v2986 = vmul.f32 %v2706, %v2954
    %v2987 = vmul.f32 %v2709, %v2955
    %v2988 = vmul.f32 %v2714, %v2956
    %v2989 = vmul.f32 %v2717, %v2957
    %v2990 = vmul.f32 %v2722, %v2958
    %v2991 = vmul.f32 %v2725, %v2959
    %v2992 = vmul.f32 %v2730, %v2960
    %v2993 = vmul.f32 %v2733, %v2961
    %v2994 = vmul.f32 %v2738, %v2962
    %v2995 = vmul.f32 %v2741, %v2963
    %v2996 = vmul.f32 %v2746, %v2964
    %v2997 = vmul.f32 %v2749, %v2965
    %v2998 = vmul.f32 %v2754, %v2966
    %v2999 = vmul.f32 %v2757, %v2967
    %v3000 = vmul.f32 %v2762, %v2968
    %v3001 = vmul.f32 %v2765, %v2969
    %v3002 = vmul.f32 %v2770, %v2970
    %v3003 = vmul.f32 %v2773, %v2971
    %v3004 = vmul.f32 %v2778, %v2972
    %v3005 = vmul.f32 %v2781, %v2973
    %v3006 = vmul.f32 %v2786, %v2974
    %v3007 = vmul.f32 %v2789, %v2975
    %v3008 = vmul.f32 %v2794, %v2976
    %v3009 = vmul.f32 %v2797, %v2977
    %v3010 = vmul.f32 %v2802, %v2978
    %v3011 = vmul.f32 %v2805, %v2979
    %v3012 = vmul.f32 %v2810, %v2980
    %v3013 = vmul.f32 %v2813, %v2981
    %v3014 = vmul.f32 %v2818, %v2982
    %v3015 = vmul.f32 %v2821, %v2983
    %3016 = vst [vmem:[#allocation2] sm:$0xff] %v2984
    %3017 = vst [vmem:[#allocation2 + $0x8] sm:$0xff] %v2985
    %3018 = vst [vmem:[#allocation2 + $0x10] sm:$0xff] %v2986
    %3019 = vst [vmem:[#allocation2 + $0x18] sm:$0xff] %v2987
    %3020 = vst [vmem:[#allocation2 + $0x20] sm:$0xff] %v2988
    %3021 = vst [vmem:[#allocation2 + $0x28] sm:$0xff] %v2989
    %3022 = vst [vmem:[#allocation2 + $0x30] sm:$0xff] %v2990
    %3023 = vst [vmem:[#allocation2 + $0x38] sm:$0xff] %v2991
    %3024 = vst [vmem:[#allocation2 + $0x40] sm:$0xff] %v2992
    %3025 = vst [vmem:[#allocation2 + $0x48] sm:$0xff] %v2993
    %3026 = vst [vmem:[#allocation2 + $0x50] sm:$0xff] %v2994
    %3027 = vst [vmem:[#allocation2 + $0x58] sm:$0xff] %v2995
    %3028 = vst [vmem:[#allocation2 + $0x60] sm:$0xff] %v2996
    %3029 = vst [vmem:[#allocation2 + $0x68] sm:$0xff] %v2997
    %3030 = vst [vmem:[#allocation2 + $0x70] sm:$0xff] %v2998
    %3031 = vst [vmem:[#allocation2 + $0x78] sm:$0xff] %v2999
    %3032 = vst [vmem:[#allocation2 + $0x80] sm:$0xff] %v3000
    %3033 = vst [vmem:[#allocation2 + $0x88] sm:$0xff] %v3001
    %3034 = vst [vmem:[#allocation2 + $0x90] sm:$0xff] %v3002
    %3035 = vst [vmem:[#allocation2 + $0x98] sm:$0xff] %v3003
    %3036 = vst [vmem:[#allocation2 + $0xa0] sm:$0xff] %v3004
    %3037 = vst [vmem:[#allocation2 + $0xa8] sm:$0xff] %v3005
    %3038 = vst [vmem:[#allocation2 + $0xb0] sm:$0xff] %v3006
    %3039 = vst [vmem:[#allocation2 + $0xb8] sm:$0xff] %v3007
    %3040 = vst [vmem:[#allocation2 + $0xc0] sm:$0xff] %v3008
    %3041 = vst [vmem:[#allocation2 + $0xc8] sm:$0xff] %v3009
    %3042 = vst [vmem:[#allocation2 + $0xd0] sm:$0xff] %v3010
    %3043 = vst [vmem:[#allocation2 + $0xd8] sm:$0xff] %v3011
    %3044 = vst [vmem:[#allocation2 + $0xe0] sm:$0xff] %v3012
    %3045 = vst [vmem:[#allocation2 + $0xe8] sm:$0xff] %v3013
    %3046 = vst [vmem:[#allocation2 + $0xf0] sm:$0xff] %v3014
    %3047 = vst [vmem:[#allocation2 + $0xf8] sm:$0xff] %v3015
    // Predicated region
    $region22: #{projection_forward.3} parent=1 // pred_check
      _
    $region23: #{projection_forward.3} parent=1 // pred_check_branch
      %3049 = sbr.rel (0) target = $region25
    $region24: #{projection_forward.3} parent=1 // pred_region
      %s3051 = ssub.s32 4096, 4096
      %3052 = vsyncadd [#allocation3], %s3051
      %s3053 = sshll.u32 [#allocation2], 4
      %s3054 = int_to_ptr.vmem [resolvable:$true] %s3053
      %3059 = dma.vmem_to_hbm [thread:$0]  %s3054, 4096, %s5, [#allocation3], 128, 128, 8
    $region25: #{projection_forward.3} parent=1 // pred_fallthru
      _
    // Predicated region
    $region26: #{projection_forward.3} parent=1 // pred_check
      _
    $region27: #{projection_forward.3} parent=1 // pred_check_branch
      %3061 = sbr.rel (0) target = $region29
    $region28: #{projection_forward.3} parent=1 // pred_region
      %3062 = dma.done [#allocation3], 4096
    $region29: #{projection_forward.3} parent=1 // pred_fallthru
      _
    %3063 = vsyncpa [#allocation3], 1

</llo_original>
